<compile_context>
chip_gen: v7x
topology: tpu7x:2x2x1
jax: 0.10.0
libtpu: 0.0.40
codegen_flags: <defaults>
</compile_context>

<pallas_src>
import functools

import jax
import jax.numpy as jnp
from jax import lax
from jax.experimental import pallas as pl
from jax.experimental.pallas import tpu as pltpu


# ----------------------------------------------------------------------------
# Per-generation tuning helpers (v7x: 64 MiB VMEM/TC; v5e/v6e: 128 MiB).
# ----------------------------------------------------------------------------
def _device_kind():
    try:
        return jax.devices()[0].device_kind.lower()
    except Exception:
        return ""


def _vmem_limit_bytes():
    # Leave ~20% headroom for the compiler's internal scratch.
    try:
        return int(pltpu.get_tpu_info().vmem_capacity_bytes * 0.8)
    except Exception:
        pass
    return (48 if "7" in _device_kind() else 100) * 1024 * 1024


def _default_t_block():
    # Smaller time blocks on v7x (64 MiB VMEM/TC); larger on v5e/v6e (128 MiB)
    # to amortize the ~0.35us per-grid-step overhead with bf16 gx/out blocks.
    return 8 if "7" in _device_kind() else 32


# ----------------------------------------------------------------------------
# LSTM recurrence kernel.
# ----------------------------------------------------------------------------
def _make_lstm_kernel(D, NB, with_mask, with_residual):
    """Grid = (T // Tt,): the time axis is the sequential recurrence.

    D directions x NB batch chunks = D*NB independent recurrence chains are
    stepped inside the same (partially unrolled) loop body, so the scheduler
    can overlap one chain's MXU matmul with another chain's gate math.
    h/c live in persistent VMEM scratch, reset at tb == 0.  W_hh is DMA'd once
    into persistent VMEM scratch (single-buffered).
    """

    def kernel(*refs):
        idx = 0
        gx_ref = refs[idx]; idx += 1           # (D, Tt, B, 4H) bf16
        whh_hbm = refs[idx]; idx += 1          # (D, H, 4H) bf16, in HBM (ANY)
        lens_ref = None
        res_ref = None
        if with_mask:
            lens_ref = refs[idx]; idx += 1     # (B, 1) int32
        if with_residual:
            res_ref = refs[idx]; idx += 1      # (D, Tt, B, H) bf16
        y_ref = refs[idx]; idx += 1            # (D, Tt, B, H) bf16
        whh_vmem = refs[idx]; idx += 1         # (D, H, 4H) bf16 scratch
        whh_sem = refs[idx]; idx += 1          # DMA semaphore
        h_sc = refs[idx]; idx += 1             # (D*NB, Bc, H) f32
        c_sc = refs[idx]; idx += 1             # (D*NB, Bc, H) f32

        tb = pl.program_id(0)

        @pl.when(tb == 0)
        def _init():
            # One-shot DMA: W_hh stays resident in VMEM for the whole call
            # (single-buffered), instead of being double-buffered by the
            # block pipeline (saves D*H*4H bf16 bytes at production size).
            cp = pltpu.make_async_copy(whh_hbm, whh_vmem, whh_sem)
            cp.start()
            cp.wait()
            h_sc[...] = jnp.zeros_like(h_sc)
            c_sc[...] = jnp.zeros_like(c_sc)

        n_chains, Bc, H = h_sc.shape
        Tt = gx_ref.shape[1]
        t0 = tb * Tt

        # W_hh per direction, VMEM-resident across the whole time loop.
        whh = [whh_vmem[d] for d in range(D)]

        if with_mask:
            lens_all = lens_ref[...]                              # (B, 1) i32
            lens_c = [lens_all[b * Bc:(b + 1) * Bc] for b in range(NB)]

        chains = [(d, b) for d in range(D) for b in range(NB)]

        def step(i, carry):
            new_carry = []
            # All chains live in the same basic block so the LLO scheduler can
            # interleave chain A's gate math (VPU/EUP) with chain B's matmul
            # (MXU) -- the per-chain chain matmul -> sigmoid/tanh is serial.
            for ci, (d, b) in enumerate(chains):
                h, c = carry[ci]
                lo = b * Bc
                # Recurrent matmul (bf16 in, f32 accumulate) + hoisted,
                # bf16-stored input-projection gates (accumulated in f32).
                gates = (gx_ref[d, i, pl.ds(lo, Bc)].astype(jnp.float32)
                         + jnp.dot(h.astype(jnp.bfloat16), whh[d],
                                   preferred_element_type=jnp.float32))
                # NOTE: at production H (multiple of 128) these slices are
                # lane-aligned; at the toy H=32 they cross lanes (acceptable).
                i_g = jax.nn.sigmoid(gates[:, 0 * H:1 * H])
                f_g = jax.nn.sigmoid(gates[:, 1 * H:2 * H])
                g_g = jnp.tanh(gates[:, 2 * H:3 * H])
                o_g = jax.nn.sigmoid(gates[:, 3 * H:4 * H])
                c_new = f_g * c + i_g * g_g
                h_new = o_g * jnp.tanh(c_new)

                y = h_new                      # f32
                if with_mask:
                    # pad_packed_sequence semantics: zero outputs past length.
                    y = y * ((t0 + i) < lens_c[b]).astype(y.dtype)
                if with_residual:
                    # Residual add in f32, cast on store.
                    y = y + res_ref[d, i, pl.ds(lo, Bc)].astype(jnp.float32)
                y_ref[d, i, pl.ds(lo, Bc)] = y.astype(y_ref.dtype)
                new_carry.append((h_new, c_new))
            return tuple(new_carry)

        init = tuple((h_sc[ci], c_sc[ci]) for ci in range(n_chains))
        # Partial unroll: the chain is serial, so full unroll adds no ILP but
        # bloats code / live temporaries; unroll=4 keeps LLO visibility.
        fin = lax.fori_loop(0, Tt, step, init, unroll=min(4, Tt))
        for ci in range(n_chains):
            h_sc[ci] = fin[ci][0]
            c_sc[ci] = fin[ci][1]

    return kernel


def lstm_recurrence(gx, whh, *, lens=None, residual=None, t_block,
                    n_batch_chunks=1):
    """Runs D independent LSTM recurrences (D directions, NB batch chunks).

    gx:       (D, T, B, 4H) bf16 precomputed input gates (x@Wih^T + b_ih+b_hh)
    whh:      (D, H, 4H) bf16 recurrent weights (pre-transposed), kept in HBM
              and DMA'd once into persistent VMEM scratch.
    lens:     optional (B, 1) int32 -> zero outputs at t >= lens (packed seq)
    residual: optional (D, T, B, H) bf16, added (in f32) in the output store
    Returns (D, T, B, H) bf16.
    """
    D, T, B, H4 = gx.shape
    H = H4 // 4
    Tt = t_block
    NB = n_batch_chunks
    assert T % Tt == 0
    assert B % NB == 0 and (B // NB) % 8 == 0, (B, NB)

    with_mask = lens is not None
    with_residual = residual is not None

    in_specs = [
        pl.BlockSpec((D, Tt, B, H4), lambda tb: (0, tb, 0, 0)),   # gates_x
        pl.BlockSpec(memory_space=pl.ANY),                        # W_hh in HBM
    ]
    inputs = [gx, whh]
    if with_mask:
        in_specs.append(pl.BlockSpec((B, 1), lambda tb: (0, 0)))  # lengths
        inputs.append(lens)
    if with_residual:
        in_specs.append(pl.BlockSpec((D, Tt, B, H), lambda tb: (0, tb, 0, 0)))
        inputs.append(residual)

    # TODO(synk): on v7x with large B (>=256), add a 'parallel' batch-block
    # grid axis so the two TensorCores split the batch on layers >= 1.
    return pl.pallas_call(
        _make_lstm_kernel(D, NB, with_mask, with_residual),
        out_shape=jax.ShapeDtypeStruct((D, T, B, H), jnp.bfloat16),
        grid_spec=pltpu.PrefetchScalarGridSpec(
            num_scalar_prefetch=0,
            grid=(T // Tt,),
            in_specs=in_specs,
            out_specs=pl.BlockSpec((D, Tt, B, H), lambda tb: (0, tb, 0, 0)),
            scratch_shapes=[
                pltpu.VMEM((D, H, H4), jnp.bfloat16),        # resident W_hh
                pltpu.SemaphoreType.DMA,                     # its one-shot DMA
                pltpu.VMEM((D * NB, B // NB, H), jnp.float32),  # h carry
                pltpu.VMEM((D * NB, B // NB, H), jnp.float32),  # c carry
            ]),
        compiler_params=pltpu.CompilerParams(
            dimension_semantics=("arbitrary",),   # time is a true recurrence
            vmem_limit_bytes=_vmem_limit_bytes()),
    )(*inputs)


# ----------------------------------------------------------------------------
# XLA glue around the kernel.
# ----------------------------------------------------------------------------
def input_gates(x, wih_t, b):
    """Hoisted input projection: x (D,T,B,I) @ Wih^T (D,I,4H) + b (D,4H).

    bf16 matmul, f32 accumulate + bias, stored as bf16 (halves HBM traffic /
    VMEM block size feeding the recurrence kernel).
    """
    gx = jnp.einsum('dtbi,dij->dtbj',
                    x.astype(jnp.bfloat16), wih_t.astype(jnp.bfloat16),
                    preferred_element_type=jnp.float32) + b[:, None, None, :]
    return gx.astype(jnp.bfloat16)


def reverse_padded(x, lengths):
    """Reverse each sequence within its valid length; zero positions >= length.

    x: (T, B, D) time-major.  (XLA glue: gather + where.)
    """
    T = x.shape[0]
    t_idx = jnp.arange(T)[:, None]                                # (T, 1)
    src = jnp.clip(lengths[None, :] - 1 - t_idx, 0, T - 1)        # (T, B)
    valid = (t_idx < lengths[None, :])[:, :, None]                # (T, B, 1)
    gathered = jnp.take_along_axis(
        x, jnp.broadcast_to(src[:, :, None], x.shape), axis=0)
    return jnp.where(valid, gathered, jnp.zeros_like(x))


def init_params(key, vocab_size, padding_idx, hidden_size, num_layers):
    H = hidden_size
    n_lstm = num_layers + 1  # bidirectional layer counts as 2 directions
    keys = list(jax.random.split(key, 1 + 4 * n_lstm))
    kit = iter(keys)
    scale = 1.0 / float(H) ** 0.5

    emb = jax.random.uniform(next(kit), (vocab_size, H), jnp.float32,
                             -scale, scale)
    emb = emb.at[padding_idx].set(0.0)  # padding_idx row is zero

    def lstm_params(input_size):
        w_ih = jax.random.uniform(next(kit), (4 * H, input_size), jnp.float32,
                                  -scale, scale)
        w_hh = jax.random.uniform(next(kit), (4 * H, H), jnp.float32,
                                  -scale, scale)
        b_ih = jax.random.uniform(next(kit), (4 * H,), jnp.float32, -scale, scale)
        b_hh = jax.random.uniform(next(kit), (4 * H,), jnp.float32, -scale, scale)
        return dict(w_ih_t=w_ih.T, w_hh_t=w_hh.T, b=b_ih + b_hh)

    params = {"embedding": emb,
              "l0_fwd": lstm_params(H),
              "l0_bwd": lstm_params(H),
              "l1": lstm_params(2 * H)}
    for i in range(2, num_layers):
        params[f"l{i}"] = lstm_params(H)
    return params


def encoder_forward(params, inputs, lengths, num_layers, t_block=None):
    """inputs: (B, T) int32 token ids, lengths: (B,) int32. Returns (B, T, H)."""
    B, T = inputs.shape
    H = params["embedding"].shape[1]

    if t_block is None:
        t_block = _default_t_block()

    # Pad batch to a multiple of 16 (two 8-row sublane chunks -> enables the
    # two-chain batch interleave in unidirectional layers) and time to a
    # multiple of the time block.  Padding is sliced off at the end.
    B_pad = -(-B // 16) * 16
    Tt = max(1, min(t_block, T))
    T_pad = -(-T // Tt) * Tt

    x = params["embedding"][inputs]                 # (B, T, H) gather (glue)
    x = jnp.transpose(x, (1, 0, 2))                 # time-major (T, B, H)
    x = jnp.pad(x, ((0, T_pad - T), (0, B_pad - B), (0, 0)))
    lengths_p = jnp.pad(lengths.astype(jnp.int32), (0, B_pad - B))
    lens_col = lengths_p[:, None]                   # (B_pad, 1)

    # --- layer 0: bidirectional LSTM over packed (length-masked) sequences.
    #     The fwd/bwd directions are two chains interleaved in one kernel. ---
    pf, pb = params["l0_fwd"], params["l0_bwd"]
    x_rev = reverse_padded(x, lengths_p)
    x2 = jnp.stack([x, x_rev], axis=0)                               # (2,T,B,H)
    wih2 = jnp.stack([pf["w_ih_t"], pb["w_ih_t"]], axis=0)
    whh2 = jnp.stack([pf["w_hh_t"], pb["w_hh_t"]], axis=0).astype(jnp.bfloat16)
    b2 = jnp.stack([pf["b"], pb["b"]], axis=0)
    gx2 = input_gates(x2, wih2, b2)                                  # bf16
    y2 = lstm_recurrence(gx2, whh2, lens=lens_col, t_block=Tt,
                         n_batch_chunks=1)                           # (2,T,B,H)
    # un-reverse the backward direction and concat
    x = jnp.concatenate([y2[0], reverse_padded(y2[1], lengths_p)], axis=-1)

    # dropout(p=0) == identity

    # --- layer 1: 2H -> H (two batch-half chains interleaved in-kernel) ---
    p = params["l1"]
    gx = input_gates(x[None], p["w_ih_t"][None], p["b"][None])
    x = lstm_recurrence(gx, p["w_hh_t"].astype(jnp.bfloat16)[None],
                        t_block=Tt, n_batch_chunks=2)[0]

    # --- layers 2..num_layers-1: H -> H, residual add fused into the store ---
    for i in range(2, num_layers):
        p = params[f"l{i}"]
        gx = input_gates(x[None], p["w_ih_t"][None], p["b"][None])
        x = lstm_recurrence(gx, p["w_hh_t"].astype(jnp.bfloat16)[None],
                            residual=x[None], t_block=Tt,
                            n_batch_chunks=2)[0]

    # batch-first (B, T, H), back to f32 to match the PyTorch interface
    return jnp.transpose(x[:T, :B], (1, 0, 2)).astype(jnp.float32)


if __name__ == "__main__":
    vocab_size, padding_idx = 16, 0
    hidden_size, num_layers = 32, 4
    B, T = 2, 8

    key = jax.random.PRNGKey(0)
    kp, ki = jax.random.split(key)
    params = init_params(kp, vocab_size, padding_idx, hidden_size, num_layers)

    lengths = jnp.array([8, 5], dtype=jnp.int32)
    tok = jax.random.randint(ki, (B, T), 1, vocab_size, dtype=jnp.int32)
    pos = jnp.arange(T)[None, :]
    tok = jnp.where(pos < lengths[:, None], tok, padding_idx)  # pad tail

    # t_block=4 -> 2 time blocks, exercising the h/c carry across grid steps.
    fwd = jax.jit(functools.partial(encoder_forward, num_layers=num_layers,
                                    t_block=4))
    out = fwd(params, tok, lengths)
    out = jax.block_until_ready(out)

    assert out.shape == (B, T, hidden_size), out.shape
    assert bool(jnp.all(jnp.isfinite(out)))
    print("KERNEL_OK")
</pallas_src>

<mosaic_0001>
module attributes {stable_mosaic.version = 11 : i64} {
  func.func private @main(%arg0: i32) attributes {dimension_semantics = [#tpu.dimension_semantics<core_parallel>], iteration_bounds = array<i64: 2>, tpu.core_type = #tpu.core_type<sc_scalar_subcore>, window_params = []} {
    return
  }
}

module attributes {stable_mosaic.version = 11 : i64} {
  func.func private @main(%arg0: i32) attributes {dimension_semantics = [#tpu.dimension_semantics<core_parallel>], iteration_bounds = array<i64: 2>, tpu.core_type = #tpu.core_type<sc_scalar_subcore>, window_params = []} {
    return
  }
}

module attributes {stable_mosaic.version = 11 : i64} {
  func.func @kernel(%arg0: i32, %arg1: memref<2x4x16x128xbf16, #tpu.memory_space<vmem>>, %arg2: memref<2x32x128xbf16, #tpu.memory_space<any>>, %arg3: memref<16x1xi32, #tpu.memory_space<vmem>>, %arg4: memref<2x4x16x32xbf16, #tpu.memory_space<vmem>>, %arg5: memref<2x32x128xbf16, #tpu.memory_space<vmem>>, %arg6: memref<!tpu.dma_semaphore, #tpu.memory_space<semaphore_mem>>, %arg7: memref<2x16x32xf32, #tpu.memory_space<vmem>>, %arg8: memref<2x16x32xf32, #tpu.memory_space<vmem>>) attributes {dimension_semantics = [#tpu.dimension_semantics<arbitrary>], iteration_bounds = array<i64: 2>, scalar_prefetch = 0 : i64, scratch_operands = 4 : i64, tpu.core_type = #tpu.core_type<tc>, window_params = [{transform_indices = @transform_0, window_bounds = array<i64: 2, 4, 16, 128>}, {}, {pipeline_mode = #tpu.pipeline_mode<synchronous>, transform_indices = @transform_2, window_bounds = array<i64: 16, 1>}, {transform_indices = @transform_3, window_bounds = array<i64: 2, 4, 16, 32>}]} {
    %c0_i32 = arith.constant 0 : i32
    %0 = arith.cmpi eq, %arg0, %c0_i32 : i32
    %1 = arith.extui %0 : i1 to i32
    %c0_i32_0 = arith.constant 0 : i32
    %2 = arith.cmpi ne, %1, %c0_i32_0 : i32
    scf.if %2 {
      tpu.enqueue_dma source(%arg2 : memref<2x32x128xbf16, #tpu.memory_space<any>>) target(%arg5 : memref<2x32x128xbf16, #tpu.memory_space<vmem>>) target_semaphore(%arg6 : memref<!tpu.dma_semaphore, #tpu.memory_space<semaphore_mem>>)
      tpu.wait_dma2 semaphore(%arg6 : memref<!tpu.dma_semaphore, #tpu.memory_space<semaphore_mem>>) src(%arg2 : memref<2x32x128xbf16, #tpu.memory_space<any>>) dst(%arg5 : memref<2x32x128xbf16, #tpu.memory_space<vmem>>)
      %cst_112 = arith.constant 0.000000e+00 : f32
      %381 = vector.broadcast %cst_112 : f32 to vector<2x16x32xf32>
      %c0_113 = arith.constant 0 : index
      %c0_114 = arith.constant 0 : index
      %c0_115 = arith.constant 0 : index
      %382 = vector.load %arg7[%c0_113, %c0_114, %c0_115] : memref<2x16x32xf32, #tpu.memory_space<vmem>>, vector<2x16x32xf32>
      tpu.vector_store %arg7[%c0_113, %c0_114, %c0_115], %381 {strides = array<i32>} : memref<2x16x32xf32, #tpu.memory_space<vmem>>, vector<2x16x32xf32>,
      %cst_116 = arith.constant 0.000000e+00 : f32
      %383 = vector.broadcast %cst_116 : f32 to vector<2x16x32xf32>
      %c0_117 = arith.constant 0 : index
      %c0_118 = arith.constant 0 : index
      %c0_119 = arith.constant 0 : index
      %384 = vector.load %arg8[%c0_117, %c0_118, %c0_119] : memref<2x16x32xf32, #tpu.memory_space<vmem>>, vector<2x16x32xf32>
      tpu.vector_store %arg8[%c0_117, %c0_118, %c0_119], %383 {strides = array<i32>} : memref<2x16x32xf32, #tpu.memory_space<vmem>>, vector<2x16x32xf32>,
    } else {
    }
    %c4_i32 = arith.constant 4 : i32
    %3 = arith.muli %arg0, %c4_i32 : i32
    %c0 = arith.constant 0 : index
    %c0_1 = arith.constant 0 : index
    %c0_2 = arith.constant 0 : index
    %4 = vector.load %arg5[%c0, %c0_1, %c0_2] : memref<2x32x128xbf16, #tpu.memory_space<vmem>>, vector<1x32x128xbf16>
    %5 = vector.shape_cast %4 : vector<1x32x128xbf16> to vector<32x128xbf16>
    %c1 = arith.constant 1 : index
    %c0_3 = arith.constant 0 : index
    %c0_4 = arith.constant 0 : index
    %6 = vector.load %arg5[%c1, %c0_3, %c0_4] : memref<2x32x128xbf16, #tpu.memory_space<vmem>>, vector<1x32x128xbf16>
    %7 = vector.shape_cast %6 : vector<1x32x128xbf16> to vector<32x128xbf16>
    %c0_5 = arith.constant 0 : index
    %c0_6 = arith.constant 0 : index
    %8 = vector.load %arg3[%c0_5, %c0_6] : memref<16x1xi32, #tpu.memory_space<vmem>>, vector<16x1xi32>
    %c0_7 = arith.constant 0 : index
    %c0_8 = arith.constant 0 : index
    %c0_9 = arith.constant 0 : index
    %9 = vector.load %arg7[%c0_7, %c0_8, %c0_9] : memref<2x16x32xf32, #tpu.memory_space<vmem>>, vector<1x16x32xf32>
    %10 = vector.shape_cast %9 : vector<1x16x32xf32> to vector<16x32xf32>
    %c0_10 = arith.constant 0 : index
    %c0_11 = arith.constant 0 : index
    %c0_12 = arith.constant 0 : index
    %11 = vector.load %arg8[%c0_10, %c0_11, %c0_12] : memref<2x16x32xf32, #tpu.memory_space<vmem>>, vector<1x16x32xf32>
    %12 = vector.shape_cast %11 : vector<1x16x32xf32> to vector<16x32xf32>
    %c1_13 = arith.constant 1 : index
    %c0_14 = arith.constant 0 : index
    %c0_15 = arith.constant 0 : index
    %13 = vector.load %arg7[%c1_13, %c0_14, %c0_15] : memref<2x16x32xf32, #tpu.memory_space<vmem>>, vector<1x16x32xf32>
    %14 = vector.shape_cast %13 : vector<1x16x32xf32> to vector<16x32xf32>
    %c1_16 = arith.constant 1 : index
    %c0_17 = arith.constant 0 : index
    %c0_18 = arith.constant 0 : index
    %15 = vector.load %arg8[%c1_16, %c0_17, %c0_18] : memref<2x16x32xf32, #tpu.memory_space<vmem>>, vector<1x16x32xf32>
    %16 = vector.shape_cast %15 : vector<1x16x32xf32> to vector<16x32xf32>
    %c0_i32_19 = arith.constant 0 : i32
    %c0_20 = arith.constant 0 : index
    %17 = arith.index_cast %c0_i32_19 : i32 to index
    %c0_21 = arith.constant 0 : index
    %c0_22 = arith.constant 0 : index
    %18 = vector.load %arg1[%c0_20, %17, %c0_21, %c0_22] : memref<2x4x16x128xbf16, #tpu.memory_space<vmem>>, vector<1x1x16x128xbf16>
    %19 = vector.shape_cast %18 : vector<1x1x16x128xbf16> to vector<16x128xbf16>
    %20 = arith.extf %19 : vector<16x128xbf16> to vector<16x128xf32>
    %21 = arith.truncf %10 : vector<16x32xf32> to vector<16x32xbf16>
    %cst = arith.constant dense<0.000000e+00> : vector<16x128xf32>
    %22 = tpu.matmul %21, %5, %cst {dimension_numbers = #tpu.dot_dimension_numbers<[1], [0], [0], [1], [0, 0, 1, 1], [], []>} : vector<16x32xbf16>, vector<32x128xbf16>, vector<16x128xf32> -> vector<16x128xf32>
    %23 = arith.addf %20, %22 : vector<16x128xf32>
    %24 = vector.extract_strided_slice %23 {offsets = [0, 0], sizes = [16, 32], strides = [1, 1]} : vector<16x128xf32> to vector<16x32xf32>
    %25 = arith.negf %24 : vector<16x32xf32>
    %26 = math.exp %25 : vector<16x32xf32>
    %cst_23 = arith.constant 1.000000e+00 : f32
    %27 = vector.broadcast %cst_23 : f32 to vector<16x32xf32>
    %28 = arith.addf %27, %26 : vector<16x32xf32>
    %29 = arith.divf %27, %28 : vector<16x32xf32>
    %30 = vector.extract_strided_slice %23 {offsets = [0, 32], sizes = [16, 32], strides = [1, 1]} : vector<16x128xf32> to vector<16x32xf32>
    %31 = arith.negf %30 : vector<16x32xf32>
    %32 = math.exp %31 : vector<16x32xf32>
    %cst_24 = arith.constant 1.000000e+00 : f32
    %33 = vector.broadcast %cst_24 : f32 to vector<16x32xf32>
    %34 = arith.addf %33, %32 : vector<16x32xf32>
    %35 = arith.divf %33, %34 : vector<16x32xf32>
    %36 = vector.extract_strided_slice %23 {offsets = [0, 64], sizes = [16, 32], strides = [1, 1]} : vector<16x128xf32> to vector<16x32xf32>
    %37 = math.tanh %36 : vector<16x32xf32>
    %38 = vector.extract_strided_slice %23 {offsets = [0, 96], sizes = [16, 32], strides = [1, 1]} : vector<16x128xf32> to vector<16x32xf32>
    %39 = arith.negf %38 : vector<16x32xf32>
    %40 = math.exp %39 : vector<16x32xf32>
    %cst_25 = arith.constant 1.000000e+00 : f32
    %41 = vector.broadcast %cst_25 : f32 to vector<16x32xf32>
    %42 = arith.addf %41, %40 : vector<16x32xf32>
    %43 = arith.divf %41, %42 : vector<16x32xf32>
    %44 = arith.mulf %35, %12 : vector<16x32xf32>
    %45 = arith.mulf %29, %37 : vector<16x32xf32>
    %46 = arith.addf %44, %45 : vector<16x32xf32>
    %47 = math.tanh %46 : vector<16x32xf32>
    %48 = arith.mulf %43, %47 : vector<16x32xf32>
    %49 = arith.addi %3, %c0_i32_19 : i32
    %50 = vector.broadcast %49 : i32 to vector<16x1xi32>
    %51 = arith.cmpi slt, %50, %8 : vector<16x1xi32>
    %52 = arith.extui %51 : vector<16x1xi1> to vector<16x1xi32>
    %53 = arith.sitofp %52 : vector<16x1xi32> to vector<16x1xf32>
    %54 = vector.broadcast %53 : vector<16x1xf32> to vector<16x32xf32>
    %55 = arith.mulf %48, %54 : vector<16x32xf32>
    %56 = arith.truncf %55 : vector<16x32xf32> to vector<16x32xbf16>
    %c0_26 = arith.constant 0 : index
    %57 = arith.index_cast %c0_i32_19 : i32 to index
    %c0_27 = arith.constant 0 : index
    %c0_28 = arith.constant 0 : index
    %58 = vector.load %arg4[%c0_26, %57, %c0_27, %c0_28] : memref<2x4x16x32xbf16, #tpu.memory_space<vmem>>, vector<1x1x16x32xbf16>
    %59 = vector.shape_cast %58 : vector<1x1x16x32xbf16> to vector<16x32xbf16>
    %60 = vector.shape_cast %56 : vector<16x32xbf16> to vector<1x1x16x32xbf16>
    tpu.vector_store %arg4[%c0_26, %57, %c0_27, %c0_28], %60 {strides = array<i32>} : memref<2x4x16x32xbf16, #tpu.memory_space<vmem>>, vector<1x1x16x32xbf16>,
    %c1_29 = arith.constant 1 : index
    %61 = arith.index_cast %c0_i32_19 : i32 to index
    %c0_30 = arith.constant 0 : index
    %c0_31 = arith.constant 0 : index
    %62 = vector.load %arg1[%c1_29, %61, %c0_30, %c0_31] : memref<2x4x16x128xbf16, #tpu.memory_space<vmem>>, vector<1x1x16x128xbf16>
    %63 = vector.shape_cast %62 : vector<1x1x16x128xbf16> to vector<16x128xbf16>
    %64 = arith.extf %63 : vector<16x128xbf16> to vector<16x128xf32>
    %65 = arith.truncf %14 : vector<16x32xf32> to vector<16x32xbf16>
    %cst_32 = arith.constant dense<0.000000e+00> : vector<16x128xf32>
    %66 = tpu.matmul %65, %7, %cst_32 {dimension_numbers = #tpu.dot_dimension_numbers<[1], [0], [0], [1], [0, 0, 1, 1], [], []>} : vector<16x32xbf16>, vector<32x128xbf16>, vector<16x128xf32> -> vector<16x128xf32>
    %67 = arith.addf %64, %66 : vector<16x128xf32>
    %68 = vector.extract_strided_slice %67 {offsets = [0, 0], sizes = [16, 32], strides = [1, 1]} : vector<16x128xf32> to vector<16x32xf32>
    %69 = arith.negf %68 : vector<16x32xf32>
    %70 = math.exp %69 : vector<16x32xf32>
    %cst_33 = arith.constant 1.000000e+00 : f32
    %71 = vector.broadcast %cst_33 : f32 to vector<16x32xf32>
    %72 = arith.addf %71, %70 : vector<16x32xf32>
    %73 = arith.divf %71, %72 : vector<16x32xf32>
    %74 = vector.extract_strided_slice %67 {offsets = [0, 32], sizes = [16, 32], strides = [1, 1]} : vector<16x128xf32> to vector<16x32xf32>
    %75 = arith.negf %74 : vector<16x32xf32>
    %76 = math.exp %75 : vector<16x32xf32>
    %cst_34 = arith.constant 1.000000e+00 : f32
    %77 = vector.broadcast %cst_34 : f32 to vector<16x32xf32>
    %78 = arith.addf %77, %76 : vector<16x32xf32>
    %79 = arith.divf %77, %78 : vector<16x32xf32>
    %80 = vector.extract_strided_slice %67 {offsets = [0, 64], sizes = [16, 32], strides = [1, 1]} : vector<16x128xf32> to vector<16x32xf32>
    %81 = math.tanh %80 : vector<16x32xf32>
    %82 = vector.extract_strided_slice %67 {offsets = [0, 96], sizes = [16, 32], strides = [1, 1]} : vector<16x128xf32> to vector<16x32xf32>
    %83 = arith.negf %82 : vector<16x32xf32>
    %84 = math.exp %83 : vector<16x32xf32>
    %cst_35 = arith.constant 1.000000e+00 : f32
    %85 = vector.broadcast %cst_35 : f32 to vector<16x32xf32>
    %86 = arith.addf %85, %84 : vector<16x32xf32>
    %87 = arith.divf %85, %86 : vector<16x32xf32>
    %88 = arith.mulf %79, %16 : vector<16x32xf32>
    %89 = arith.mulf %73, %81 : vector<16x32xf32>
    %90 = arith.addf %88, %89 : vector<16x32xf32>
    %91 = math.tanh %90 : vector<16x32xf32>
    %92 = arith.mulf %87, %91 : vector<16x32xf32>
    %93 = arith.addi %3, %c0_i32_19 : i32
    %94 = vector.broadcast %93 : i32 to vector<16x1xi32>
    %95 = arith.cmpi slt, %94, %8 : vector<16x1xi32>
    %96 = arith.extui %95 : vector<16x1xi1> to vector<16x1xi32>
    %97 = arith.sitofp %96 : vector<16x1xi32> to vector<16x1xf32>
    %98 = vector.broadcast %97 : vector<16x1xf32> to vector<16x32xf32>
    %99 = arith.mulf %92, %98 : vector<16x32xf32>
    %100 = arith.truncf %99 : vector<16x32xf32> to vector<16x32xbf16>
    %c1_36 = arith.constant 1 : index
    %101 = arith.index_cast %c0_i32_19 : i32 to index
    %c0_37 = arith.constant 0 : index
    %c0_38 = arith.constant 0 : index
    %102 = vector.load %arg4[%c1_36, %101, %c0_37, %c0_38] : memref<2x4x16x32xbf16, #tpu.memory_space<vmem>>, vector<1x1x16x32xbf16>
    %103 = vector.shape_cast %102 : vector<1x1x16x32xbf16> to vector<16x32xbf16>
    %104 = vector.shape_cast %100 : vector<16x32xbf16> to vector<1x1x16x32xbf16>
    tpu.vector_store %arg4[%c1_36, %101, %c0_37, %c0_38], %104 {strides = array<i32>} : memref<2x4x16x32xbf16, #tpu.memory_space<vmem>>, vector<1x1x16x32xbf16>,
    %c1_i32 = arith.constant 1 : i32
    %c0_39 = arith.constant 0 : index
    %105 = arith.index_cast %c1_i32 : i32 to index
    %c0_40 = arith.constant 0 : index
    %c0_41 = arith.constant 0 : index
    %106 = vector.load %arg1[%c0_39, %105, %c0_40, %c0_41] : memref<2x4x16x128xbf16, #tpu.memory_space<vmem>>, vector<1x1x16x128xbf16>
    %107 = vector.shape_cast %106 : vector<1x1x16x128xbf16> to vector<16x128xbf16>
    %108 = arith.extf %107 : vector<16x128xbf16> to vector<16x128xf32>
    %109 = arith.truncf %48 : vector<16x32xf32> to vector<16x32xbf16>
    %cst_42 = arith.constant dense<0.000000e+00> : vector<16x128xf32>
    %110 = tpu.matmul %109, %5, %cst_42 {dimension_numbers = #tpu.dot_dimension_numbers<[1], [0], [0], [1], [0, 0, 1, 1], [], []>} : vector<16x32xbf16>, vector<32x128xbf16>, vector<16x128xf32> -> vector<16x128xf32>
    %111 = arith.addf %108, %110 : vector<16x128xf32>
    %112 = vector.extract_strided_slice %111 {offsets = [0, 0], sizes = [16, 32], strides = [1, 1]} : vector<16x128xf32> to vector<16x32xf32>
    %113 = arith.negf %112 : vector<16x32xf32>
    %114 = math.exp %113 : vector<16x32xf32>
    %cst_43 = arith.constant 1.000000e+00 : f32
    %115 = vector.broadcast %cst_43 : f32 to vector<16x32xf32>
    %116 = arith.addf %115, %114 : vector<16x32xf32>
    %117 = arith.divf %115, %116 : vector<16x32xf32>
    %118 = vector.extract_strided_slice %111 {offsets = [0, 32], sizes = [16, 32], strides = [1, 1]} : vector<16x128xf32> to vector<16x32xf32>
    %119 = arith.negf %118 : vector<16x32xf32>
    %120 = math.exp %119 : vector<16x32xf32>
    %cst_44 = arith.constant 1.000000e+00 : f32
    %121 = vector.broadcast %cst_44 : f32 to vector<16x32xf32>
    %122 = arith.addf %121, %120 : vector<16x32xf32>
    %123 = arith.divf %121, %122 : vector<16x32xf32>
    %124 = vector.extract_strided_slice %111 {offsets = [0, 64], sizes = [16, 32], strides = [1, 1]} : vector<16x128xf32> to vector<16x32xf32>
    %125 = math.tanh %124 : vector<16x32xf32>
    %126 = vector.extract_strided_slice %111 {offsets = [0, 96], sizes = [16, 32], strides = [1, 1]} : vector<16x128xf32> to vector<16x32xf32>
    %127 = arith.negf %126 : vector<16x32xf32>
    %128 = math.exp %127 : vector<16x32xf32>
    %cst_45 = arith.constant 1.000000e+00 : f32
    %129 = vector.broadcast %cst_45 : f32 to vector<16x32xf32>
    %130 = arith.addf %129, %128 : vector<16x32xf32>
    %131 = arith.divf %129, %130 : vector<16x32xf32>
    %132 = arith.mulf %123, %46 : vector<16x32xf32>
    %133 = arith.mulf %117, %125 : vector<16x32xf32>
    %134 = arith.addf %132, %133 : vector<16x32xf32>
    %135 = math.tanh %134 : vector<16x32xf32>
    %136 = arith.mulf %131, %135 : vector<16x32xf32>
    %137 = arith.addi %3, %c1_i32 : i32
    %138 = vector.broadcast %137 : i32 to vector<16x1xi32>
    %139 = arith.cmpi slt, %138, %8 : vector<16x1xi32>
    %140 = arith.extui %139 : vector<16x1xi1> to vector<16x1xi32>
    %141 = arith.sitofp %140 : vector<16x1xi32> to vector<16x1xf32>
    %142 = vector.broadcast %141 : vector<16x1xf32> to vector<16x32xf32>
    %143 = arith.mulf %136, %142 : vector<16x32xf32>
    %144 = arith.truncf %143 : vector<16x32xf32> to vector<16x32xbf16>
    %c0_46 = arith.constant 0 : index
    %145 = arith.index_cast %c1_i32 : i32 to index
    %c0_47 = arith.constant 0 : index
    %c0_48 = arith.constant 0 : index
    %146 = vector.load %arg4[%c0_46, %145, %c0_47, %c0_48] : memref<2x4x16x32xbf16, #tpu.memory_space<vmem>>, vector<1x1x16x32xbf16>
    %147 = vector.shape_cast %146 : vector<1x1x16x32xbf16> to vector<16x32xbf16>
    %148 = vector.shape_cast %144 : vector<16x32xbf16> to vector<1x1x16x32xbf16>
    tpu.vector_store %arg4[%c0_46, %145, %c0_47, %c0_48], %148 {strides = array<i32>} : memref<2x4x16x32xbf16, #tpu.memory_space<vmem>>, vector<1x1x16x32xbf16>,
    %c1_49 = arith.constant 1 : index
    %149 = arith.index_cast %c1_i32 : i32 to index
    %c0_50 = arith.constant 0 : index
    %c0_51 = arith.constant 0 : index
    %150 = vector.load %arg1[%c1_49, %149, %c0_50, %c0_51] : memref<2x4x16x128xbf16, #tpu.memory_space<vmem>>, vector<1x1x16x128xbf16>
    %151 = vector.shape_cast %150 : vector<1x1x16x128xbf16> to vector<16x128xbf16>
    %152 = arith.extf %151 : vector<16x128xbf16> to vector<16x128xf32>
    %153 = arith.truncf %92 : vector<16x32xf32> to vector<16x32xbf16>
    %cst_52 = arith.constant dense<0.000000e+00> : vector<16x128xf32>
    %154 = tpu.matmul %153, %7, %cst_52 {dimension_numbers = #tpu.dot_dimension_numbers<[1], [0], [0], [1], [0, 0, 1, 1], [], []>} : vector<16x32xbf16>, vector<32x128xbf16>, vector<16x128xf32> -> vector<16x128xf32>
    %155 = arith.addf %152, %154 : vector<16x128xf32>
    %156 = vector.extract_strided_slice %155 {offsets = [0, 0], sizes = [16, 32], strides = [1, 1]} : vector<16x128xf32> to vector<16x32xf32>
    %157 = arith.negf %156 : vector<16x32xf32>
    %158 = math.exp %157 : vector<16x32xf32>
    %cst_53 = arith.constant 1.000000e+00 : f32
    %159 = vector.broadcast %cst_53 : f32 to vector<16x32xf32>
    %160 = arith.addf %159, %158 : vector<16x32xf32>
    %161 = arith.divf %159, %160 : vector<16x32xf32>
    %162 = vector.extract_strided_slice %155 {offsets = [0, 32], sizes = [16, 32], strides = [1, 1]} : vector<16x128xf32> to vector<16x32xf32>
    %163 = arith.negf %162 : vector<16x32xf32>
    %164 = math.exp %163 : vector<16x32xf32>
    %cst_54 = arith.constant 1.000000e+00 : f32
    %165 = vector.broadcast %cst_54 : f32 to vector<16x32xf32>
    %166 = arith.addf %165, %164 : vector<16x32xf32>
    %167 = arith.divf %165, %166 : vector<16x32xf32>
    %168 = vector.extract_strided_slice %155 {offsets = [0, 64], sizes = [16, 32], strides = [1, 1]} : vector<16x128xf32> to vector<16x32xf32>
    %169 = math.tanh %168 : vector<16x32xf32>
    %170 = vector.extract_strided_slice %155 {offsets = [0, 96], sizes = [16, 32], strides = [1, 1]} : vector<16x128xf32> to vector<16x32xf32>
    %171 = arith.negf %170 : vector<16x32xf32>
    %172 = math.exp %171 : vector<16x32xf32>
    %cst_55 = arith.constant 1.000000e+00 : f32
    %173 = vector.broadcast %cst_55 : f32 to vector<16x32xf32>
    %174 = arith.addf %173, %172 : vector<16x32xf32>
    %175 = arith.divf %173, %174 : vector<16x32xf32>
    %176 = arith.mulf %167, %90 : vector<16x32xf32>
    %177 = arith.mulf %161, %169 : vector<16x32xf32>
    %178 = arith.addf %176, %177 : vector<16x32xf32>
    %179 = math.tanh %178 : vector<16x32xf32>
    %180 = arith.mulf %175, %179 : vector<16x32xf32>
    %181 = arith.addi %3, %c1_i32 : i32
    %182 = vector.broadcast %181 : i32 to vector<16x1xi32>
    %183 = arith.cmpi slt, %182, %8 : vector<16x1xi32>
    %184 = arith.extui %183 : vector<16x1xi1> to vector<16x1xi32>
    %185 = arith.sitofp %184 : vector<16x1xi32> to vector<16x1xf32>
    %186 = vector.broadcast %185 : vector<16x1xf32> to vector<16x32xf32>
    %187 = arith.mulf %180, %186 : vector<16x32xf32>
    %188 = arith.truncf %187 : vector<16x32xf32> to vector<16x32xbf16>
    %c1_56 = arith.constant 1 : index
    %189 = arith.index_cast %c1_i32 : i32 to index
    %c0_57 = arith.constant 0 : index
    %c0_58 = arith.constant 0 : index
    %190 = vector.load %arg4[%c1_56, %189, %c0_57, %c0_58] : memref<2x4x16x32xbf16, #tpu.memory_space<vmem>>, vector<1x1x16x32xbf16>
    %191 = vector.shape_cast %190 : vector<1x1x16x32xbf16> to vector<16x32xbf16>
    %192 = vector.shape_cast %188 : vector<16x32xbf16> to vector<1x1x16x32xbf16>
    tpu.vector_store %arg4[%c1_56, %189, %c0_57, %c0_58], %192 {strides = array<i32>} : memref<2x4x16x32xbf16, #tpu.memory_space<vmem>>, vector<1x1x16x32xbf16>,
    %c2_i32 = arith.constant 2 : i32
    %c0_59 = arith.constant 0 : index
    %193 = arith.index_cast %c2_i32 : i32 to index
    %c0_60 = arith.constant 0 : index
    %c0_61 = arith.constant 0 : index
    %194 = vector.load %arg1[%c0_59, %193, %c0_60, %c0_61] : memref<2x4x16x128xbf16, #tpu.memory_space<vmem>>, vector<1x1x16x128xbf16>
    %195 = vector.shape_cast %194 : vector<1x1x16x128xbf16> to vector<16x128xbf16>
    %196 = arith.extf %195 : vector<16x128xbf16> to vector<16x128xf32>
    %197 = arith.truncf %136 : vector<16x32xf32> to vector<16x32xbf16>
    %cst_62 = arith.constant dense<0.000000e+00> : vector<16x128xf32>
    %198 = tpu.matmul %197, %5, %cst_62 {dimension_numbers = #tpu.dot_dimension_numbers<[1], [0], [0], [1], [0, 0, 1, 1], [], []>} : vector<16x32xbf16>, vector<32x128xbf16>, vector<16x128xf32> -> vector<16x128xf32>
    %199 = arith.addf %196, %198 : vector<16x128xf32>
    %200 = vector.extract_strided_slice %199 {offsets = [0, 0], sizes = [16, 32], strides = [1, 1]} : vector<16x128xf32> to vector<16x32xf32>
    %201 = arith.negf %200 : vector<16x32xf32>
    %202 = math.exp %201 : vector<16x32xf32>
    %cst_63 = arith.constant 1.000000e+00 : f32
    %203 = vector.broadcast %cst_63 : f32 to vector<16x32xf32>
    %204 = arith.addf %203, %202 : vector<16x32xf32>
    %205 = arith.divf %203, %204 : vector<16x32xf32>
    %206 = vector.extract_strided_slice %199 {offsets = [0, 32], sizes = [16, 32], strides = [1, 1]} : vector<16x128xf32> to vector<16x32xf32>
    %207 = arith.negf %206 : vector<16x32xf32>
    %208 = math.exp %207 : vector<16x32xf32>
    %cst_64 = arith.constant 1.000000e+00 : f32
    %209 = vector.broadcast %cst_64 : f32 to vector<16x32xf32>
    %210 = arith.addf %209, %208 : vector<16x32xf32>
    %211 = arith.divf %209, %210 : vector<16x32xf32>
    %212 = vector.extract_strided_slice %199 {offsets = [0, 64], sizes = [16, 32], strides = [1, 1]} : vector<16x128xf32> to vector<16x32xf32>
    %213 = math.tanh %212 : vector<16x32xf32>
    %214 = vector.extract_strided_slice %199 {offsets = [0, 96], sizes = [16, 32], strides = [1, 1]} : vector<16x128xf32> to vector<16x32xf32>
    %215 = arith.negf %214 : vector<16x32xf32>
    %216 = math.exp %215 : vector<16x32xf32>
    %cst_65 = arith.constant 1.000000e+00 : f32
    %217 = vector.broadcast %cst_65 : f32 to vector<16x32xf32>
    %218 = arith.addf %217, %216 : vector<16x32xf32>
    %219 = arith.divf %217, %218 : vector<16x32xf32>
    %220 = arith.mulf %211, %134 : vector<16x32xf32>
    %221 = arith.mulf %205, %213 : vector<16x32xf32>
    %222 = arith.addf %220, %221 : vector<16x32xf32>
    %223 = math.tanh %222 : vector<16x32xf32>
    %224 = arith.mulf %219, %223 : vector<16x32xf32>
    %225 = arith.addi %3, %c2_i32 : i32
    %226 = vector.broadcast %225 : i32 to vector<16x1xi32>
    %227 = arith.cmpi slt, %226, %8 : vector<16x1xi32>
    %228 = arith.extui %227 : vector<16x1xi1> to vector<16x1xi32>
    %229 = arith.sitofp %228 : vector<16x1xi32> to vector<16x1xf32>
    %230 = vector.broadcast %229 : vector<16x1xf32> to vector<16x32xf32>
    %231 = arith.mulf %224, %230 : vector<16x32xf32>
    %232 = arith.truncf %231 : vector<16x32xf32> to vector<16x32xbf16>
    %c0_66 = arith.constant 0 : index
    %233 = arith.index_cast %c2_i32 : i32 to index
    %c0_67 = arith.constant 0 : index
    %c0_68 = arith.constant 0 : index
    %234 = vector.load %arg4[%c0_66, %233, %c0_67, %c0_68] : memref<2x4x16x32xbf16, #tpu.memory_space<vmem>>, vector<1x1x16x32xbf16>
    %235 = vector.shape_cast %234 : vector<1x1x16x32xbf16> to vector<16x32xbf16>
    %236 = vector.shape_cast %232 : vector<16x32xbf16> to vector<1x1x16x32xbf16>
    tpu.vector_store %arg4[%c0_66, %233, %c0_67, %c0_68], %236 {strides = array<i32>} : memref<2x4x16x32xbf16, #tpu.memory_space<vmem>>, vector<1x1x16x32xbf16>,
    %c1_69 = arith.constant 1 : index
    %237 = arith.index_cast %c2_i32 : i32 to index
    %c0_70 = arith.constant 0 : index
    %c0_71 = arith.constant 0 : index
    %238 = vector.load %arg1[%c1_69, %237, %c0_70, %c0_71] : memref<2x4x16x128xbf16, #tpu.memory_space<vmem>>, vector<1x1x16x128xbf16>
    %239 = vector.shape_cast %238 : vector<1x1x16x128xbf16> to vector<16x128xbf16>
    %240 = arith.extf %239 : vector<16x128xbf16> to vector<16x128xf32>
    %241 = arith.truncf %180 : vector<16x32xf32> to vector<16x32xbf16>
    %cst_72 = arith.constant dense<0.000000e+00> : vector<16x128xf32>
    %242 = tpu.matmul %241, %7, %cst_72 {dimension_numbers = #tpu.dot_dimension_numbers<[1], [0], [0], [1], [0, 0, 1, 1], [], []>} : vector<16x32xbf16>, vector<32x128xbf16>, vector<16x128xf32> -> vector<16x128xf32>
    %243 = arith.addf %240, %242 : vector<16x128xf32>
    %244 = vector.extract_strided_slice %243 {offsets = [0, 0], sizes = [16, 32], strides = [1, 1]} : vector<16x128xf32> to vector<16x32xf32>
    %245 = arith.negf %244 : vector<16x32xf32>
    %246 = math.exp %245 : vector<16x32xf32>
    %cst_73 = arith.constant 1.000000e+00 : f32
    %247 = vector.broadcast %cst_73 : f32 to vector<16x32xf32>
    %248 = arith.addf %247, %246 : vector<16x32xf32>
    %249 = arith.divf %247, %248 : vector<16x32xf32>
    %250 = vector.extract_strided_slice %243 {offsets = [0, 32], sizes = [16, 32], strides = [1, 1]} : vector<16x128xf32> to vector<16x32xf32>
    %251 = arith.negf %250 : vector<16x32xf32>
    %252 = math.exp %251 : vector<16x32xf32>
    %cst_74 = arith.constant 1.000000e+00 : f32
    %253 = vector.broadcast %cst_74 : f32 to vector<16x32xf32>
    %254 = arith.addf %253, %252 : vector<16x32xf32>
    %255 = arith.divf %253, %254 : vector<16x32xf32>
    %256 = vector.extract_strided_slice %243 {offsets = [0, 64], sizes = [16, 32], strides = [1, 1]} : vector<16x128xf32> to vector<16x32xf32>
    %257 = math.tanh %256 : vector<16x32xf32>
    %258 = vector.extract_strided_slice %243 {offsets = [0, 96], sizes = [16, 32], strides = [1, 1]} : vector<16x128xf32> to vector<16x32xf32>
    %259 = arith.negf %258 : vector<16x32xf32>
    %260 = math.exp %259 : vector<16x32xf32>
    %cst_75 = arith.constant 1.000000e+00 : f32
    %261 = vector.broadcast %cst_75 : f32 to vector<16x32xf32>
    %262 = arith.addf %261, %260 : vector<16x32xf32>
    %263 = arith.divf %261, %262 : vector<16x32xf32>
    %264 = arith.mulf %255, %178 : vector<16x32xf32>
    %265 = arith.mulf %249, %257 : vector<16x32xf32>
    %266 = arith.addf %264, %265 : vector<16x32xf32>
    %267 = math.tanh %266 : vector<16x32xf32>
    %268 = arith.mulf %263, %267 : vector<16x32xf32>
    %269 = arith.addi %3, %c2_i32 : i32
    %270 = vector.broadcast %269 : i32 to vector<16x1xi32>
    %271 = arith.cmpi slt, %270, %8 : vector<16x1xi32>
    %272 = arith.extui %271 : vector<16x1xi1> to vector<16x1xi32>
    %273 = arith.sitofp %272 : vector<16x1xi32> to vector<16x1xf32>
    %274 = vector.broadcast %273 : vector<16x1xf32> to vector<16x32xf32>
    %275 = arith.mulf %268, %274 : vector<16x32xf32>
    %276 = arith.truncf %275 : vector<16x32xf32> to vector<16x32xbf16>
    %c1_76 = arith.constant 1 : index
    %277 = arith.index_cast %c2_i32 : i32 to index
    %c0_77 = arith.constant 0 : index
    %c0_78 = arith.constant 0 : index
    %278 = vector.load %arg4[%c1_76, %277, %c0_77, %c0_78] : memref<2x4x16x32xbf16, #tpu.memory_space<vmem>>, vector<1x1x16x32xbf16>
    %279 = vector.shape_cast %278 : vector<1x1x16x32xbf16> to vector<16x32xbf16>
    %280 = vector.shape_cast %276 : vector<16x32xbf16> to vector<1x1x16x32xbf16>
    tpu.vector_store %arg4[%c1_76, %277, %c0_77, %c0_78], %280 {strides = array<i32>} : memref<2x4x16x32xbf16, #tpu.memory_space<vmem>>, vector<1x1x16x32xbf16>,
    %c3_i32 = arith.constant 3 : i32
    %c0_79 = arith.constant 0 : index
    %281 = arith.index_cast %c3_i32 : i32 to index
    %c0_80 = arith.constant 0 : index
    %c0_81 = arith.constant 0 : index
    %282 = vector.load %arg1[%c0_79, %281, %c0_80, %c0_81] : memref<2x4x16x128xbf16, #tpu.memory_space<vmem>>, vector<1x1x16x128xbf16>
    %283 = vector.shape_cast %282 : vector<1x1x16x128xbf16> to vector<16x128xbf16>
    %284 = arith.extf %283 : vector<16x128xbf16> to vector<16x128xf32>
    %285 = arith.truncf %224 : vector<16x32xf32> to vector<16x32xbf16>
    %cst_82 = arith.constant dense<0.000000e+00> : vector<16x128xf32>
    %286 = tpu.matmul %285, %5, %cst_82 {dimension_numbers = #tpu.dot_dimension_numbers<[1], [0], [0], [1], [0, 0, 1, 1], [], []>} : vector<16x32xbf16>, vector<32x128xbf16>, vector<16x128xf32> -> vector<16x128xf32>
    %287 = arith.addf %284, %286 : vector<16x128xf32>
    %288 = vector.extract_strided_slice %287 {offsets = [0, 0], sizes = [16, 32], strides = [1, 1]} : vector<16x128xf32> to vector<16x32xf32>
    %289 = arith.negf %288 : vector<16x32xf32>
    %290 = math.exp %289 : vector<16x32xf32>
    %cst_83 = arith.constant 1.000000e+00 : f32
    %291 = vector.broadcast %cst_83 : f32 to vector<16x32xf32>
    %292 = arith.addf %291, %290 : vector<16x32xf32>
    %293 = arith.divf %291, %292 : vector<16x32xf32>
    %294 = vector.extract_strided_slice %287 {offsets = [0, 32], sizes = [16, 32], strides = [1, 1]} : vector<16x128xf32> to vector<16x32xf32>
    %295 = arith.negf %294 : vector<16x32xf32>
    %296 = math.exp %295 : vector<16x32xf32>
    %cst_84 = arith.constant 1.000000e+00 : f32
    %297 = vector.broadcast %cst_84 : f32 to vector<16x32xf32>
    %298 = arith.addf %297, %296 : vector<16x32xf32>
    %299 = arith.divf %297, %298 : vector<16x32xf32>
    %300 = vector.extract_strided_slice %287 {offsets = [0, 64], sizes = [16, 32], strides = [1, 1]} : vector<16x128xf32> to vector<16x32xf32>
    %301 = math.tanh %300 : vector<16x32xf32>
    %302 = vector.extract_strided_slice %287 {offsets = [0, 96], sizes = [16, 32], strides = [1, 1]} : vector<16x128xf32> to vector<16x32xf32>
    %303 = arith.negf %302 : vector<16x32xf32>
    %304 = math.exp %303 : vector<16x32xf32>
    %cst_85 = arith.constant 1.000000e+00 : f32
    %305 = vector.broadcast %cst_85 : f32 to vector<16x32xf32>
    %306 = arith.addf %305, %304 : vector<16x32xf32>
    %307 = arith.divf %305, %306 : vector<16x32xf32>
    %308 = arith.mulf %299, %222 : vector<16x32xf32>
    %309 = arith.mulf %293, %301 : vector<16x32xf32>
    %310 = arith.addf %308, %309 : vector<16x32xf32>
    %311 = math.tanh %310 : vector<16x32xf32>
    %312 = arith.mulf %307, %311 : vector<16x32xf32>
    %313 = arith.addi %3, %c3_i32 : i32
    %314 = vector.broadcast %313 : i32 to vector<16x1xi32>
    %315 = arith.cmpi slt, %314, %8 : vector<16x1xi32>
    %316 = arith.extui %315 : vector<16x1xi1> to vector<16x1xi32>
    %317 = arith.sitofp %316 : vector<16x1xi32> to vector<16x1xf32>
    %318 = vector.broadcast %317 : vector<16x1xf32> to vector<16x32xf32>
    %319 = arith.mulf %312, %318 : vector<16x32xf32>
    %320 = arith.truncf %319 : vector<16x32xf32> to vector<16x32xbf16>
    %c0_86 = arith.constant 0 : index
    %321 = arith.index_cast %c3_i32 : i32 to index
    %c0_87 = arith.constant 0 : index
    %c0_88 = arith.constant 0 : index
    %322 = vector.load %arg4[%c0_86, %321, %c0_87, %c0_88] : memref<2x4x16x32xbf16, #tpu.memory_space<vmem>>, vector<1x1x16x32xbf16>
    %323 = vector.shape_cast %322 : vector<1x1x16x32xbf16> to vector<16x32xbf16>
    %324 = vector.shape_cast %320 : vector<16x32xbf16> to vector<1x1x16x32xbf16>
    tpu.vector_store %arg4[%c0_86, %321, %c0_87, %c0_88], %324 {strides = array<i32>} : memref<2x4x16x32xbf16, #tpu.memory_space<vmem>>, vector<1x1x16x32xbf16>,
    %c1_89 = arith.constant 1 : index
    %325 = arith.index_cast %c3_i32 : i32 to index
    %c0_90 = arith.constant 0 : index
    %c0_91 = arith.constant 0 : index
    %326 = vector.load %arg1[%c1_89, %325, %c0_90, %c0_91] : memref<2x4x16x128xbf16, #tpu.memory_space<vmem>>, vector<1x1x16x128xbf16>
    %327 = vector.shape_cast %326 : vector<1x1x16x128xbf16> to vector<16x128xbf16>
    %328 = arith.extf %327 : vector<16x128xbf16> to vector<16x128xf32>
    %329 = arith.truncf %268 : vector<16x32xf32> to vector<16x32xbf16>
    %cst_92 = arith.constant dense<0.000000e+00> : vector<16x128xf32>
    %330 = tpu.matmul %329, %7, %cst_92 {dimension_numbers = #tpu.dot_dimension_numbers<[1], [0], [0], [1], [0, 0, 1, 1], [], []>} : vector<16x32xbf16>, vector<32x128xbf16>, vector<16x128xf32> -> vector<16x128xf32>
    %331 = arith.addf %328, %330 : vector<16x128xf32>
    %332 = vector.extract_strided_slice %331 {offsets = [0, 0], sizes = [16, 32], strides = [1, 1]} : vector<16x128xf32> to vector<16x32xf32>
    %333 = arith.negf %332 : vector<16x32xf32>
    %334 = math.exp %333 : vector<16x32xf32>
    %cst_93 = arith.constant 1.000000e+00 : f32
    %335 = vector.broadcast %cst_93 : f32 to vector<16x32xf32>
    %336 = arith.addf %335, %334 : vector<16x32xf32>
    %337 = arith.divf %335, %336 : vector<16x32xf32>
    %338 = vector.extract_strided_slice %331 {offsets = [0, 32], sizes = [16, 32], strides = [1, 1]} : vector<16x128xf32> to vector<16x32xf32>
    %339 = arith.negf %338 : vector<16x32xf32>
    %340 = math.exp %339 : vector<16x32xf32>
    %cst_94 = arith.constant 1.000000e+00 : f32
    %341 = vector.broadcast %cst_94 : f32 to vector<16x32xf32>
    %342 = arith.addf %341, %340 : vector<16x32xf32>
    %343 = arith.divf %341, %342 : vector<16x32xf32>
    %344 = vector.extract_strided_slice %331 {offsets = [0, 64], sizes = [16, 32], strides = [1, 1]} : vector<16x128xf32> to vector<16x32xf32>
    %345 = math.tanh %344 : vector<16x32xf32>
    %346 = vector.extract_strided_slice %331 {offsets = [0, 96], sizes = [16, 32], strides = [1, 1]} : vector<16x128xf32> to vector<16x32xf32>
    %347 = arith.negf %346 : vector<16x32xf32>
    %348 = math.exp %347 : vector<16x32xf32>
    %cst_95 = arith.constant 1.000000e+00 : f32
    %349 = vector.broadcast %cst_95 : f32 to vector<16x32xf32>
    %350 = arith.addf %349, %348 : vector<16x32xf32>
    %351 = arith.divf %349, %350 : vector<16x32xf32>
    %352 = arith.mulf %343, %266 : vector<16x32xf32>
    %353 = arith.mulf %337, %345 : vector<16x32xf32>
    %354 = arith.addf %352, %353 : vector<16x32xf32>
    %355 = math.tanh %354 : vector<16x32xf32>
    %356 = arith.mulf %351, %355 : vector<16x32xf32>
    %357 = arith.addi %3, %c3_i32 : i32
    %358 = vector.broadcast %357 : i32 to vector<16x1xi32>
    %359 = arith.cmpi slt, %358, %8 : vector<16x1xi32>
    %360 = arith.extui %359 : vector<16x1xi1> to vector<16x1xi32>
    %361 = arith.sitofp %360 : vector<16x1xi32> to vector<16x1xf32>
    %362 = vector.broadcast %361 : vector<16x1xf32> to vector<16x32xf32>
    %363 = arith.mulf %356, %362 : vector<16x32xf32>
    %364 = arith.truncf %363 : vector<16x32xf32> to vector<16x32xbf16>
    %c1_96 = arith.constant 1 : index
    %365 = arith.index_cast %c3_i32 : i32 to index
    %c0_97 = arith.constant 0 : index
    %c0_98 = arith.constant 0 : index
    %366 = vector.load %arg4[%c1_96, %365, %c0_97, %c0_98] : memref<2x4x16x32xbf16, #tpu.memory_space<vmem>>, vector<1x1x16x32xbf16>
    %367 = vector.shape_cast %366 : vector<1x1x16x32xbf16> to vector<16x32xbf16>
    %368 = vector.shape_cast %364 : vector<16x32xbf16> to vector<1x1x16x32xbf16>
    tpu.vector_store %arg4[%c1_96, %365, %c0_97, %c0_98], %368 {strides = array<i32>} : memref<2x4x16x32xbf16, #tpu.memory_space<vmem>>, vector<1x1x16x32xbf16>,
    %c4_i32_99 = arith.constant 4 : i32
    %c0_100 = arith.constant 0 : index
    %c0_101 = arith.constant 0 : index
    %c0_102 = arith.constant 0 : index
    %369 = vector.load %arg7[%c0_100, %c0_101, %c0_102] : memref<2x16x32xf32, #tpu.memory_space<vmem>>, vector<1x16x32xf32>
    %370 = vector.shape_cast %369 : vector<1x16x32xf32> to vector<16x32xf32>
    %371 = vector.shape_cast %312 : vector<16x32xf32> to vector<1x16x32xf32>
    tpu.vector_store %arg7[%c0_100, %c0_101, %c0_102], %371 {strides = array<i32>} : memref<2x16x32xf32, #tpu.memory_space<vmem>>, vector<1x16x32xf32>,
    %c0_103 = arith.constant 0 : index
    %c0_104 = arith.constant 0 : index
    %c0_105 = arith.constant 0 : index
    %372 = vector.load %arg8[%c0_103, %c0_104, %c0_105] : memref<2x16x32xf32, #tpu.memory_space<vmem>>, vector<1x16x32xf32>
    %373 = vector.shape_cast %372 : vector<1x16x32xf32> to vector<16x32xf32>
    %374 = vector.shape_cast %310 : vector<16x32xf32> to vector<1x16x32xf32>
    tpu.vector_store %arg8[%c0_103, %c0_104, %c0_105], %374 {strides = array<i32>} : memref<2x16x32xf32, #tpu.memory_space<vmem>>, vector<1x16x32xf32>,
    %c1_106 = arith.constant 1 : index
    %c0_107 = arith.constant 0 : index
    %c0_108 = arith.constant 0 : index
    %375 = vector.load %arg7[%c1_106, %c0_107, %c0_108] : memref<2x16x32xf32, #tpu.memory_space<vmem>>, vector<1x16x32xf32>
    %376 = vector.shape_cast %375 : vector<1x16x32xf32> to vector<16x32xf32>
    %377 = vector.shape_cast %356 : vector<16x32xf32> to vector<1x16x32xf32>
    tpu.vector_store %arg7[%c1_106, %c0_107, %c0_108], %377 {strides = array<i32>} : memref<2x16x32xf32, #tpu.memory_space<vmem>>, vector<1x16x32xf32>,
    %c1_109 = arith.constant 1 : index
    %c0_110 = arith.constant 0 : index
    %c0_111 = arith.constant 0 : index
    %378 = vector.load %arg8[%c1_109, %c0_110, %c0_111] : memref<2x16x32xf32, #tpu.memory_space<vmem>>, vector<1x16x32xf32>
    %379 = vector.shape_cast %378 : vector<1x16x32xf32> to vector<16x32xf32>
    %380 = vector.shape_cast %354 : vector<16x32xf32> to vector<1x16x32xf32>
    tpu.vector_store %arg8[%c1_109, %c0_110, %c0_111], %380 {strides = array<i32>} : memref<2x16x32xf32, #tpu.memory_space<vmem>>, vector<1x16x32xf32>,
    return
  }
  func.func @transform_0(%arg0: i32) -> (i32, i32, i32, i32) {
    %c0_i32 = arith.constant 0 : i32
    %c0_i32_0 = arith.constant 0 : i32
    %c0_i32_1 = arith.constant 0 : i32
    %c0_i32_2 = arith.constant 0 : i32
    return %c0_i32, %arg0, %c0_i32_0, %c0_i32_1 : i32, i32, i32, i32
  }
  func.func @transform_2(%arg0: i32) -> (i32, i32) {
    %c0_i32 = arith.constant 0 : i32
    %c0_i32_0 = arith.constant 0 : i32
    %c0_i32_1 = arith.constant 0 : i32
    return %c0_i32, %c0_i32_0 : i32, i32
  }
  func.func @transform_3(%arg0: i32) -> (i32, i32, i32, i32) {
    %c0_i32 = arith.constant 0 : i32
    %c0_i32_0 = arith.constant 0 : i32
    %c0_i32_1 = arith.constant 0 : i32
    %c0_i32_2 = arith.constant 0 : i32
    return %c0_i32, %arg0, %c0_i32_0, %c0_i32_1 : i32, i32, i32, i32
  }
}

module attributes {stable_mosaic.version = 11 : i64} {
  func.func @kernel(%arg0: i32, %arg1: memref<1x4x16x128xbf16, #tpu.memory_space<vmem>>, %arg2: memref<1x32x128xbf16, #tpu.memory_space<any>>, %arg3: memref<1x4x16x32xbf16, #tpu.memory_space<vmem>>, %arg4: memref<1x32x128xbf16, #tpu.memory_space<vmem>>, %arg5: memref<!tpu.dma_semaphore, #tpu.memory_space<semaphore_mem>>, %arg6: memref<2x8x32xf32, #tpu.memory_space<vmem>>, %arg7: memref<2x8x32xf32, #tpu.memory_space<vmem>>) attributes {dimension_semantics = [#tpu.dimension_semantics<arbitrary>], iteration_bounds = array<i64: 2>, scalar_prefetch = 0 : i64, scratch_operands = 4 : i64, tpu.core_type = #tpu.core_type<tc>, window_params = [{transform_indices = @transform_0, window_bounds = array<i64: 1, 4, 16, 128>}, {}, {transform_indices = @transform_2, window_bounds = array<i64: 1, 4, 16, 32>}]} {
    %c0_i32 = arith.constant 0 : i32
    %0 = arith.cmpi eq, %arg0, %c0_i32 : i32
    %1 = arith.extui %0 : i1 to i32
    %c0_i32_0 = arith.constant 0 : i32
    %2 = arith.cmpi ne, %1, %c0_i32_0 : i32
    scf.if %2 {
      tpu.enqueue_dma source(%arg2 : memref<1x32x128xbf16, #tpu.memory_space<any>>) target(%arg4 : memref<1x32x128xbf16, #tpu.memory_space<vmem>>) target_semaphore(%arg5 : memref<!tpu.dma_semaphore, #tpu.memory_space<semaphore_mem>>)
      tpu.wait_dma2 semaphore(%arg5 : memref<!tpu.dma_semaphore, #tpu.memory_space<semaphore_mem>>) src(%arg2 : memref<1x32x128xbf16, #tpu.memory_space<any>>) dst(%arg4 : memref<1x32x128xbf16, #tpu.memory_space<vmem>>)
      %cst_105 = arith.constant 0.000000e+00 : f32
      %321 = vector.broadcast %cst_105 : f32 to vector<2x8x32xf32>
      %c0_106 = arith.constant 0 : index
      %c0_107 = arith.constant 0 : index
      %c0_108 = arith.constant 0 : index
      %322 = vector.load %arg6[%c0_106, %c0_107, %c0_108] : memref<2x8x32xf32, #tpu.memory_space<vmem>>, vector<2x8x32xf32>
      tpu.vector_store %arg6[%c0_106, %c0_107, %c0_108], %321 {strides = array<i32>} : memref<2x8x32xf32, #tpu.memory_space<vmem>>, vector<2x8x32xf32>,
      %cst_109 = arith.constant 0.000000e+00 : f32
      %323 = vector.broadcast %cst_109 : f32 to vector<2x8x32xf32>
      %c0_110 = arith.constant 0 : index
      %c0_111 = arith.constant 0 : index
      %c0_112 = arith.constant 0 : index
      %324 = vector.load %arg7[%c0_110, %c0_111, %c0_112] : memref<2x8x32xf32, #tpu.memory_space<vmem>>, vector<2x8x32xf32>
      tpu.vector_store %arg7[%c0_110, %c0_111, %c0_112], %323 {strides = array<i32>} : memref<2x8x32xf32, #tpu.memory_space<vmem>>, vector<2x8x32xf32>,
    } else {
    }
    %c0 = arith.constant 0 : index
    %c0_1 = arith.constant 0 : index
    %c0_2 = arith.constant 0 : index
    %3 = vector.load %arg4[%c0, %c0_1, %c0_2] : memref<1x32x128xbf16, #tpu.memory_space<vmem>>, vector<1x32x128xbf16>
    %4 = vector.shape_cast %3 : vector<1x32x128xbf16> to vector<32x128xbf16>
    %c0_3 = arith.constant 0 : index
    %c0_4 = arith.constant 0 : index
    %c0_5 = arith.constant 0 : index
    %5 = vector.load %arg6[%c0_3, %c0_4, %c0_5] : memref<2x8x32xf32, #tpu.memory_space<vmem>>, vector<1x8x32xf32>
    %6 = vector.shape_cast %5 : vector<1x8x32xf32> to vector<8x32xf32>
    %c0_6 = arith.constant 0 : index
    %c0_7 = arith.constant 0 : index
    %c0_8 = arith.constant 0 : index
    %7 = vector.load %arg7[%c0_6, %c0_7, %c0_8] : memref<2x8x32xf32, #tpu.memory_space<vmem>>, vector<1x8x32xf32>
    %8 = vector.shape_cast %7 : vector<1x8x32xf32> to vector<8x32xf32>
    %c1 = arith.constant 1 : index
    %c0_9 = arith.constant 0 : index
    %c0_10 = arith.constant 0 : index
    %9 = vector.load %arg6[%c1, %c0_9, %c0_10] : memref<2x8x32xf32, #tpu.memory_space<vmem>>, vector<1x8x32xf32>
    %10 = vector.shape_cast %9 : vector<1x8x32xf32> to vector<8x32xf32>
    %c1_11 = arith.constant 1 : index
    %c0_12 = arith.constant 0 : index
    %c0_13 = arith.constant 0 : index
    %11 = vector.load %arg7[%c1_11, %c0_12, %c0_13] : memref<2x8x32xf32, #tpu.memory_space<vmem>>, vector<1x8x32xf32>
    %12 = vector.shape_cast %11 : vector<1x8x32xf32> to vector<8x32xf32>
    %c0_i32_14 = arith.constant 0 : i32
    %c0_15 = arith.constant 0 : index
    %13 = arith.index_cast %c0_i32_14 : i32 to index
    %c0_16 = arith.constant 0 : index
    %c0_17 = arith.constant 0 : index
    %14 = vector.load %arg1[%c0_15, %13, %c0_16, %c0_17] : memref<1x4x16x128xbf16, #tpu.memory_space<vmem>>, vector<1x1x8x128xbf16>
    %15 = vector.shape_cast %14 : vector<1x1x8x128xbf16> to vector<8x128xbf16>
    %16 = arith.extf %15 : vector<8x128xbf16> to vector<8x128xf32>
    %17 = arith.truncf %6 : vector<8x32xf32> to vector<8x32xbf16>
    %cst = arith.constant dense<0.000000e+00> : vector<8x128xf32>
    %18 = tpu.matmul %17, %4, %cst {dimension_numbers = #tpu.dot_dimension_numbers<[1], [0], [0], [1], [0, 0, 1, 1], [], []>} : vector<8x32xbf16>, vector<32x128xbf16>, vector<8x128xf32> -> vector<8x128xf32>
    %19 = arith.addf %16, %18 : vector<8x128xf32>
    %20 = vector.extract_strided_slice %19 {offsets = [0, 0], sizes = [8, 32], strides = [1, 1]} : vector<8x128xf32> to vector<8x32xf32>
    %21 = arith.negf %20 : vector<8x32xf32>
    %22 = math.exp %21 : vector<8x32xf32>
    %cst_18 = arith.constant 1.000000e+00 : f32
    %23 = vector.broadcast %cst_18 : f32 to vector<8x32xf32>
    %24 = arith.addf %23, %22 : vector<8x32xf32>
    %25 = arith.divf %23, %24 : vector<8x32xf32>
    %26 = vector.extract_strided_slice %19 {offsets = [0, 32], sizes = [8, 32], strides = [1, 1]} : vector<8x128xf32> to vector<8x32xf32>
    %27 = arith.negf %26 : vector<8x32xf32>
    %28 = math.exp %27 : vector<8x32xf32>
    %cst_19 = arith.constant 1.000000e+00 : f32
    %29 = vector.broadcast %cst_19 : f32 to vector<8x32xf32>
    %30 = arith.addf %29, %28 : vector<8x32xf32>
    %31 = arith.divf %29, %30 : vector<8x32xf32>
    %32 = vector.extract_strided_slice %19 {offsets = [0, 64], sizes = [8, 32], strides = [1, 1]} : vector<8x128xf32> to vector<8x32xf32>
    %33 = math.tanh %32 : vector<8x32xf32>
    %34 = vector.extract_strided_slice %19 {offsets = [0, 96], sizes = [8, 32], strides = [1, 1]} : vector<8x128xf32> to vector<8x32xf32>
    %35 = arith.negf %34 : vector<8x32xf32>
    %36 = math.exp %35 : vector<8x32xf32>
    %cst_20 = arith.constant 1.000000e+00 : f32
    %37 = vector.broadcast %cst_20 : f32 to vector<8x32xf32>
    %38 = arith.addf %37, %36 : vector<8x32xf32>
    %39 = arith.divf %37, %38 : vector<8x32xf32>
    %40 = arith.mulf %31, %8 : vector<8x32xf32>
    %41 = arith.mulf %25, %33 : vector<8x32xf32>
    %42 = arith.addf %40, %41 : vector<8x32xf32>
    %43 = math.tanh %42 : vector<8x32xf32>
    %44 = arith.mulf %39, %43 : vector<8x32xf32>
    %45 = arith.truncf %44 : vector<8x32xf32> to vector<8x32xbf16>
    %c0_21 = arith.constant 0 : index
    %46 = arith.index_cast %c0_i32_14 : i32 to index
    %c0_22 = arith.constant 0 : index
    %c0_23 = arith.constant 0 : index
    %47 = vector.load %arg3[%c0_21, %46, %c0_22, %c0_23] : memref<1x4x16x32xbf16, #tpu.memory_space<vmem>>, vector<1x1x8x32xbf16>
    %48 = vector.shape_cast %47 : vector<1x1x8x32xbf16> to vector<8x32xbf16>
    %49 = vector.shape_cast %45 : vector<8x32xbf16> to vector<1x1x8x32xbf16>
    tpu.vector_store %arg3[%c0_21, %46, %c0_22, %c0_23], %49 {strides = array<i32>} : memref<1x4x16x32xbf16, #tpu.memory_space<vmem>>, vector<1x1x8x32xbf16>,
    %c0_24 = arith.constant 0 : index
    %50 = arith.index_cast %c0_i32_14 : i32 to index
    %c8 = arith.constant 8 : index
    %c0_25 = arith.constant 0 : index
    %51 = vector.load %arg1[%c0_24, %50, %c8, %c0_25] : memref<1x4x16x128xbf16, #tpu.memory_space<vmem>>, vector<1x1x8x128xbf16>
    %52 = vector.shape_cast %51 : vector<1x1x8x128xbf16> to vector<8x128xbf16>
    %53 = arith.extf %52 : vector<8x128xbf16> to vector<8x128xf32>
    %54 = arith.truncf %10 : vector<8x32xf32> to vector<8x32xbf16>
    %cst_26 = arith.constant dense<0.000000e+00> : vector<8x128xf32>
    %55 = tpu.matmul %54, %4, %cst_26 {dimension_numbers = #tpu.dot_dimension_numbers<[1], [0], [0], [1], [0, 0, 1, 1], [], []>} : vector<8x32xbf16>, vector<32x128xbf16>, vector<8x128xf32> -> vector<8x128xf32>
    %56 = arith.addf %53, %55 : vector<8x128xf32>
    %57 = vector.extract_strided_slice %56 {offsets = [0, 0], sizes = [8, 32], strides = [1, 1]} : vector<8x128xf32> to vector<8x32xf32>
    %58 = arith.negf %57 : vector<8x32xf32>
    %59 = math.exp %58 : vector<8x32xf32>
    %cst_27 = arith.constant 1.000000e+00 : f32
    %60 = vector.broadcast %cst_27 : f32 to vector<8x32xf32>
    %61 = arith.addf %60, %59 : vector<8x32xf32>
    %62 = arith.divf %60, %61 : vector<8x32xf32>
    %63 = vector.extract_strided_slice %56 {offsets = [0, 32], sizes = [8, 32], strides = [1, 1]} : vector<8x128xf32> to vector<8x32xf32>
    %64 = arith.negf %63 : vector<8x32xf32>
    %65 = math.exp %64 : vector<8x32xf32>
    %cst_28 = arith.constant 1.000000e+00 : f32
    %66 = vector.broadcast %cst_28 : f32 to vector<8x32xf32>
    %67 = arith.addf %66, %65 : vector<8x32xf32>
    %68 = arith.divf %66, %67 : vector<8x32xf32>
    %69 = vector.extract_strided_slice %56 {offsets = [0, 64], sizes = [8, 32], strides = [1, 1]} : vector<8x128xf32> to vector<8x32xf32>
    %70 = math.tanh %69 : vector<8x32xf32>
    %71 = vector.extract_strided_slice %56 {offsets = [0, 96], sizes = [8, 32], strides = [1, 1]} : vector<8x128xf32> to vector<8x32xf32>
    %72 = arith.negf %71 : vector<8x32xf32>
    %73 = math.exp %72 : vector<8x32xf32>
    %cst_29 = arith.constant 1.000000e+00 : f32
    %74 = vector.broadcast %cst_29 : f32 to vector<8x32xf32>
    %75 = arith.addf %74, %73 : vector<8x32xf32>
    %76 = arith.divf %74, %75 : vector<8x32xf32>
    %77 = arith.mulf %68, %12 : vector<8x32xf32>
    %78 = arith.mulf %62, %70 : vector<8x32xf32>
    %79 = arith.addf %77, %78 : vector<8x32xf32>
    %80 = math.tanh %79 : vector<8x32xf32>
    %81 = arith.mulf %76, %80 : vector<8x32xf32>
    %82 = arith.truncf %81 : vector<8x32xf32> to vector<8x32xbf16>
    %c0_30 = arith.constant 0 : index
    %83 = arith.index_cast %c0_i32_14 : i32 to index
    %c8_31 = arith.constant 8 : index
    %c0_32 = arith.constant 0 : index
    %84 = vector.load %arg3[%c0_30, %83, %c8_31, %c0_32] : memref<1x4x16x32xbf16, #tpu.memory_space<vmem>>, vector<1x1x8x32xbf16>
    %85 = vector.shape_cast %84 : vector<1x1x8x32xbf16> to vector<8x32xbf16>
    %86 = vector.shape_cast %82 : vector<8x32xbf16> to vector<1x1x8x32xbf16>
    tpu.vector_store %arg3[%c0_30, %83, %c8_31, %c0_32], %86 {strides = array<i32>} : memref<1x4x16x32xbf16, #tpu.memory_space<vmem>>, vector<1x1x8x32xbf16>,
    %c1_i32 = arith.constant 1 : i32
    %c0_33 = arith.constant 0 : index
    %87 = arith.index_cast %c1_i32 : i32 to index
    %c0_34 = arith.constant 0 : index
    %c0_35 = arith.constant 0 : index
    %88 = vector.load %arg1[%c0_33, %87, %c0_34, %c0_35] : memref<1x4x16x128xbf16, #tpu.memory_space<vmem>>, vector<1x1x8x128xbf16>
    %89 = vector.shape_cast %88 : vector<1x1x8x128xbf16> to vector<8x128xbf16>
    %90 = arith.extf %89 : vector<8x128xbf16> to vector<8x128xf32>
    %91 = arith.truncf %44 : vector<8x32xf32> to vector<8x32xbf16>
    %cst_36 = arith.constant dense<0.000000e+00> : vector<8x128xf32>
    %92 = tpu.matmul %91, %4, %cst_36 {dimension_numbers = #tpu.dot_dimension_numbers<[1], [0], [0], [1], [0, 0, 1, 1], [], []>} : vector<8x32xbf16>, vector<32x128xbf16>, vector<8x128xf32> -> vector<8x128xf32>
    %93 = arith.addf %90, %92 : vector<8x128xf32>
    %94 = vector.extract_strided_slice %93 {offsets = [0, 0], sizes = [8, 32], strides = [1, 1]} : vector<8x128xf32> to vector<8x32xf32>
    %95 = arith.negf %94 : vector<8x32xf32>
    %96 = math.exp %95 : vector<8x32xf32>
    %cst_37 = arith.constant 1.000000e+00 : f32
    %97 = vector.broadcast %cst_37 : f32 to vector<8x32xf32>
    %98 = arith.addf %97, %96 : vector<8x32xf32>
    %99 = arith.divf %97, %98 : vector<8x32xf32>
    %100 = vector.extract_strided_slice %93 {offsets = [0, 32], sizes = [8, 32], strides = [1, 1]} : vector<8x128xf32> to vector<8x32xf32>
    %101 = arith.negf %100 : vector<8x32xf32>
    %102 = math.exp %101 : vector<8x32xf32>
    %cst_38 = arith.constant 1.000000e+00 : f32
    %103 = vector.broadcast %cst_38 : f32 to vector<8x32xf32>
    %104 = arith.addf %103, %102 : vector<8x32xf32>
    %105 = arith.divf %103, %104 : vector<8x32xf32>
    %106 = vector.extract_strided_slice %93 {offsets = [0, 64], sizes = [8, 32], strides = [1, 1]} : vector<8x128xf32> to vector<8x32xf32>
    %107 = math.tanh %106 : vector<8x32xf32>
    %108 = vector.extract_strided_slice %93 {offsets = [0, 96], sizes = [8, 32], strides = [1, 1]} : vector<8x128xf32> to vector<8x32xf32>
    %109 = arith.negf %108 : vector<8x32xf32>
    %110 = math.exp %109 : vector<8x32xf32>
    %cst_39 = arith.constant 1.000000e+00 : f32
    %111 = vector.broadcast %cst_39 : f32 to vector<8x32xf32>
    %112 = arith.addf %111, %110 : vector<8x32xf32>
    %113 = arith.divf %111, %112 : vector<8x32xf32>
    %114 = arith.mulf %105, %42 : vector<8x32xf32>
    %115 = arith.mulf %99, %107 : vector<8x32xf32>
    %116 = arith.addf %114, %115 : vector<8x32xf32>
    %117 = math.tanh %116 : vector<8x32xf32>
    %118 = arith.mulf %113, %117 : vector<8x32xf32>
    %119 = arith.truncf %118 : vector<8x32xf32> to vector<8x32xbf16>
    %c0_40 = arith.constant 0 : index
    %120 = arith.index_cast %c1_i32 : i32 to index
    %c0_41 = arith.constant 0 : index
    %c0_42 = arith.constant 0 : index
    %121 = vector.load %arg3[%c0_40, %120, %c0_41, %c0_42] : memref<1x4x16x32xbf16, #tpu.memory_space<vmem>>, vector<1x1x8x32xbf16>
    %122 = vector.shape_cast %121 : vector<1x1x8x32xbf16> to vector<8x32xbf16>
    %123 = vector.shape_cast %119 : vector<8x32xbf16> to vector<1x1x8x32xbf16>
    tpu.vector_store %arg3[%c0_40, %120, %c0_41, %c0_42], %123 {strides = array<i32>} : memref<1x4x16x32xbf16, #tpu.memory_space<vmem>>, vector<1x1x8x32xbf16>,
    %c0_43 = arith.constant 0 : index
    %124 = arith.index_cast %c1_i32 : i32 to index
    %c8_44 = arith.constant 8 : index
    %c0_45 = arith.constant 0 : index
    %125 = vector.load %arg1[%c0_43, %124, %c8_44, %c0_45] : memref<1x4x16x128xbf16, #tpu.memory_space<vmem>>, vector<1x1x8x128xbf16>
    %126 = vector.shape_cast %125 : vector<1x1x8x128xbf16> to vector<8x128xbf16>
    %127 = arith.extf %126 : vector<8x128xbf16> to vector<8x128xf32>
    %128 = arith.truncf %81 : vector<8x32xf32> to vector<8x32xbf16>
    %cst_46 = arith.constant dense<0.000000e+00> : vector<8x128xf32>
    %129 = tpu.matmul %128, %4, %cst_46 {dimension_numbers = #tpu.dot_dimension_numbers<[1], [0], [0], [1], [0, 0, 1, 1], [], []>} : vector<8x32xbf16>, vector<32x128xbf16>, vector<8x128xf32> -> vector<8x128xf32>
    %130 = arith.addf %127, %129 : vector<8x128xf32>
    %131 = vector.extract_strided_slice %130 {offsets = [0, 0], sizes = [8, 32], strides = [1, 1]} : vector<8x128xf32> to vector<8x32xf32>
    %132 = arith.negf %131 : vector<8x32xf32>
    %133 = math.exp %132 : vector<8x32xf32>
    %cst_47 = arith.constant 1.000000e+00 : f32
    %134 = vector.broadcast %cst_47 : f32 to vector<8x32xf32>
    %135 = arith.addf %134, %133 : vector<8x32xf32>
    %136 = arith.divf %134, %135 : vector<8x32xf32>
    %137 = vector.extract_strided_slice %130 {offsets = [0, 32], sizes = [8, 32], strides = [1, 1]} : vector<8x128xf32> to vector<8x32xf32>
    %138 = arith.negf %137 : vector<8x32xf32>
    %139 = math.exp %138 : vector<8x32xf32>
    %cst_48 = arith.constant 1.000000e+00 : f32
    %140 = vector.broadcast %cst_48 : f32 to vector<8x32xf32>
    %141 = arith.addf %140, %139 : vector<8x32xf32>
    %142 = arith.divf %140, %141 : vector<8x32xf32>
    %143 = vector.extract_strided_slice %130 {offsets = [0, 64], sizes = [8, 32], strides = [1, 1]} : vector<8x128xf32> to vector<8x32xf32>
    %144 = math.tanh %143 : vector<8x32xf32>
    %145 = vector.extract_strided_slice %130 {offsets = [0, 96], sizes = [8, 32], strides = [1, 1]} : vector<8x128xf32> to vector<8x32xf32>
    %146 = arith.negf %145 : vector<8x32xf32>
    %147 = math.exp %146 : vector<8x32xf32>
    %cst_49 = arith.constant 1.000000e+00 : f32
    %148 = vector.broadcast %cst_49 : f32 to vector<8x32xf32>
    %149 = arith.addf %148, %147 : vector<8x32xf32>
    %150 = arith.divf %148, %149 : vector<8x32xf32>
    %151 = arith.mulf %142, %79 : vector<8x32xf32>
    %152 = arith.mulf %136, %144 : vector<8x32xf32>
    %153 = arith.addf %151, %152 : vector<8x32xf32>
    %154 = math.tanh %153 : vector<8x32xf32>
    %155 = arith.mulf %150, %154 : vector<8x32xf32>
    %156 = arith.truncf %155 : vector<8x32xf32> to vector<8x32xbf16>
    %c0_50 = arith.constant 0 : index
    %157 = arith.index_cast %c1_i32 : i32 to index
    %c8_51 = arith.constant 8 : index
    %c0_52 = arith.constant 0 : index
    %158 = vector.load %arg3[%c0_50, %157, %c8_51, %c0_52] : memref<1x4x16x32xbf16, #tpu.memory_space<vmem>>, vector<1x1x8x32xbf16>
    %159 = vector.shape_cast %158 : vector<1x1x8x32xbf16> to vector<8x32xbf16>
    %160 = vector.shape_cast %156 : vector<8x32xbf16> to vector<1x1x8x32xbf16>
    tpu.vector_store %arg3[%c0_50, %157, %c8_51, %c0_52], %160 {strides = array<i32>} : memref<1x4x16x32xbf16, #tpu.memory_space<vmem>>, vector<1x1x8x32xbf16>,
    %c2_i32 = arith.constant 2 : i32
    %c0_53 = arith.constant 0 : index
    %161 = arith.index_cast %c2_i32 : i32 to index
    %c0_54 = arith.constant 0 : index
    %c0_55 = arith.constant 0 : index
    %162 = vector.load %arg1[%c0_53, %161, %c0_54, %c0_55] : memref<1x4x16x128xbf16, #tpu.memory_space<vmem>>, vector<1x1x8x128xbf16>
    %163 = vector.shape_cast %162 : vector<1x1x8x128xbf16> to vector<8x128xbf16>
    %164 = arith.extf %163 : vector<8x128xbf16> to vector<8x128xf32>
    %165 = arith.truncf %118 : vector<8x32xf32> to vector<8x32xbf16>
    %cst_56 = arith.constant dense<0.000000e+00> : vector<8x128xf32>
    %166 = tpu.matmul %165, %4, %cst_56 {dimension_numbers = #tpu.dot_dimension_numbers<[1], [0], [0], [1], [0, 0, 1, 1], [], []>} : vector<8x32xbf16>, vector<32x128xbf16>, vector<8x128xf32> -> vector<8x128xf32>
    %167 = arith.addf %164, %166 : vector<8x128xf32>
    %168 = vector.extract_strided_slice %167 {offsets = [0, 0], sizes = [8, 32], strides = [1, 1]} : vector<8x128xf32> to vector<8x32xf32>
    %169 = arith.negf %168 : vector<8x32xf32>
    %170 = math.exp %169 : vector<8x32xf32>
    %cst_57 = arith.constant 1.000000e+00 : f32
    %171 = vector.broadcast %cst_57 : f32 to vector<8x32xf32>
    %172 = arith.addf %171, %170 : vector<8x32xf32>
    %173 = arith.divf %171, %172 : vector<8x32xf32>
    %174 = vector.extract_strided_slice %167 {offsets = [0, 32], sizes = [8, 32], strides = [1, 1]} : vector<8x128xf32> to vector<8x32xf32>
    %175 = arith.negf %174 : vector<8x32xf32>
    %176 = math.exp %175 : vector<8x32xf32>
    %cst_58 = arith.constant 1.000000e+00 : f32
    %177 = vector.broadcast %cst_58 : f32 to vector<8x32xf32>
    %178 = arith.addf %177, %176 : vector<8x32xf32>
    %179 = arith.divf %177, %178 : vector<8x32xf32>
    %180 = vector.extract_strided_slice %167 {offsets = [0, 64], sizes = [8, 32], strides = [1, 1]} : vector<8x128xf32> to vector<8x32xf32>
    %181 = math.tanh %180 : vector<8x32xf32>
    %182 = vector.extract_strided_slice %167 {offsets = [0, 96], sizes = [8, 32], strides = [1, 1]} : vector<8x128xf32> to vector<8x32xf32>
    %183 = arith.negf %182 : vector<8x32xf32>
    %184 = math.exp %183 : vector<8x32xf32>
    %cst_59 = arith.constant 1.000000e+00 : f32
    %185 = vector.broadcast %cst_59 : f32 to vector<8x32xf32>
    %186 = arith.addf %185, %184 : vector<8x32xf32>
    %187 = arith.divf %185, %186 : vector<8x32xf32>
    %188 = arith.mulf %179, %116 : vector<8x32xf32>
    %189 = arith.mulf %173, %181 : vector<8x32xf32>
    %190 = arith.addf %188, %189 : vector<8x32xf32>
    %191 = math.tanh %190 : vector<8x32xf32>
    %192 = arith.mulf %187, %191 : vector<8x32xf32>
    %193 = arith.truncf %192 : vector<8x32xf32> to vector<8x32xbf16>
    %c0_60 = arith.constant 0 : index
    %194 = arith.index_cast %c2_i32 : i32 to index
    %c0_61 = arith.constant 0 : index
    %c0_62 = arith.constant 0 : index
    %195 = vector.load %arg3[%c0_60, %194, %c0_61, %c0_62] : memref<1x4x16x32xbf16, #tpu.memory_space<vmem>>, vector<1x1x8x32xbf16>
    %196 = vector.shape_cast %195 : vector<1x1x8x32xbf16> to vector<8x32xbf16>
    %197 = vector.shape_cast %193 : vector<8x32xbf16> to vector<1x1x8x32xbf16>
    tpu.vector_store %arg3[%c0_60, %194, %c0_61, %c0_62], %197 {strides = array<i32>} : memref<1x4x16x32xbf16, #tpu.memory_space<vmem>>, vector<1x1x8x32xbf16>,
    %c0_63 = arith.constant 0 : index
    %198 = arith.index_cast %c2_i32 : i32 to index
    %c8_64 = arith.constant 8 : index
    %c0_65 = arith.constant 0 : index
    %199 = vector.load %arg1[%c0_63, %198, %c8_64, %c0_65] : memref<1x4x16x128xbf16, #tpu.memory_space<vmem>>, vector<1x1x8x128xbf16>
    %200 = vector.shape_cast %199 : vector<1x1x8x128xbf16> to vector<8x128xbf16>
    %201 = arith.extf %200 : vector<8x128xbf16> to vector<8x128xf32>
    %202 = arith.truncf %155 : vector<8x32xf32> to vector<8x32xbf16>
    %cst_66 = arith.constant dense<0.000000e+00> : vector<8x128xf32>
    %203 = tpu.matmul %202, %4, %cst_66 {dimension_numbers = #tpu.dot_dimension_numbers<[1], [0], [0], [1], [0, 0, 1, 1], [], []>} : vector<8x32xbf16>, vector<32x128xbf16>, vector<8x128xf32> -> vector<8x128xf32>
    %204 = arith.addf %201, %203 : vector<8x128xf32>
    %205 = vector.extract_strided_slice %204 {offsets = [0, 0], sizes = [8, 32], strides = [1, 1]} : vector<8x128xf32> to vector<8x32xf32>
    %206 = arith.negf %205 : vector<8x32xf32>
    %207 = math.exp %206 : vector<8x32xf32>
    %cst_67 = arith.constant 1.000000e+00 : f32
    %208 = vector.broadcast %cst_67 : f32 to vector<8x32xf32>
    %209 = arith.addf %208, %207 : vector<8x32xf32>
    %210 = arith.divf %208, %209 : vector<8x32xf32>
    %211 = vector.extract_strided_slice %204 {offsets = [0, 32], sizes = [8, 32], strides = [1, 1]} : vector<8x128xf32> to vector<8x32xf32>
    %212 = arith.negf %211 : vector<8x32xf32>
    %213 = math.exp %212 : vector<8x32xf32>
    %cst_68 = arith.constant 1.000000e+00 : f32
    %214 = vector.broadcast %cst_68 : f32 to vector<8x32xf32>
    %215 = arith.addf %214, %213 : vector<8x32xf32>
    %216 = arith.divf %214, %215 : vector<8x32xf32>
    %217 = vector.extract_strided_slice %204 {offsets = [0, 64], sizes = [8, 32], strides = [1, 1]} : vector<8x128xf32> to vector<8x32xf32>
    %218 = math.tanh %217 : vector<8x32xf32>
    %219 = vector.extract_strided_slice %204 {offsets = [0, 96], sizes = [8, 32], strides = [1, 1]} : vector<8x128xf32> to vector<8x32xf32>
    %220 = arith.negf %219 : vector<8x32xf32>
    %221 = math.exp %220 : vector<8x32xf32>
    %cst_69 = arith.constant 1.000000e+00 : f32
    %222 = vector.broadcast %cst_69 : f32 to vector<8x32xf32>
    %223 = arith.addf %222, %221 : vector<8x32xf32>
    %224 = arith.divf %222, %223 : vector<8x32xf32>
    %225 = arith.mulf %216, %153 : vector<8x32xf32>
    %226 = arith.mulf %210, %218 : vector<8x32xf32>
    %227 = arith.addf %225, %226 : vector<8x32xf32>
    %228 = math.tanh %227 : vector<8x32xf32>
    %229 = arith.mulf %224, %228 : vector<8x32xf32>
    %230 = arith.truncf %229 : vector<8x32xf32> to vector<8x32xbf16>
    %c0_70 = arith.constant 0 : index
    %231 = arith.index_cast %c2_i32 : i32 to index
    %c8_71 = arith.constant 8 : index
    %c0_72 = arith.constant 0 : index
    %232 = vector.load %arg3[%c0_70, %231, %c8_71, %c0_72] : memref<1x4x16x32xbf16, #tpu.memory_space<vmem>>, vector<1x1x8x32xbf16>
    %233 = vector.shape_cast %232 : vector<1x1x8x32xbf16> to vector<8x32xbf16>
    %234 = vector.shape_cast %230 : vector<8x32xbf16> to vector<1x1x8x32xbf16>
    tpu.vector_store %arg3[%c0_70, %231, %c8_71, %c0_72], %234 {strides = array<i32>} : memref<1x4x16x32xbf16, #tpu.memory_space<vmem>>, vector<1x1x8x32xbf16>,
    %c3_i32 = arith.constant 3 : i32
    %c0_73 = arith.constant 0 : index
    %235 = arith.index_cast %c3_i32 : i32 to index
    %c0_74 = arith.constant 0 : index
    %c0_75 = arith.constant 0 : index
    %236 = vector.load %arg1[%c0_73, %235, %c0_74, %c0_75] : memref<1x4x16x128xbf16, #tpu.memory_space<vmem>>, vector<1x1x8x128xbf16>
    %237 = vector.shape_cast %236 : vector<1x1x8x128xbf16> to vector<8x128xbf16>
    %238 = arith.extf %237 : vector<8x128xbf16> to vector<8x128xf32>
    %239 = arith.truncf %192 : vector<8x32xf32> to vector<8x32xbf16>
    %cst_76 = arith.constant dense<0.000000e+00> : vector<8x128xf32>
    %240 = tpu.matmul %239, %4, %cst_76 {dimension_numbers = #tpu.dot_dimension_numbers<[1], [0], [0], [1], [0, 0, 1, 1], [], []>} : vector<8x32xbf16>, vector<32x128xbf16>, vector<8x128xf32> -> vector<8x128xf32>
    %241 = arith.addf %238, %240 : vector<8x128xf32>
    %242 = vector.extract_strided_slice %241 {offsets = [0, 0], sizes = [8, 32], strides = [1, 1]} : vector<8x128xf32> to vector<8x32xf32>
    %243 = arith.negf %242 : vector<8x32xf32>
    %244 = math.exp %243 : vector<8x32xf32>
    %cst_77 = arith.constant 1.000000e+00 : f32
    %245 = vector.broadcast %cst_77 : f32 to vector<8x32xf32>
    %246 = arith.addf %245, %244 : vector<8x32xf32>
    %247 = arith.divf %245, %246 : vector<8x32xf32>
    %248 = vector.extract_strided_slice %241 {offsets = [0, 32], sizes = [8, 32], strides = [1, 1]} : vector<8x128xf32> to vector<8x32xf32>
    %249 = arith.negf %248 : vector<8x32xf32>
    %250 = math.exp %249 : vector<8x32xf32>
    %cst_78 = arith.constant 1.000000e+00 : f32
    %251 = vector.broadcast %cst_78 : f32 to vector<8x32xf32>
    %252 = arith.addf %251, %250 : vector<8x32xf32>
    %253 = arith.divf %251, %252 : vector<8x32xf32>
    %254 = vector.extract_strided_slice %241 {offsets = [0, 64], sizes = [8, 32], strides = [1, 1]} : vector<8x128xf32> to vector<8x32xf32>
    %255 = math.tanh %254 : vector<8x32xf32>
    %256 = vector.extract_strided_slice %241 {offsets = [0, 96], sizes = [8, 32], strides = [1, 1]} : vector<8x128xf32> to vector<8x32xf32>
    %257 = arith.negf %256 : vector<8x32xf32>
    %258 = math.exp %257 : vector<8x32xf32>
    %cst_79 = arith.constant 1.000000e+00 : f32
    %259 = vector.broadcast %cst_79 : f32 to vector<8x32xf32>
    %260 = arith.addf %259, %258 : vector<8x32xf32>
    %261 = arith.divf %259, %260 : vector<8x32xf32>
    %262 = arith.mulf %253, %190 : vector<8x32xf32>
    %263 = arith.mulf %247, %255 : vector<8x32xf32>
    %264 = arith.addf %262, %263 : vector<8x32xf32>
    %265 = math.tanh %264 : vector<8x32xf32>
    %266 = arith.mulf %261, %265 : vector<8x32xf32>
    %267 = arith.truncf %266 : vector<8x32xf32> to vector<8x32xbf16>
    %c0_80 = arith.constant 0 : index
    %268 = arith.index_cast %c3_i32 : i32 to index
    %c0_81 = arith.constant 0 : index
    %c0_82 = arith.constant 0 : index
    %269 = vector.load %arg3[%c0_80, %268, %c0_81, %c0_82] : memref<1x4x16x32xbf16, #tpu.memory_space<vmem>>, vector<1x1x8x32xbf16>
    %270 = vector.shape_cast %269 : vector<1x1x8x32xbf16> to vector<8x32xbf16>
    %271 = vector.shape_cast %267 : vector<8x32xbf16> to vector<1x1x8x32xbf16>
    tpu.vector_store %arg3[%c0_80, %268, %c0_81, %c0_82], %271 {strides = array<i32>} : memref<1x4x16x32xbf16, #tpu.memory_space<vmem>>, vector<1x1x8x32xbf16>,
    %c0_83 = arith.constant 0 : index
    %272 = arith.index_cast %c3_i32 : i32 to index
    %c8_84 = arith.constant 8 : index
    %c0_85 = arith.constant 0 : index
    %273 = vector.load %arg1[%c0_83, %272, %c8_84, %c0_85] : memref<1x4x16x128xbf16, #tpu.memory_space<vmem>>, vector<1x1x8x128xbf16>
    %274 = vector.shape_cast %273 : vector<1x1x8x128xbf16> to vector<8x128xbf16>
    %275 = arith.extf %274 : vector<8x128xbf16> to vector<8x128xf32>
    %276 = arith.truncf %229 : vector<8x32xf32> to vector<8x32xbf16>
    %cst_86 = arith.constant dense<0.000000e+00> : vector<8x128xf32>
    %277 = tpu.matmul %276, %4, %cst_86 {dimension_numbers = #tpu.dot_dimension_numbers<[1], [0], [0], [1], [0, 0, 1, 1], [], []>} : vector<8x32xbf16>, vector<32x128xbf16>, vector<8x128xf32> -> vector<8x128xf32>
    %278 = arith.addf %275, %277 : vector<8x128xf32>
    %279 = vector.extract_strided_slice %278 {offsets = [0, 0], sizes = [8, 32], strides = [1, 1]} : vector<8x128xf32> to vector<8x32xf32>
    %280 = arith.negf %279 : vector<8x32xf32>
    %281 = math.exp %280 : vector<8x32xf32>
    %cst_87 = arith.constant 1.000000e+00 : f32
    %282 = vector.broadcast %cst_87 : f32 to vector<8x32xf32>
    %283 = arith.addf %282, %281 : vector<8x32xf32>
    %284 = arith.divf %282, %283 : vector<8x32xf32>
    %285 = vector.extract_strided_slice %278 {offsets = [0, 32], sizes = [8, 32], strides = [1, 1]} : vector<8x128xf32> to vector<8x32xf32>
    %286 = arith.negf %285 : vector<8x32xf32>
    %287 = math.exp %286 : vector<8x32xf32>
    %cst_88 = arith.constant 1.000000e+00 : f32
    %288 = vector.broadcast %cst_88 : f32 to vector<8x32xf32>
    %289 = arith.addf %288, %287 : vector<8x32xf32>
    %290 = arith.divf %288, %289 : vector<8x32xf32>
    %291 = vector.extract_strided_slice %278 {offsets = [0, 64], sizes = [8, 32], strides = [1, 1]} : vector<8x128xf32> to vector<8x32xf32>
    %292 = math.tanh %291 : vector<8x32xf32>
    %293 = vector.extract_strided_slice %278 {offsets = [0, 96], sizes = [8, 32], strides = [1, 1]} : vector<8x128xf32> to vector<8x32xf32>
    %294 = arith.negf %293 : vector<8x32xf32>
    %295 = math.exp %294 : vector<8x32xf32>
    %cst_89 = arith.constant 1.000000e+00 : f32
    %296 = vector.broadcast %cst_89 : f32 to vector<8x32xf32>
    %297 = arith.addf %296, %295 : vector<8x32xf32>
    %298 = arith.divf %296, %297 : vector<8x32xf32>
    %299 = arith.mulf %290, %227 : vector<8x32xf32>
    %300 = arith.mulf %284, %292 : vector<8x32xf32>
    %301 = arith.addf %299, %300 : vector<8x32xf32>
    %302 = math.tanh %301 : vector<8x32xf32>
    %303 = arith.mulf %298, %302 : vector<8x32xf32>
    %304 = arith.truncf %303 : vector<8x32xf32> to vector<8x32xbf16>
    %c0_90 = arith.constant 0 : index
    %305 = arith.index_cast %c3_i32 : i32 to index
    %c8_91 = arith.constant 8 : index
    %c0_92 = arith.constant 0 : index
    %306 = vector.load %arg3[%c0_90, %305, %c8_91, %c0_92] : memref<1x4x16x32xbf16, #tpu.memory_space<vmem>>, vector<1x1x8x32xbf16>
    %307 = vector.shape_cast %306 : vector<1x1x8x32xbf16> to vector<8x32xbf16>
    %308 = vector.shape_cast %304 : vector<8x32xbf16> to vector<1x1x8x32xbf16>
    tpu.vector_store %arg3[%c0_90, %305, %c8_91, %c0_92], %308 {strides = array<i32>} : memref<1x4x16x32xbf16, #tpu.memory_space<vmem>>, vector<1x1x8x32xbf16>,
    %c4_i32 = arith.constant 4 : i32
    %c0_93 = arith.constant 0 : index
    %c0_94 = arith.constant 0 : index
    %c0_95 = arith.constant 0 : index
    %309 = vector.load %arg6[%c0_93, %c0_94, %c0_95] : memref<2x8x32xf32, #tpu.memory_space<vmem>>, vector<1x8x32xf32>
    %310 = vector.shape_cast %309 : vector<1x8x32xf32> to vector<8x32xf32>
    %311 = vector.shape_cast %266 : vector<8x32xf32> to vector<1x8x32xf32>
    tpu.vector_store %arg6[%c0_93, %c0_94, %c0_95], %311 {strides = array<i32>} : memref<2x8x32xf32, #tpu.memory_space<vmem>>, vector<1x8x32xf32>,
    %c0_96 = arith.constant 0 : index
    %c0_97 = arith.constant 0 : index
    %c0_98 = arith.constant 0 : index
    %312 = vector.load %arg7[%c0_96, %c0_97, %c0_98] : memref<2x8x32xf32, #tpu.memory_space<vmem>>, vector<1x8x32xf32>
    %313 = vector.shape_cast %312 : vector<1x8x32xf32> to vector<8x32xf32>
    %314 = vector.shape_cast %264 : vector<8x32xf32> to vector<1x8x32xf32>
    tpu.vector_store %arg7[%c0_96, %c0_97, %c0_98], %314 {strides = array<i32>} : memref<2x8x32xf32, #tpu.memory_space<vmem>>, vector<1x8x32xf32>,
    %c1_99 = arith.constant 1 : index
    %c0_100 = arith.constant 0 : index
    %c0_101 = arith.constant 0 : index
    %315 = vector.load %arg6[%c1_99, %c0_100, %c0_101] : memref<2x8x32xf32, #tpu.memory_space<vmem>>, vector<1x8x32xf32>
    %316 = vector.shape_cast %315 : vector<1x8x32xf32> to vector<8x32xf32>
    %317 = vector.shape_cast %303 : vector<8x32xf32> to vector<1x8x32xf32>
    tpu.vector_store %arg6[%c1_99, %c0_100, %c0_101], %317 {strides = array<i32>} : memref<2x8x32xf32, #tpu.memory_space<vmem>>, vector<1x8x32xf32>,
    %c1_102 = arith.constant 1 : index
    %c0_103 = arith.constant 0 : index
    %c0_104 = arith.constant 0 : index
    %318 = vector.load %arg7[%c1_102, %c0_103, %c0_104] : memref<2x8x32xf32, #tpu.memory_space<vmem>>, vector<1x8x32xf32>
    %319 = vector.shape_cast %318 : vector<1x8x32xf32> to vector<8x32xf32>
    %320 = vector.shape_cast %301 : vector<8x32xf32> to vector<1x8x32xf32>
    tpu.vector_store %arg7[%c1_102, %c0_103, %c0_104], %320 {strides = array<i32>} : memref<2x8x32xf32, #tpu.memory_space<vmem>>, vector<1x8x32xf32>,
    return
  }
  func.func @transform_0(%arg0: i32) -> (i32, i32, i32, i32) {
    %c0_i32 = arith.constant 0 : i32
    %c0_i32_0 = arith.constant 0 : i32
    %c0_i32_1 = arith.constant 0 : i32
    %c0_i32_2 = arith.constant 0 : i32
    return %c0_i32, %arg0, %c0_i32_0, %c0_i32_1 : i32, i32, i32, i32
  }
  func.func @transform_2(%arg0: i32) -> (i32, i32, i32, i32) {
    %c0_i32 = arith.constant 0 : i32
    %c0_i32_0 = arith.constant 0 : i32
    %c0_i32_1 = arith.constant 0 : i32
    %c0_i32_2 = arith.constant 0 : i32
    return %c0_i32, %arg0, %c0_i32_0, %c0_i32_1 : i32, i32, i32, i32
  }
}

module attributes {stable_mosaic.version = 11 : i64} {
  func.func @kernel(%arg0: i32, %arg1: memref<1x4x16x128xbf16, #tpu.memory_space<vmem>>, %arg2: memref<1x32x128xbf16, #tpu.memory_space<any>>, %arg3: memref<1x4x16x32xbf16, #tpu.memory_space<vmem>>, %arg4: memref<1x4x16x32xbf16, #tpu.memory_space<vmem>>, %arg5: memref<1x32x128xbf16, #tpu.memory_space<vmem>>, %arg6: memref<!tpu.dma_semaphore, #tpu.memory_space<semaphore_mem>>, %arg7: memref<2x8x32xf32, #tpu.memory_space<vmem>>, %arg8: memref<2x8x32xf32, #tpu.memory_space<vmem>>) attributes {dimension_semantics = [#tpu.dimension_semantics<arbitrary>], iteration_bounds = array<i64: 2>, scalar_prefetch = 0 : i64, scratch_operands = 4 : i64, tpu.core_type = #tpu.core_type<tc>, window_params = [{transform_indices = @transform_0, window_bounds = array<i64: 1, 4, 16, 128>}, {}, {transform_indices = @transform_2, window_bounds = array<i64: 1, 4, 16, 32>}, {transform_indices = @transform_3, window_bounds = array<i64: 1, 4, 16, 32>}]} {
    %c0_i32 = arith.constant 0 : i32
    %0 = arith.cmpi eq, %arg0, %c0_i32 : i32
    %1 = arith.extui %0 : i1 to i32
    %c0_i32_0 = arith.constant 0 : i32
    %2 = arith.cmpi ne, %1, %c0_i32_0 : i32
    scf.if %2 {
      tpu.enqueue_dma source(%arg2 : memref<1x32x128xbf16, #tpu.memory_space<any>>) target(%arg5 : memref<1x32x128xbf16, #tpu.memory_space<vmem>>) target_semaphore(%arg6 : memref<!tpu.dma_semaphore, #tpu.memory_space<semaphore_mem>>)
      tpu.wait_dma2 semaphore(%arg6 : memref<!tpu.dma_semaphore, #tpu.memory_space<semaphore_mem>>) src(%arg2 : memref<1x32x128xbf16, #tpu.memory_space<any>>) dst(%arg5 : memref<1x32x128xbf16, #tpu.memory_space<vmem>>)
      %cst_129 = arith.constant 0.000000e+00 : f32
      %361 = vector.broadcast %cst_129 : f32 to vector<2x8x32xf32>
      %c0_130 = arith.constant 0 : index
      %c0_131 = arith.constant 0 : index
      %c0_132 = arith.constant 0 : index
      %362 = vector.load %arg7[%c0_130, %c0_131, %c0_132] : memref<2x8x32xf32, #tpu.memory_space<vmem>>, vector<2x8x32xf32>
      tpu.vector_store %arg7[%c0_130, %c0_131, %c0_132], %361 {strides = array<i32>} : memref<2x8x32xf32, #tpu.memory_space<vmem>>, vector<2x8x32xf32>,
      %cst_133 = arith.constant 0.000000e+00 : f32
      %363 = vector.broadcast %cst_133 : f32 to vector<2x8x32xf32>
      %c0_134 = arith.constant 0 : index
      %c0_135 = arith.constant 0 : index
      %c0_136 = arith.constant 0 : index
      %364 = vector.load %arg8[%c0_134, %c0_135, %c0_136] : memref<2x8x32xf32, #tpu.memory_space<vmem>>, vector<2x8x32xf32>
      tpu.vector_store %arg8[%c0_134, %c0_135, %c0_136], %363 {strides = array<i32>} : memref<2x8x32xf32, #tpu.memory_space<vmem>>, vector<2x8x32xf32>,
    } else {
    }
    %c0 = arith.constant 0 : index
    %c0_1 = arith.constant 0 : index
    %c0_2 = arith.constant 0 : index
    %3 = vector.load %arg5[%c0, %c0_1, %c0_2] : memref<1x32x128xbf16, #tpu.memory_space<vmem>>, vector<1x32x128xbf16>
    %4 = vector.shape_cast %3 : vector<1x32x128xbf16> to vector<32x128xbf16>
    %c0_3 = arith.constant 0 : index
    %c0_4 = arith.constant 0 : index
    %c0_5 = arith.constant 0 : index
    %5 = vector.load %arg7[%c0_3, %c0_4, %c0_5] : memref<2x8x32xf32, #tpu.memory_space<vmem>>, vector<1x8x32xf32>
    %6 = vector.shape_cast %5 : vector<1x8x32xf32> to vector<8x32xf32>
    %c0_6 = arith.constant 0 : index
    %c0_7 = arith.constant 0 : index
    %c0_8 = arith.constant 0 : index
    %7 = vector.load %arg8[%c0_6, %c0_7, %c0_8] : memref<2x8x32xf32, #tpu.memory_space<vmem>>, vector<1x8x32xf32>
    %8 = vector.shape_cast %7 : vector<1x8x32xf32> to vector<8x32xf32>
    %c1 = arith.constant 1 : index
    %c0_9 = arith.constant 0 : index
    %c0_10 = arith.constant 0 : index
    %9 = vector.load %arg7[%c1, %c0_9, %c0_10] : memref<2x8x32xf32, #tpu.memory_space<vmem>>, vector<1x8x32xf32>
    %10 = vector.shape_cast %9 : vector<1x8x32xf32> to vector<8x32xf32>
    %c1_11 = arith.constant 1 : index
    %c0_12 = arith.constant 0 : index
    %c0_13 = arith.constant 0 : index
    %11 = vector.load %arg8[%c1_11, %c0_12, %c0_13] : memref<2x8x32xf32, #tpu.memory_space<vmem>>, vector<1x8x32xf32>
    %12 = vector.shape_cast %11 : vector<1x8x32xf32> to vector<8x32xf32>
    %c0_i32_14 = arith.constant 0 : i32
    %c0_15 = arith.constant 0 : index
    %13 = arith.index_cast %c0_i32_14 : i32 to index
    %c0_16 = arith.constant 0 : index
    %c0_17 = arith.constant 0 : index
    %14 = vector.load %arg1[%c0_15, %13, %c0_16, %c0_17] : memref<1x4x16x128xbf16, #tpu.memory_space<vmem>>, vector<1x1x8x128xbf16>
    %15 = vector.shape_cast %14 : vector<1x1x8x128xbf16> to vector<8x128xbf16>
    %16 = arith.extf %15 : vector<8x128xbf16> to vector<8x128xf32>
    %17 = arith.truncf %6 : vector<8x32xf32> to vector<8x32xbf16>
    %cst = arith.constant dense<0.000000e+00> : vector<8x128xf32>
    %18 = tpu.matmul %17, %4, %cst {dimension_numbers = #tpu.dot_dimension_numbers<[1], [0], [0], [1], [0, 0, 1, 1], [], []>} : vector<8x32xbf16>, vector<32x128xbf16>, vector<8x128xf32> -> vector<8x128xf32>
    %19 = arith.addf %16, %18 : vector<8x128xf32>
    %20 = vector.extract_strided_slice %19 {offsets = [0, 0], sizes = [8, 32], strides = [1, 1]} : vector<8x128xf32> to vector<8x32xf32>
    %21 = arith.negf %20 : vector<8x32xf32>
    %22 = math.exp %21 : vector<8x32xf32>
    %cst_18 = arith.constant 1.000000e+00 : f32
    %23 = vector.broadcast %cst_18 : f32 to vector<8x32xf32>
    %24 = arith.addf %23, %22 : vector<8x32xf32>
    %25 = arith.divf %23, %24 : vector<8x32xf32>
    %26 = vector.extract_strided_slice %19 {offsets = [0, 32], sizes = [8, 32], strides = [1, 1]} : vector<8x128xf32> to vector<8x32xf32>
    %27 = arith.negf %26 : vector<8x32xf32>
    %28 = math.exp %27 : vector<8x32xf32>
    %cst_19 = arith.constant 1.000000e+00 : f32
    %29 = vector.broadcast %cst_19 : f32 to vector<8x32xf32>
    %30 = arith.addf %29, %28 : vector<8x32xf32>
    %31 = arith.divf %29, %30 : vector<8x32xf32>
    %32 = vector.extract_strided_slice %19 {offsets = [0, 64], sizes = [8, 32], strides = [1, 1]} : vector<8x128xf32> to vector<8x32xf32>
    %33 = math.tanh %32 : vector<8x32xf32>
    %34 = vector.extract_strided_slice %19 {offsets = [0, 96], sizes = [8, 32], strides = [1, 1]} : vector<8x128xf32> to vector<8x32xf32>
    %35 = arith.negf %34 : vector<8x32xf32>
    %36 = math.exp %35 : vector<8x32xf32>
    %cst_20 = arith.constant 1.000000e+00 : f32
    %37 = vector.broadcast %cst_20 : f32 to vector<8x32xf32>
    %38 = arith.addf %37, %36 : vector<8x32xf32>
    %39 = arith.divf %37, %38 : vector<8x32xf32>
    %40 = arith.mulf %31, %8 : vector<8x32xf32>
    %41 = arith.mulf %25, %33 : vector<8x32xf32>
    %42 = arith.addf %40, %41 : vector<8x32xf32>
    %43 = math.tanh %42 : vector<8x32xf32>
    %44 = arith.mulf %39, %43 : vector<8x32xf32>
    %c0_21 = arith.constant 0 : index
    %45 = arith.index_cast %c0_i32_14 : i32 to index
    %c0_22 = arith.constant 0 : index
    %c0_23 = arith.constant 0 : index
    %46 = vector.load %arg3[%c0_21, %45, %c0_22, %c0_23] : memref<1x4x16x32xbf16, #tpu.memory_space<vmem>>, vector<1x1x8x32xbf16>
    %47 = vector.shape_cast %46 : vector<1x1x8x32xbf16> to vector<8x32xbf16>
    %48 = arith.extf %47 : vector<8x32xbf16> to vector<8x32xf32>
    %49 = arith.addf %44, %48 : vector<8x32xf32>
    %50 = arith.truncf %49 : vector<8x32xf32> to vector<8x32xbf16>
    %c0_24 = arith.constant 0 : index
    %51 = arith.index_cast %c0_i32_14 : i32 to index
    %c0_25 = arith.constant 0 : index
    %c0_26 = arith.constant 0 : index
    %52 = vector.load %arg4[%c0_24, %51, %c0_25, %c0_26] : memref<1x4x16x32xbf16, #tpu.memory_space<vmem>>, vector<1x1x8x32xbf16>
    %53 = vector.shape_cast %52 : vector<1x1x8x32xbf16> to vector<8x32xbf16>
    %54 = vector.shape_cast %50 : vector<8x32xbf16> to vector<1x1x8x32xbf16>
    tpu.vector_store %arg4[%c0_24, %51, %c0_25, %c0_26], %54 {strides = array<i32>} : memref<1x4x16x32xbf16, #tpu.memory_space<vmem>>, vector<1x1x8x32xbf16>,
    %c0_27 = arith.constant 0 : index
    %55 = arith.index_cast %c0_i32_14 : i32 to index
    %c8 = arith.constant 8 : index
    %c0_28 = arith.constant 0 : index
    %56 = vector.load %arg1[%c0_27, %55, %c8, %c0_28] : memref<1x4x16x128xbf16, #tpu.memory_space<vmem>>, vector<1x1x8x128xbf16>
    %57 = vector.shape_cast %56 : vector<1x1x8x128xbf16> to vector<8x128xbf16>
    %58 = arith.extf %57 : vector<8x128xbf16> to vector<8x128xf32>
    %59 = arith.truncf %10 : vector<8x32xf32> to vector<8x32xbf16>
    %cst_29 = arith.constant dense<0.000000e+00> : vector<8x128xf32>
    %60 = tpu.matmul %59, %4, %cst_29 {dimension_numbers = #tpu.dot_dimension_numbers<[1], [0], [0], [1], [0, 0, 1, 1], [], []>} : vector<8x32xbf16>, vector<32x128xbf16>, vector<8x128xf32> -> vector<8x128xf32>
    %61 = arith.addf %58, %60 : vector<8x128xf32>
    %62 = vector.extract_strided_slice %61 {offsets = [0, 0], sizes = [8, 32], strides = [1, 1]} : vector<8x128xf32> to vector<8x32xf32>
    %63 = arith.negf %62 : vector<8x32xf32>
    %64 = math.exp %63 : vector<8x32xf32>
    %cst_30 = arith.constant 1.000000e+00 : f32
    %65 = vector.broadcast %cst_30 : f32 to vector<8x32xf32>
    %66 = arith.addf %65, %64 : vector<8x32xf32>
    %67 = arith.divf %65, %66 : vector<8x32xf32>
    %68 = vector.extract_strided_slice %61 {offsets = [0, 32], sizes = [8, 32], strides = [1, 1]} : vector<8x128xf32> to vector<8x32xf32>
    %69 = arith.negf %68 : vector<8x32xf32>
    %70 = math.exp %69 : vector<8x32xf32>
    %cst_31 = arith.constant 1.000000e+00 : f32
    %71 = vector.broadcast %cst_31 : f32 to vector<8x32xf32>
    %72 = arith.addf %71, %70 : vector<8x32xf32>
    %73 = arith.divf %71, %72 : vector<8x32xf32>
    %74 = vector.extract_strided_slice %61 {offsets = [0, 64], sizes = [8, 32], strides = [1, 1]} : vector<8x128xf32> to vector<8x32xf32>
    %75 = math.tanh %74 : vector<8x32xf32>
    %76 = vector.extract_strided_slice %61 {offsets = [0, 96], sizes = [8, 32], strides = [1, 1]} : vector<8x128xf32> to vector<8x32xf32>
    %77 = arith.negf %76 : vector<8x32xf32>
    %78 = math.exp %77 : vector<8x32xf32>
    %cst_32 = arith.constant 1.000000e+00 : f32
    %79 = vector.broadcast %cst_32 : f32 to vector<8x32xf32>
    %80 = arith.addf %79, %78 : vector<8x32xf32>
    %81 = arith.divf %79, %80 : vector<8x32xf32>
    %82 = arith.mulf %73, %12 : vector<8x32xf32>
    %83 = arith.mulf %67, %75 : vector<8x32xf32>
    %84 = arith.addf %82, %83 : vector<8x32xf32>
    %85 = math.tanh %84 : vector<8x32xf32>
    %86 = arith.mulf %81, %85 : vector<8x32xf32>
    %c0_33 = arith.constant 0 : index
    %87 = arith.index_cast %c0_i32_14 : i32 to index
    %c8_34 = arith.constant 8 : index
    %c0_35 = arith.constant 0 : index
    %88 = vector.load %arg3[%c0_33, %87, %c8_34, %c0_35] : memref<1x4x16x32xbf16, #tpu.memory_space<vmem>>, vector<1x1x8x32xbf16>
    %89 = vector.shape_cast %88 : vector<1x1x8x32xbf16> to vector<8x32xbf16>
    %90 = arith.extf %89 : vector<8x32xbf16> to vector<8x32xf32>
    %91 = arith.addf %86, %90 : vector<8x32xf32>
    %92 = arith.truncf %91 : vector<8x32xf32> to vector<8x32xbf16>
    %c0_36 = arith.constant 0 : index
    %93 = arith.index_cast %c0_i32_14 : i32 to index
    %c8_37 = arith.constant 8 : index
    %c0_38 = arith.constant 0 : index
    %94 = vector.load %arg4[%c0_36, %93, %c8_37, %c0_38] : memref<1x4x16x32xbf16, #tpu.memory_space<vmem>>, vector<1x1x8x32xbf16>
    %95 = vector.shape_cast %94 : vector<1x1x8x32xbf16> to vector<8x32xbf16>
    %96 = vector.shape_cast %92 : vector<8x32xbf16> to vector<1x1x8x32xbf16>
    tpu.vector_store %arg4[%c0_36, %93, %c8_37, %c0_38], %96 {strides = array<i32>} : memref<1x4x16x32xbf16, #tpu.memory_space<vmem>>, vector<1x1x8x32xbf16>,
    %c1_i32 = arith.constant 1 : i32
    %c0_39 = arith.constant 0 : index
    %97 = arith.index_cast %c1_i32 : i32 to index
    %c0_40 = arith.constant 0 : index
    %c0_41 = arith.constant 0 : index
    %98 = vector.load %arg1[%c0_39, %97, %c0_40, %c0_41] : memref<1x4x16x128xbf16, #tpu.memory_space<vmem>>, vector<1x1x8x128xbf16>
    %99 = vector.shape_cast %98 : vector<1x1x8x128xbf16> to vector<8x128xbf16>
    %100 = arith.extf %99 : vector<8x128xbf16> to vector<8x128xf32>
    %101 = arith.truncf %44 : vector<8x32xf32> to vector<8x32xbf16>
    %cst_42 = arith.constant dense<0.000000e+00> : vector<8x128xf32>
    %102 = tpu.matmul %101, %4, %cst_42 {dimension_numbers = #tpu.dot_dimension_numbers<[1], [0], [0], [1], [0, 0, 1, 1], [], []>} : vector<8x32xbf16>, vector<32x128xbf16>, vector<8x128xf32> -> vector<8x128xf32>
    %103 = arith.addf %100, %102 : vector<8x128xf32>
    %104 = vector.extract_strided_slice %103 {offsets = [0, 0], sizes = [8, 32], strides = [1, 1]} : vector<8x128xf32> to vector<8x32xf32>
    %105 = arith.negf %104 : vector<8x32xf32>
    %106 = math.exp %105 : vector<8x32xf32>
    %cst_43 = arith.constant 1.000000e+00 : f32
    %107 = vector.broadcast %cst_43 : f32 to vector<8x32xf32>
    %108 = arith.addf %107, %106 : vector<8x32xf32>
    %109 = arith.divf %107, %108 : vector<8x32xf32>
    %110 = vector.extract_strided_slice %103 {offsets = [0, 32], sizes = [8, 32], strides = [1, 1]} : vector<8x128xf32> to vector<8x32xf32>
    %111 = arith.negf %110 : vector<8x32xf32>
    %112 = math.exp %111 : vector<8x32xf32>
    %cst_44 = arith.constant 1.000000e+00 : f32
    %113 = vector.broadcast %cst_44 : f32 to vector<8x32xf32>
    %114 = arith.addf %113, %112 : vector<8x32xf32>
    %115 = arith.divf %113, %114 : vector<8x32xf32>
    %116 = vector.extract_strided_slice %103 {offsets = [0, 64], sizes = [8, 32], strides = [1, 1]} : vector<8x128xf32> to vector<8x32xf32>
    %117 = math.tanh %116 : vector<8x32xf32>
    %118 = vector.extract_strided_slice %103 {offsets = [0, 96], sizes = [8, 32], strides = [1, 1]} : vector<8x128xf32> to vector<8x32xf32>
    %119 = arith.negf %118 : vector<8x32xf32>
    %120 = math.exp %119 : vector<8x32xf32>
    %cst_45 = arith.constant 1.000000e+00 : f32
    %121 = vector.broadcast %cst_45 : f32 to vector<8x32xf32>
    %122 = arith.addf %121, %120 : vector<8x32xf32>
    %123 = arith.divf %121, %122 : vector<8x32xf32>
    %124 = arith.mulf %115, %42 : vector<8x32xf32>
    %125 = arith.mulf %109, %117 : vector<8x32xf32>
    %126 = arith.addf %124, %125 : vector<8x32xf32>
    %127 = math.tanh %126 : vector<8x32xf32>
    %128 = arith.mulf %123, %127 : vector<8x32xf32>
    %c0_46 = arith.constant 0 : index
    %129 = arith.index_cast %c1_i32 : i32 to index
    %c0_47 = arith.constant 0 : index
    %c0_48 = arith.constant 0 : index
    %130 = vector.load %arg3[%c0_46, %129, %c0_47, %c0_48] : memref<1x4x16x32xbf16, #tpu.memory_space<vmem>>, vector<1x1x8x32xbf16>
    %131 = vector.shape_cast %130 : vector<1x1x8x32xbf16> to vector<8x32xbf16>
    %132 = arith.extf %131 : vector<8x32xbf16> to vector<8x32xf32>
    %133 = arith.addf %128, %132 : vector<8x32xf32>
    %134 = arith.truncf %133 : vector<8x32xf32> to vector<8x32xbf16>
    %c0_49 = arith.constant 0 : index
    %135 = arith.index_cast %c1_i32 : i32 to index
    %c0_50 = arith.constant 0 : index
    %c0_51 = arith.constant 0 : index
    %136 = vector.load %arg4[%c0_49, %135, %c0_50, %c0_51] : memref<1x4x16x32xbf16, #tpu.memory_space<vmem>>, vector<1x1x8x32xbf16>
    %137 = vector.shape_cast %136 : vector<1x1x8x32xbf16> to vector<8x32xbf16>
    %138 = vector.shape_cast %134 : vector<8x32xbf16> to vector<1x1x8x32xbf16>
    tpu.vector_store %arg4[%c0_49, %135, %c0_50, %c0_51], %138 {strides = array<i32>} : memref<1x4x16x32xbf16, #tpu.memory_space<vmem>>, vector<1x1x8x32xbf16>,
    %c0_52 = arith.constant 0 : index
    %139 = arith.index_cast %c1_i32 : i32 to index
    %c8_53 = arith.constant 8 : index
    %c0_54 = arith.constant 0 : index
    %140 = vector.load %arg1[%c0_52, %139, %c8_53, %c0_54] : memref<1x4x16x128xbf16, #tpu.memory_space<vmem>>, vector<1x1x8x128xbf16>
    %141 = vector.shape_cast %140 : vector<1x1x8x128xbf16> to vector<8x128xbf16>
    %142 = arith.extf %141 : vector<8x128xbf16> to vector<8x128xf32>
    %143 = arith.truncf %86 : vector<8x32xf32> to vector<8x32xbf16>
    %cst_55 = arith.constant dense<0.000000e+00> : vector<8x128xf32>
    %144 = tpu.matmul %143, %4, %cst_55 {dimension_numbers = #tpu.dot_dimension_numbers<[1], [0], [0], [1], [0, 0, 1, 1], [], []>} : vector<8x32xbf16>, vector<32x128xbf16>, vector<8x128xf32> -> vector<8x128xf32>
    %145 = arith.addf %142, %144 : vector<8x128xf32>
    %146 = vector.extract_strided_slice %145 {offsets = [0, 0], sizes = [8, 32], strides = [1, 1]} : vector<8x128xf32> to vector<8x32xf32>
    %147 = arith.negf %146 : vector<8x32xf32>
    %148 = math.exp %147 : vector<8x32xf32>
    %cst_56 = arith.constant 1.000000e+00 : f32
    %149 = vector.broadcast %cst_56 : f32 to vector<8x32xf32>
    %150 = arith.addf %149, %148 : vector<8x32xf32>
    %151 = arith.divf %149, %150 : vector<8x32xf32>
    %152 = vector.extract_strided_slice %145 {offsets = [0, 32], sizes = [8, 32], strides = [1, 1]} : vector<8x128xf32> to vector<8x32xf32>
    %153 = arith.negf %152 : vector<8x32xf32>
    %154 = math.exp %153 : vector<8x32xf32>
    %cst_57 = arith.constant 1.000000e+00 : f32
    %155 = vector.broadcast %cst_57 : f32 to vector<8x32xf32>
    %156 = arith.addf %155, %154 : vector<8x32xf32>
    %157 = arith.divf %155, %156 : vector<8x32xf32>
    %158 = vector.extract_strided_slice %145 {offsets = [0, 64], sizes = [8, 32], strides = [1, 1]} : vector<8x128xf32> to vector<8x32xf32>
    %159 = math.tanh %158 : vector<8x32xf32>
    %160 = vector.extract_strided_slice %145 {offsets = [0, 96], sizes = [8, 32], strides = [1, 1]} : vector<8x128xf32> to vector<8x32xf32>
    %161 = arith.negf %160 : vector<8x32xf32>
    %162 = math.exp %161 : vector<8x32xf32>
    %cst_58 = arith.constant 1.000000e+00 : f32
    %163 = vector.broadcast %cst_58 : f32 to vector<8x32xf32>
    %164 = arith.addf %163, %162 : vector<8x32xf32>
    %165 = arith.divf %163, %164 : vector<8x32xf32>
    %166 = arith.mulf %157, %84 : vector<8x32xf32>
    %167 = arith.mulf %151, %159 : vector<8x32xf32>
    %168 = arith.addf %166, %167 : vector<8x32xf32>
    %169 = math.tanh %168 : vector<8x32xf32>
    %170 = arith.mulf %165, %169 : vector<8x32xf32>
    %c0_59 = arith.constant 0 : index
    %171 = arith.index_cast %c1_i32 : i32 to index
    %c8_60 = arith.constant 8 : index
    %c0_61 = arith.constant 0 : index
    %172 = vector.load %arg3[%c0_59, %171, %c8_60, %c0_61] : memref<1x4x16x32xbf16, #tpu.memory_space<vmem>>, vector<1x1x8x32xbf16>
    %173 = vector.shape_cast %172 : vector<1x1x8x32xbf16> to vector<8x32xbf16>
    %174 = arith.extf %173 : vector<8x32xbf16> to vector<8x32xf32>
    %175 = arith.addf %170, %174 : vector<8x32xf32>
    %176 = arith.truncf %175 : vector<8x32xf32> to vector<8x32xbf16>
    %c0_62 = arith.constant 0 : index
    %177 = arith.index_cast %c1_i32 : i32 to index
    %c8_63 = arith.constant 8 : index
    %c0_64 = arith.constant 0 : index
    %178 = vector.load %arg4[%c0_62, %177, %c8_63, %c0_64] : memref<1x4x16x32xbf16, #tpu.memory_space<vmem>>, vector<1x1x8x32xbf16>
    %179 = vector.shape_cast %178 : vector<1x1x8x32xbf16> to vector<8x32xbf16>
    %180 = vector.shape_cast %176 : vector<8x32xbf16> to vector<1x1x8x32xbf16>
    tpu.vector_store %arg4[%c0_62, %177, %c8_63, %c0_64], %180 {strides = array<i32>} : memref<1x4x16x32xbf16, #tpu.memory_space<vmem>>, vector<1x1x8x32xbf16>,
    %c2_i32 = arith.constant 2 : i32
    %c0_65 = arith.constant 0 : index
    %181 = arith.index_cast %c2_i32 : i32 to index
    %c0_66 = arith.constant 0 : index
    %c0_67 = arith.constant 0 : index
    %182 = vector.load %arg1[%c0_65, %181, %c0_66, %c0_67] : memref<1x4x16x128xbf16, #tpu.memory_space<vmem>>, vector<1x1x8x128xbf16>
    %183 = vector.shape_cast %182 : vector<1x1x8x128xbf16> to vector<8x128xbf16>
    %184 = arith.extf %183 : vector<8x128xbf16> to vector<8x128xf32>
    %185 = arith.truncf %128 : vector<8x32xf32> to vector<8x32xbf16>
    %cst_68 = arith.constant dense<0.000000e+00> : vector<8x128xf32>
    %186 = tpu.matmul %185, %4, %cst_68 {dimension_numbers = #tpu.dot_dimension_numbers<[1], [0], [0], [1], [0, 0, 1, 1], [], []>} : vector<8x32xbf16>, vector<32x128xbf16>, vector<8x128xf32> -> vector<8x128xf32>
    %187 = arith.addf %184, %186 : vector<8x128xf32>
    %188 = vector.extract_strided_slice %187 {offsets = [0, 0], sizes = [8, 32], strides = [1, 1]} : vector<8x128xf32> to vector<8x32xf32>
    %189 = arith.negf %188 : vector<8x32xf32>
    %190 = math.exp %189 : vector<8x32xf32>
    %cst_69 = arith.constant 1.000000e+00 : f32
    %191 = vector.broadcast %cst_69 : f32 to vector<8x32xf32>
    %192 = arith.addf %191, %190 : vector<8x32xf32>
    %193 = arith.divf %191, %192 : vector<8x32xf32>
    %194 = vector.extract_strided_slice %187 {offsets = [0, 32], sizes = [8, 32], strides = [1, 1]} : vector<8x128xf32> to vector<8x32xf32>
    %195 = arith.negf %194 : vector<8x32xf32>
    %196 = math.exp %195 : vector<8x32xf32>
    %cst_70 = arith.constant 1.000000e+00 : f32
    %197 = vector.broadcast %cst_70 : f32 to vector<8x32xf32>
    %198 = arith.addf %197, %196 : vector<8x32xf32>
    %199 = arith.divf %197, %198 : vector<8x32xf32>
    %200 = vector.extract_strided_slice %187 {offsets = [0, 64], sizes = [8, 32], strides = [1, 1]} : vector<8x128xf32> to vector<8x32xf32>
    %201 = math.tanh %200 : vector<8x32xf32>
    %202 = vector.extract_strided_slice %187 {offsets = [0, 96], sizes = [8, 32], strides = [1, 1]} : vector<8x128xf32> to vector<8x32xf32>
    %203 = arith.negf %202 : vector<8x32xf32>
    %204 = math.exp %203 : vector<8x32xf32>
    %cst_71 = arith.constant 1.000000e+00 : f32
    %205 = vector.broadcast %cst_71 : f32 to vector<8x32xf32>
    %206 = arith.addf %205, %204 : vector<8x32xf32>
    %207 = arith.divf %205, %206 : vector<8x32xf32>
    %208 = arith.mulf %199, %126 : vector<8x32xf32>
    %209 = arith.mulf %193, %201 : vector<8x32xf32>
    %210 = arith.addf %208, %209 : vector<8x32xf32>
    %211 = math.tanh %210 : vector<8x32xf32>
    %212 = arith.mulf %207, %211 : vector<8x32xf32>
    %c0_72 = arith.constant 0 : index
    %213 = arith.index_cast %c2_i32 : i32 to index
    %c0_73 = arith.constant 0 : index
    %c0_74 = arith.constant 0 : index
    %214 = vector.load %arg3[%c0_72, %213, %c0_73, %c0_74] : memref<1x4x16x32xbf16, #tpu.memory_space<vmem>>, vector<1x1x8x32xbf16>
    %215 = vector.shape_cast %214 : vector<1x1x8x32xbf16> to vector<8x32xbf16>
    %216 = arith.extf %215 : vector<8x32xbf16> to vector<8x32xf32>
    %217 = arith.addf %212, %216 : vector<8x32xf32>
    %218 = arith.truncf %217 : vector<8x32xf32> to vector<8x32xbf16>
    %c0_75 = arith.constant 0 : index
    %219 = arith.index_cast %c2_i32 : i32 to index
    %c0_76 = arith.constant 0 : index
    %c0_77 = arith.constant 0 : index
    %220 = vector.load %arg4[%c0_75, %219, %c0_76, %c0_77] : memref<1x4x16x32xbf16, #tpu.memory_space<vmem>>, vector<1x1x8x32xbf16>
    %221 = vector.shape_cast %220 : vector<1x1x8x32xbf16> to vector<8x32xbf16>
    %222 = vector.shape_cast %218 : vector<8x32xbf16> to vector<1x1x8x32xbf16>
    tpu.vector_store %arg4[%c0_75, %219, %c0_76, %c0_77], %222 {strides = array<i32>} : memref<1x4x16x32xbf16, #tpu.memory_space<vmem>>, vector<1x1x8x32xbf16>,
    %c0_78 = arith.constant 0 : index
    %223 = arith.index_cast %c2_i32 : i32 to index
    %c8_79 = arith.constant 8 : index
    %c0_80 = arith.constant 0 : index
    %224 = vector.load %arg1[%c0_78, %223, %c8_79, %c0_80] : memref<1x4x16x128xbf16, #tpu.memory_space<vmem>>, vector<1x1x8x128xbf16>
    %225 = vector.shape_cast %224 : vector<1x1x8x128xbf16> to vector<8x128xbf16>
    %226 = arith.extf %225 : vector<8x128xbf16> to vector<8x128xf32>
    %227 = arith.truncf %170 : vector<8x32xf32> to vector<8x32xbf16>
    %cst_81 = arith.constant dense<0.000000e+00> : vector<8x128xf32>
    %228 = tpu.matmul %227, %4, %cst_81 {dimension_numbers = #tpu.dot_dimension_numbers<[1], [0], [0], [1], [0, 0, 1, 1], [], []>} : vector<8x32xbf16>, vector<32x128xbf16>, vector<8x128xf32> -> vector<8x128xf32>
    %229 = arith.addf %226, %228 : vector<8x128xf32>
    %230 = vector.extract_strided_slice %229 {offsets = [0, 0], sizes = [8, 32], strides = [1, 1]} : vector<8x128xf32> to vector<8x32xf32>
    %231 = arith.negf %230 : vector<8x32xf32>
    %232 = math.exp %231 : vector<8x32xf32>
    %cst_82 = arith.constant 1.000000e+00 : f32
    %233 = vector.broadcast %cst_82 : f32 to vector<8x32xf32>
    %234 = arith.addf %233, %232 : vector<8x32xf32>
    %235 = arith.divf %233, %234 : vector<8x32xf32>
    %236 = vector.extract_strided_slice %229 {offsets = [0, 32], sizes = [8, 32], strides = [1, 1]} : vector<8x128xf32> to vector<8x32xf32>
    %237 = arith.negf %236 : vector<8x32xf32>
    %238 = math.exp %237 : vector<8x32xf32>
    %cst_83 = arith.constant 1.000000e+00 : f32
    %239 = vector.broadcast %cst_83 : f32 to vector<8x32xf32>
    %240 = arith.addf %239, %238 : vector<8x32xf32>
    %241 = arith.divf %239, %240 : vector<8x32xf32>
    %242 = vector.extract_strided_slice %229 {offsets = [0, 64], sizes = [8, 32], strides = [1, 1]} : vector<8x128xf32> to vector<8x32xf32>
    %243 = math.tanh %242 : vector<8x32xf32>
    %244 = vector.extract_strided_slice %229 {offsets = [0, 96], sizes = [8, 32], strides = [1, 1]} : vector<8x128xf32> to vector<8x32xf32>
    %245 = arith.negf %244 : vector<8x32xf32>
    %246 = math.exp %245 : vector<8x32xf32>
    %cst_84 = arith.constant 1.000000e+00 : f32
    %247 = vector.broadcast %cst_84 : f32 to vector<8x32xf32>
    %248 = arith.addf %247, %246 : vector<8x32xf32>
    %249 = arith.divf %247, %248 : vector<8x32xf32>
    %250 = arith.mulf %241, %168 : vector<8x32xf32>
    %251 = arith.mulf %235, %243 : vector<8x32xf32>
    %252 = arith.addf %250, %251 : vector<8x32xf32>
    %253 = math.tanh %252 : vector<8x32xf32>
    %254 = arith.mulf %249, %253 : vector<8x32xf32>
    %c0_85 = arith.constant 0 : index
    %255 = arith.index_cast %c2_i32 : i32 to index
    %c8_86 = arith.constant 8 : index
    %c0_87 = arith.constant 0 : index
    %256 = vector.load %arg3[%c0_85, %255, %c8_86, %c0_87] : memref<1x4x16x32xbf16, #tpu.memory_space<vmem>>, vector<1x1x8x32xbf16>
    %257 = vector.shape_cast %256 : vector<1x1x8x32xbf16> to vector<8x32xbf16>
    %258 = arith.extf %257 : vector<8x32xbf16> to vector<8x32xf32>
    %259 = arith.addf %254, %258 : vector<8x32xf32>
    %260 = arith.truncf %259 : vector<8x32xf32> to vector<8x32xbf16>
    %c0_88 = arith.constant 0 : index
    %261 = arith.index_cast %c2_i32 : i32 to index
    %c8_89 = arith.constant 8 : index
    %c0_90 = arith.constant 0 : index
    %262 = vector.load %arg4[%c0_88, %261, %c8_89, %c0_90] : memref<1x4x16x32xbf16, #tpu.memory_space<vmem>>, vector<1x1x8x32xbf16>
    %263 = vector.shape_cast %262 : vector<1x1x8x32xbf16> to vector<8x32xbf16>
    %264 = vector.shape_cast %260 : vector<8x32xbf16> to vector<1x1x8x32xbf16>
    tpu.vector_store %arg4[%c0_88, %261, %c8_89, %c0_90], %264 {strides = array<i32>} : memref<1x4x16x32xbf16, #tpu.memory_space<vmem>>, vector<1x1x8x32xbf16>,
    %c3_i32 = arith.constant 3 : i32
    %c0_91 = arith.constant 0 : index
    %265 = arith.index_cast %c3_i32 : i32 to index
    %c0_92 = arith.constant 0 : index
    %c0_93 = arith.constant 0 : index
    %266 = vector.load %arg1[%c0_91, %265, %c0_92, %c0_93] : memref<1x4x16x128xbf16, #tpu.memory_space<vmem>>, vector<1x1x8x128xbf16>
    %267 = vector.shape_cast %266 : vector<1x1x8x128xbf16> to vector<8x128xbf16>
    %268 = arith.extf %267 : vector<8x128xbf16> to vector<8x128xf32>
    %269 = arith.truncf %212 : vector<8x32xf32> to vector<8x32xbf16>
    %cst_94 = arith.constant dense<0.000000e+00> : vector<8x128xf32>
    %270 = tpu.matmul %269, %4, %cst_94 {dimension_numbers = #tpu.dot_dimension_numbers<[1], [0], [0], [1], [0, 0, 1, 1], [], []>} : vector<8x32xbf16>, vector<32x128xbf16>, vector<8x128xf32> -> vector<8x128xf32>
    %271 = arith.addf %268, %270 : vector<8x128xf32>
    %272 = vector.extract_strided_slice %271 {offsets = [0, 0], sizes = [8, 32], strides = [1, 1]} : vector<8x128xf32> to vector<8x32xf32>
    %273 = arith.negf %272 : vector<8x32xf32>
    %274 = math.exp %273 : vector<8x32xf32>
    %cst_95 = arith.constant 1.000000e+00 : f32
    %275 = vector.broadcast %cst_95 : f32 to vector<8x32xf32>
    %276 = arith.addf %275, %274 : vector<8x32xf32>
    %277 = arith.divf %275, %276 : vector<8x32xf32>
    %278 = vector.extract_strided_slice %271 {offsets = [0, 32], sizes = [8, 32], strides = [1, 1]} : vector<8x128xf32> to vector<8x32xf32>
    %279 = arith.negf %278 : vector<8x32xf32>
    %280 = math.exp %279 : vector<8x32xf32>
    %cst_96 = arith.constant 1.000000e+00 : f32
    %281 = vector.broadcast %cst_96 : f32 to vector<8x32xf32>
    %282 = arith.addf %281, %280 : vector<8x32xf32>
    %283 = arith.divf %281, %282 : vector<8x32xf32>
    %284 = vector.extract_strided_slice %271 {offsets = [0, 64], sizes = [8, 32], strides = [1, 1]} : vector<8x128xf32> to vector<8x32xf32>
    %285 = math.tanh %284 : vector<8x32xf32>
    %286 = vector.extract_strided_slice %271 {offsets = [0, 96], sizes = [8, 32], strides = [1, 1]} : vector<8x128xf32> to vector<8x32xf32>
    %287 = arith.negf %286 : vector<8x32xf32>
    %288 = math.exp %287 : vector<8x32xf32>
    %cst_97 = arith.constant 1.000000e+00 : f32
    %289 = vector.broadcast %cst_97 : f32 to vector<8x32xf32>
    %290 = arith.addf %289, %288 : vector<8x32xf32>
    %291 = arith.divf %289, %290 : vector<8x32xf32>
    %292 = arith.mulf %283, %210 : vector<8x32xf32>
    %293 = arith.mulf %277, %285 : vector<8x32xf32>
    %294 = arith.addf %292, %293 : vector<8x32xf32>
    %295 = math.tanh %294 : vector<8x32xf32>
    %296 = arith.mulf %291, %295 : vector<8x32xf32>
    %c0_98 = arith.constant 0 : index
    %297 = arith.index_cast %c3_i32 : i32 to index
    %c0_99 = arith.constant 0 : index
    %c0_100 = arith.constant 0 : index
    %298 = vector.load %arg3[%c0_98, %297, %c0_99, %c0_100] : memref<1x4x16x32xbf16, #tpu.memory_space<vmem>>, vector<1x1x8x32xbf16>
    %299 = vector.shape_cast %298 : vector<1x1x8x32xbf16> to vector<8x32xbf16>
    %300 = arith.extf %299 : vector<8x32xbf16> to vector<8x32xf32>
    %301 = arith.addf %296, %300 : vector<8x32xf32>
    %302 = arith.truncf %301 : vector<8x32xf32> to vector<8x32xbf16>
    %c0_101 = arith.constant 0 : index
    %303 = arith.index_cast %c3_i32 : i32 to index
    %c0_102 = arith.constant 0 : index
    %c0_103 = arith.constant 0 : index
    %304 = vector.load %arg4[%c0_101, %303, %c0_102, %c0_103] : memref<1x4x16x32xbf16, #tpu.memory_space<vmem>>, vector<1x1x8x32xbf16>
    %305 = vector.shape_cast %304 : vector<1x1x8x32xbf16> to vector<8x32xbf16>
    %306 = vector.shape_cast %302 : vector<8x32xbf16> to vector<1x1x8x32xbf16>
    tpu.vector_store %arg4[%c0_101, %303, %c0_102, %c0_103], %306 {strides = array<i32>} : memref<1x4x16x32xbf16, #tpu.memory_space<vmem>>, vector<1x1x8x32xbf16>,
    %c0_104 = arith.constant 0 : index
    %307 = arith.index_cast %c3_i32 : i32 to index
    %c8_105 = arith.constant 8 : index
    %c0_106 = arith.constant 0 : index
    %308 = vector.load %arg1[%c0_104, %307, %c8_105, %c0_106] : memref<1x4x16x128xbf16, #tpu.memory_space<vmem>>, vector<1x1x8x128xbf16>
    %309 = vector.shape_cast %308 : vector<1x1x8x128xbf16> to vector<8x128xbf16>
    %310 = arith.extf %309 : vector<8x128xbf16> to vector<8x128xf32>
    %311 = arith.truncf %254 : vector<8x32xf32> to vector<8x32xbf16>
    %cst_107 = arith.constant dense<0.000000e+00> : vector<8x128xf32>
    %312 = tpu.matmul %311, %4, %cst_107 {dimension_numbers = #tpu.dot_dimension_numbers<[1], [0], [0], [1], [0, 0, 1, 1], [], []>} : vector<8x32xbf16>, vector<32x128xbf16>, vector<8x128xf32> -> vector<8x128xf32>
    %313 = arith.addf %310, %312 : vector<8x128xf32>
    %314 = vector.extract_strided_slice %313 {offsets = [0, 0], sizes = [8, 32], strides = [1, 1]} : vector<8x128xf32> to vector<8x32xf32>
    %315 = arith.negf %314 : vector<8x32xf32>
    %316 = math.exp %315 : vector<8x32xf32>
    %cst_108 = arith.constant 1.000000e+00 : f32
    %317 = vector.broadcast %cst_108 : f32 to vector<8x32xf32>
    %318 = arith.addf %317, %316 : vector<8x32xf32>
    %319 = arith.divf %317, %318 : vector<8x32xf32>
    %320 = vector.extract_strided_slice %313 {offsets = [0, 32], sizes = [8, 32], strides = [1, 1]} : vector<8x128xf32> to vector<8x32xf32>
    %321 = arith.negf %320 : vector<8x32xf32>
    %322 = math.exp %321 : vector<8x32xf32>
    %cst_109 = arith.constant 1.000000e+00 : f32
    %323 = vector.broadcast %cst_109 : f32 to vector<8x32xf32>
    %324 = arith.addf %323, %322 : vector<8x32xf32>
    %325 = arith.divf %323, %324 : vector<8x32xf32>
    %326 = vector.extract_strided_slice %313 {offsets = [0, 64], sizes = [8, 32], strides = [1, 1]} : vector<8x128xf32> to vector<8x32xf32>
    %327 = math.tanh %326 : vector<8x32xf32>
    %328 = vector.extract_strided_slice %313 {offsets = [0, 96], sizes = [8, 32], strides = [1, 1]} : vector<8x128xf32> to vector<8x32xf32>
    %329 = arith.negf %328 : vector<8x32xf32>
    %330 = math.exp %329 : vector<8x32xf32>
    %cst_110 = arith.constant 1.000000e+00 : f32
    %331 = vector.broadcast %cst_110 : f32 to vector<8x32xf32>
    %332 = arith.addf %331, %330 : vector<8x32xf32>
    %333 = arith.divf %331, %332 : vector<8x32xf32>
    %334 = arith.mulf %325, %252 : vector<8x32xf32>
    %335 = arith.mulf %319, %327 : vector<8x32xf32>
    %336 = arith.addf %334, %335 : vector<8x32xf32>
    %337 = math.tanh %336 : vector<8x32xf32>
    %338 = arith.mulf %333, %337 : vector<8x32xf32>
    %c0_111 = arith.constant 0 : index
    %339 = arith.index_cast %c3_i32 : i32 to index
    %c8_112 = arith.constant 8 : index
    %c0_113 = arith.constant 0 : index
    %340 = vector.load %arg3[%c0_111, %339, %c8_112, %c0_113] : memref<1x4x16x32xbf16, #tpu.memory_space<vmem>>, vector<1x1x8x32xbf16>
    %341 = vector.shape_cast %340 : vector<1x1x8x32xbf16> to vector<8x32xbf16>
    %342 = arith.extf %341 : vector<8x32xbf16> to vector<8x32xf32>
    %343 = arith.addf %338, %342 : vector<8x32xf32>
    %344 = arith.truncf %343 : vector<8x32xf32> to vector<8x32xbf16>
    %c0_114 = arith.constant 0 : index
    %345 = arith.index_cast %c3_i32 : i32 to index
    %c8_115 = arith.constant 8 : index
    %c0_116 = arith.constant 0 : index
    %346 = vector.load %arg4[%c0_114, %345, %c8_115, %c0_116] : memref<1x4x16x32xbf16, #tpu.memory_space<vmem>>, vector<1x1x8x32xbf16>
    %347 = vector.shape_cast %346 : vector<1x1x8x32xbf16> to vector<8x32xbf16>
    %348 = vector.shape_cast %344 : vector<8x32xbf16> to vector<1x1x8x32xbf16>
    tpu.vector_store %arg4[%c0_114, %345, %c8_115, %c0_116], %348 {strides = array<i32>} : memref<1x4x16x32xbf16, #tpu.memory_space<vmem>>, vector<1x1x8x32xbf16>,
    %c4_i32 = arith.constant 4 : i32
    %c0_117 = arith.constant 0 : index
    %c0_118 = arith.constant 0 : index
    %c0_119 = arith.constant 0 : index
    %349 = vector.load %arg7[%c0_117, %c0_118, %c0_119] : memref<2x8x32xf32, #tpu.memory_space<vmem>>, vector<1x8x32xf32>
    %350 = vector.shape_cast %349 : vector<1x8x32xf32> to vector<8x32xf32>
    %351 = vector.shape_cast %296 : vector<8x32xf32> to vector<1x8x32xf32>
    tpu.vector_store %arg7[%c0_117, %c0_118, %c0_119], %351 {strides = array<i32>} : memref<2x8x32xf32, #tpu.memory_space<vmem>>, vector<1x8x32xf32>,
    %c0_120 = arith.constant 0 : index
    %c0_121 = arith.constant 0 : index
    %c0_122 = arith.constant 0 : index
    %352 = vector.load %arg8[%c0_120, %c0_121, %c0_122] : memref<2x8x32xf32, #tpu.memory_space<vmem>>, vector<1x8x32xf32>
    %353 = vector.shape_cast %352 : vector<1x8x32xf32> to vector<8x32xf32>
    %354 = vector.shape_cast %294 : vector<8x32xf32> to vector<1x8x32xf32>
    tpu.vector_store %arg8[%c0_120, %c0_121, %c0_122], %354 {strides = array<i32>} : memref<2x8x32xf32, #tpu.memory_space<vmem>>, vector<1x8x32xf32>,
    %c1_123 = arith.constant 1 : index
    %c0_124 = arith.constant 0 : index
    %c0_125 = arith.constant 0 : index
    %355 = vector.load %arg7[%c1_123, %c0_124, %c0_125] : memref<2x8x32xf32, #tpu.memory_space<vmem>>, vector<1x8x32xf32>
    %356 = vector.shape_cast %355 : vector<1x8x32xf32> to vector<8x32xf32>
    %357 = vector.shape_cast %338 : vector<8x32xf32> to vector<1x8x32xf32>
    tpu.vector_store %arg7[%c1_123, %c0_124, %c0_125], %357 {strides = array<i32>} : memref<2x8x32xf32, #tpu.memory_space<vmem>>, vector<1x8x32xf32>,
    %c1_126 = arith.constant 1 : index
    %c0_127 = arith.constant 0 : index
    %c0_128 = arith.constant 0 : index
    %358 = vector.load %arg8[%c1_126, %c0_127, %c0_128] : memref<2x8x32xf32, #tpu.memory_space<vmem>>, vector<1x8x32xf32>
    %359 = vector.shape_cast %358 : vector<1x8x32xf32> to vector<8x32xf32>
    %360 = vector.shape_cast %336 : vector<8x32xf32> to vector<1x8x32xf32>
    tpu.vector_store %arg8[%c1_126, %c0_127, %c0_128], %360 {strides = array<i32>} : memref<2x8x32xf32, #tpu.memory_space<vmem>>, vector<1x8x32xf32>,
    return
  }
  func.func @transform_0(%arg0: i32) -> (i32, i32, i32, i32) {
    %c0_i32 = arith.constant 0 : i32
    %c0_i32_0 = arith.constant 0 : i32
    %c0_i32_1 = arith.constant 0 : i32
    %c0_i32_2 = arith.constant 0 : i32
    return %c0_i32, %arg0, %c0_i32_0, %c0_i32_1 : i32, i32, i32, i32
  }
  func.func @transform_2(%arg0: i32) -> (i32, i32, i32, i32) {
    %c0_i32 = arith.constant 0 : i32
    %c0_i32_0 = arith.constant 0 : i32
    %c0_i32_1 = arith.constant 0 : i32
    %c0_i32_2 = arith.constant 0 : i32
    return %c0_i32, %arg0, %c0_i32_0, %c0_i32_1 : i32, i32, i32, i32
  }
  func.func @transform_3(%arg0: i32) -> (i32, i32, i32, i32) {
    %c0_i32 = arith.constant 0 : i32
    %c0_i32_0 = arith.constant 0 : i32
    %c0_i32_1 = arith.constant 0 : i32
    %c0_i32_2 = arith.constant 0 : i32
    return %c0_i32, %arg0, %c0_i32_0, %c0_i32_1 : i32, i32, i32, i32
  }
}

</mosaic_0001>

<llo_original>
// kernel: encoder_forward.5
$region0: #{encoder_forward.5}
  #allocation0 [shape = 'u32[]', space=smem, size = 0x4, offset = 0x4, fixed_abs, tag = 'smem constant byte address 0x4 - core index']
  #allocation1 [shape = 'u32[144,128]{1,0:T(1,128)}', space=vmem, size = 0x12000, scoped, tag = 'internal scratch']
  #allocation2 [shape = 'bf16[1,32,128]{2,1,0:T(16,128)(2,1)}', space=vmem, size = 0x2000, scoped, tag = 'scratch operand']
  #allocation3 [shape = 's32[1]{0}', space=sflag, size = 0x4, scoped, tag = 'scratch operand']
  #allocation4 [shape = 'f32[2,8,32]{2,1,0:T(8,128)}', space=vmem, size = 0x2000, scoped, tag = 'scratch operand']
  #allocation5 [shape = 'f32[2,8,32]{2,1,0:T(8,128)}', space=vmem, size = 0x2000, scoped, tag = 'scratch operand']
  #allocation10 [shape = 's32[]', space=sflag, size = 0x4, offset = 0, fixed_abs, tag = 'sflag constant byte address 0x0 - dummy sync flag']
  #allocation11 [shape = 's32[]', space=sflag, size = 0x4, offset = 0, fixed_abs, tag = 'sflag constant byte address 0x0 - dummy sync flag']
  #allocation12 [shape = 'u32[]', space=smem, size = 0x4, offset = 0x44, fixed_abs, tag = 'smem constant byte address 0x44 - assertion arg 0']
  #allocation13 [shape = 'u32[]', space=smem, size = 0x4, offset = 0x48, fixed_abs, tag = 'smem constant byte address 0x48 - assertion arg 1']
  %s0 = inlined_call_operand.hbm [shape: bf16[1,8,16,128], index: 0, kind: input, shape index: {}]
  %s1 = inlined_call_operand.hbm [shape: bf16[1,32,128], index: 1, kind: input, shape index: {}]
  %s2 = inlined_call_operand.hbm [shape: bf16[1,8,16,32], index: 2, kind: output, shape index: {}]
  %s3 = sld [smem:[#allocation0]]
  $region49: #{encoder_forward.5} parent=0
    _
  %s5 = ssub.s32 1, %s3
  %s6 = scalar_select 0, %s5, %s3
  $region1: #{encoder_forward.5} parent=0
    #allocation6 [shape = 'u8[32768]{0}', space=vmem, size = 0x8000, scoped, tag = 'input window, operand 0']
    #allocation7 [shape = 's32[2]{0}', space=sflag, size = 0x8, scoped, tag = 'scoped memory for encoder_forward.5']
    #allocation8 [shape = 's32[2]{0}', space=sflag, size = 0x8, scoped, tag = 'scoped memory for encoder_forward.5']
    #allocation9 [shape = 'u8[32768]{0}', space=vmem, size = 0x8000, scoped, tag = 'output window, operand 0']
    %7 = vsyncpa [#allocation7], 0
    %s8 = scalar_lea.sflag [#allocation7], 1
    %9 = vsyncpa %s8, 0
    %10 = vsyncpa [#allocation8], 0
    %s11 = scalar_lea.sflag [#allocation8], 1
    %12 = vsyncpa %s11, 0
    loop: start=0, step=1, limit=4
    $region2: #{encoder_forward.5} parent=1 // loop_pre_header
      _
    $region3: #{encoder_forward.5} parent=1 // loop_header
      %s14 = sphi 0, %s18
      %p15 = scmp.ge.s32.totalorder %s14, 4
      %s24 = sphi 0, %s26
      %s27 = sphi 0, %s24
      %s28 = sphi 0, %s27
      %s44 = sphi 0, %s28
      %s50 = sphi 0, %s52
      %s53 = sphi 0, %s50
      %s54 = sphi 0, %s53
      %s70 = sphi 0, %s54
    $region4: #{encoder_forward.5} parent=1 // loop_header_branch
      %17 = sbr.rel (%p15) target = $region8
    $region5: #{encoder_forward.5} parent=1 // loop_body
      %s19 = ssub.s32 %s14, 1
      %s20 = ssub.s32 %s14, 2
      %s21 = sadd.s32 %s14, 1
      %s22 = ssub.s32 %s14, %s21
      %p23 = scmp.eq.s32.totalorder %s22, 0
      %s25 = sadd.s32 %s24, 1
      %s26 = scalar_select %p23, %s24, %s25
      %p29 = pneg %p23
      %p30 = scmp.eq.s32.totalorder %s14, 1
      %p31 = por %p29, %p30
      %p32 = scmp.ne.s32.totalorder %s24, %s27
      %p33 = scmp.eq.s32.totalorder %s14, 0
      %p34 = por %p32, %p33
      %p35 = scmp.ne.s32.totalorder %s24, %s27
      %p36 = scmp.eq.s32.totalorder %s19, 1
      %p37 = por %p35, %p36
      %p38 = scmp.ne.s32.totalorder %s27, %s28
      %p39 = scmp.eq.s32.totalorder %s19, 0
      %p40 = por %p38, %p39
      %p41 = scmp.ne.s32.totalorder %s27, %s28
      %p42 = scmp.eq.s32.totalorder %s20, 1
      %p43 = por %p41, %p42
      %p45 = scmp.ne.s32.totalorder %s28, %s44
      %p46 = scmp.eq.s32.totalorder %s20, 0
      %p47 = por %p45, %p46
      %s48 = ssub.s32 %s14, %s21
      %p49 = scmp.eq.s32.totalorder %s48, 0
      %s51 = sadd.s32 %s50, 1
      %s52 = scalar_select %p49, %s50, %s51
      %p55 = pneg %p49
      %p56 = scmp.eq.s32.totalorder %s14, 1
      %p57 = por %p55, %p56
      %p58 = scmp.ne.s32.totalorder %s50, %s53
      %p59 = scmp.eq.s32.totalorder %s14, 0
      %p60 = por %p58, %p59
      %p61 = scmp.ne.s32.totalorder %s50, %s53
      %p62 = scmp.eq.s32.totalorder %s19, 1
      %p63 = por %p61, %p62
      %p64 = scmp.ne.s32.totalorder %s53, %s54
      %p65 = scmp.eq.s32.totalorder %s19, 0
      %p66 = por %p64, %p65
      %p67 = scmp.ne.s32.totalorder %s53, %s54
      %p68 = scmp.eq.s32.totalorder %s20, 1
      %p69 = por %p67, %p68
      %p71 = scmp.ne.s32.totalorder %s54, %s70
      %p72 = scmp.eq.s32.totalorder %s20, 0
      %p73 = por %p71, %p72
      %p74 = scmp.le.s32.totalorder 1, %s14
      %p75 = scmp.lt.s32.totalorder %s14, 3
      %p76 = pnand %p74, %p75
      %p77 = pneg %p76
      // Predicated region
      $region9: #{encoder_forward.5} parent=5 // pred_check
        _
      $region10: #{encoder_forward.5} parent=5 // pred_check_branch
        %79 = sbr.rel (%p76) target = $region12
      $region11: #{encoder_forward.5} parent=5 // pred_region
        %s80 = ssub.s32 %s14, 1
      $region12: #{encoder_forward.5} parent=5 // pred_fallthru
        _
      %p81 = scmp.lt.s32.totalorder %s14, 2
      // Predicated region
      $region13: #{encoder_forward.5} parent=5 // pred_check
        %p82 = pneg %p81
      $region14: #{encoder_forward.5} parent=5 // pred_check_branch
        %84 = sbr.rel (%p82) target = $region16
      $region15: #{encoder_forward.5} parent=5 // pred_region
        // Predicated region
        $region17: #{encoder_forward.5} parent=15 // pred_check
          %p85 = pneg %p34
        $region18: #{encoder_forward.5} parent=15 // pred_check_branch
          %87 = sbr.rel (%p85) target = $region20
        $region19: #{encoder_forward.5} parent=15 // pred_region
          %s88 = sand.u32 %s24, 1
          %s89 = scalar_lea.sflag [#allocation7], %s88
          %s90 = sand.u32 %s24, 1
          %s91 = smul.addr %s90, 32
          %s92 = scalar_lea.vmem [#allocation6], %s91
          %s93 = smul.u32 4, %s14
          %s95 = ssub.s32 512, 512
          %96 = vsyncadd %s89, %s95
          %s97 = smul.addr %s93, 2
          %s98 = smul.addr %s97, 64
          %s99 = scalar_lea.hbm %s0, %s98
          %s100 = sshll.u32 %s92, 4
          %s101 = int_to_ptr.vmem [resolvable:$true] %s100
          %106 = dma.hbm_to_vmem [thread:$0]  %s99, 512, %s101, %s89, 64, 64, 4
        $region20: #{encoder_forward.5} parent=15 // pred_fallthru
          _
      $region16: #{encoder_forward.5} parent=5 // pred_fallthru
        _
      %p107 = scmp.le.s32.totalorder 1, %s14
      %p108 = scmp.lt.s32.totalorder %s14, 3
      %p109 = pnand %p107, %p108
      %p110 = pneg %p109
      // Predicated region
      $region21: #{encoder_forward.5} parent=5 // pred_check
        _
      $region22: #{encoder_forward.5} parent=5 // pred_check_branch
        %112 = sbr.rel (%p109) target = $region24
      $region23: #{encoder_forward.5} parent=5 // pred_region
        %s113 = ssub.s32 %s14, 1
        %s114 = sand.u32 %s27, 1
        %s115 = scalar_lea.sflag [#allocation7], %s114
        %s116 = sand.u32 %s27, 1
        %s117 = smul.addr %s116, 32
        %s118 = scalar_lea.vmem [#allocation6], %s117
        // Predicated region
        $region25: #{encoder_forward.5} parent=23 // pred_check
          %p119 = pneg %p40
        $region26: #{encoder_forward.5} parent=23 // pred_check_branch
          %121 = sbr.rel (%p119) target = $region28
        $region27: #{encoder_forward.5} parent=23 // pred_region
          %122 = dma.done %s115, 512
        $region28: #{encoder_forward.5} parent=23 // pred_fallthru
          _
        %s123 = sand.u32 %s27, 1
        %s124 = scalar_lea.sflag [#allocation7], %s123
        %s125 = sand.u32 %s27, 1
        %s126 = smul.addr %s125, 32
        %s127 = scalar_lea.vmem [#allocation6], %s126
        %p128 = pneg %p40
        %p129 = pneg %p37
        %p130 = pneg %p66
        %p131 = pneg %p63
        %s132 = sand.u32 %s53, 1
        %s133 = scalar_lea.sflag [#allocation8], %s132
        %s134 = sand.u32 %s53, 1
        %s135 = smul.addr %s134, 32
        %s136 = scalar_lea.vmem [#allocation9], %s135
        %s137 = smul.u32 4, %s19
        %s138 = smul.u32 4, %s19
        %p140 = scmp.eq.s32.totalorder %s19, 0
        // Predicated region
        $region29: #{encoder_forward.5} parent=23 // pred_check
          %p141 = pneg %p140
        $region30: #{encoder_forward.5} parent=23 // pred_check_branch
          %143 = sbr.rel (%p141) target = $region32
        $region31: #{encoder_forward.5} parent=23 // pred_region
          // Predicated region
          $region33: #{encoder_forward.5} parent=31 // pred_check
            _
          $region34: #{encoder_forward.5} parent=31 // pred_check_branch
            %145 = sbr.rel target = $region36
          $region35: #{encoder_forward.5} parent=31 // pred_region
            %146 = sst [smem:[#allocation12]] [#allocation11]
            %147 = sst [smem:[#allocation13]] [#allocation10]
          $region36: #{encoder_forward.5} parent=31 // pred_fallthru
            _
          %149 = shalt.err (0)
          %s151 = sshll.u32 [#allocation2], 4
          %s152 = int_to_ptr.vmem [resolvable:$true] %s151
          %154 = dma.hbm_to_vmem [thread:$0]  %s1, 256, %s152, [#allocation3]
          %s155 = smul.u32 4, 1
          %s156 = smul.u32 %s155, 4
          %s157 = smul.u32 %s156, 1
          %s158 = sshll.u32 %s157, 4
          %159 = dma.done [#allocation3], %s158
          %vm160 = vcmask 261120
          %161 = vst.msk [vmem:[#allocation4] sm:$0xff] %vm160, 0.0
          %162 = vst.msk [vmem:[#allocation4 + $0x8] sm:$0xff] %vm160, 0.0
          %163 = vst.msk [vmem:[#allocation5] sm:$0xff] %vm160, 0.0
          %164 = vst.msk [vmem:[#allocation5 + $0x8] sm:$0xff] %vm160, 0.0
        $region32: #{encoder_forward.5} parent=23 // pred_fallthru
          _
        %v165 = vld [vmem:[#allocation2] sm:$0xff]
        %v166 = vld [vmem:[#allocation2 + $0x8] sm:$0xff]
        %v167 = vld [vmem:[#allocation4] sm:$0xff]
        %v168 = vld [vmem:[#allocation5] sm:$0xff]
        %s169 = scalar_lea.vmem [#allocation4], 8
        %v170 = vld [vmem:[%s169] sm:$0xff]
        %s171 = scalar_lea.vmem [#allocation5], 8
        %v172 = vld [vmem:[%s171] sm:$0xff]
        %v173 = vld [vmem:[%s118] sm:$0xf]
        %v174 = vunpack.c.l.bf16 %v173
        %v175 = vpack.c.bf16 %v167, %v167
        %vm176 = vcmask 261120
        %v178 = vsel %vm176, %v175, 0
        %180 = vmatprep.subr.bf16.mxu0 0
        %181 = vmatpush1.bf16.msra.mxu0 %v165
        %182 = vmatprep.subr.bf16.mxu0 0
        %183 = vmatpush1.bf16.msra.mxu0 %v166
        %184 = vmatprep.subr.bf16.mxu0 0
        %185 = vmatpush1.bf16.msra.mxu0 0
        %186 = vmatprep.subr.bf16.mxu0 0
        %187 = vmatpush1.bf16.msra.mxu0 0
        %188 = vmatprep.subr.bf16.mxu0 0
        %189 = vmatpush1.bf16.msra.mxu0 0
        %190 = vmatprep.subr.bf16.mxu0 0
        %191 = vmatpush1.bf16.msra.mxu0 0
        %192 = vmatprep.subr.bf16.mxu0 0
        %193 = vmatpush1.bf16.msra.mxu0 0
        %194 = vmatprep.subr.bf16.mxu0 0
        %195 = vmatpush1.bf16.msra.mxu0 0
        %196 = vmatprep.subr.bf16.mxu0 0
        %197 = vmatpush1.bf16.msra.mxu0 0
        %198 = vmatprep.subr.bf16.mxu0 0
        %199 = vmatpush1.bf16.msra.mxu0 0
        %200 = vmatprep.subr.bf16.mxu0 0
        %201 = vmatpush1.bf16.msra.mxu0 0
        %202 = vmatprep.subr.bf16.mxu0 0
        %203 = vmatpush1.bf16.msra.mxu0 0
        %204 = vmatprep.subr.bf16.mxu0 0
        %205 = vmatpush1.bf16.msra.mxu0 0
        %206 = vmatprep.subr.bf16.mxu0 0
        %207 = vmatpush1.bf16.msra.mxu0 0
        %208 = vmatprep.subr.bf16.mxu0 0
        %209 = vmatpush1.bf16.msra.mxu0 0
        %210 = vmatprep.subr.bf16.mxu0 0
        %211 = vmatpush1.bf16.msra.mxu0 0
        %212 = vmatprep.mubr.bf16.mxu0 0
        %213 = vmatmul.mubr.bf16.gmra.mrb[0].mxu0 %v178
        %v214 = vpop.f32.mrb[0].mxu0
        %v215 = vadd.f32 0.0, %v214
        %v216 = vpop.f32.mrb[0].mxu0
        %v217 = vpop.f32.mrb[0].mxu0
        %v218 = vpop.f32.mrb[0].mxu0
        %219 = vdwg.mxu0
        %v220 = vadd.f32 %v174, %v215
        %v221 = vxor.u32 %v220, 2147483648
        %v222 = vmul.f32 %v221, 1.442695
        %v223 = vpow.pop %v222
        %v224 = vadd.f32 %v223, 1.0
        %v225 = vrcp.pop %v224
        %v226 = vmul.f32 1.0, %v225
        %v227 = vtanh.pop %v220
        %229 = vrot.lane.b32.xlu0 %v168, 32
        %v230 = vpop.permute.xlu0 %229
        %v232 = vmul.f32 %v226, %v230
        %234 = vrot.lane.b32.xlu0 %v227, 64
        %v235 = vpop.permute.xlu0 %234
        %v237 = vmul.f32 %v226, %v235
        %239 = vrot.lane.b32.xlu0 %v237, 32
        %v240 = vpop.permute.xlu0 %239
        %v242 = vadd.f32 %v232, %v240
        %v243 = vtanh.pop %v242
        %245 = vrot.lane.b32.xlu0 %v243, 64
        %v246 = vpop.permute.xlu0 %245
        %v248 = vmul.f32 %v226, %v246
        %v249 = vpack.c.bf16 %v248, %v248
        %v251 = vunpack.c.l.b16 %v249
        %v252 = vpack.c.b16 %v251, %v251
        %253 = vrot.lane.b32.xlu0 %v252, 32
        %v254 = vpop.permute.xlu0 %253
        %vm256 = vcmask 257024
        %257 = vst.msk [vmem:[%s136] sm:$0xf] %vm256, %v254
        %v258 = vld [vmem:[%s118 + $0x4] sm:$0xf]
        %v259 = vunpack.c.l.bf16 %v258
        %v260 = vpack.c.bf16 %v170, %v170
        %v262 = vsel %vm176, %v260, 0
        %264 = vmatprep.subr.bf16.mxu0 0
        %265 = vmatpush1.bf16.msra.mxu0 %v165
        %266 = vmatprep.subr.bf16.mxu0 0
        %267 = vmatpush1.bf16.msra.mxu0 %v166
        %268 = vmatprep.subr.bf16.mxu0 0
        %269 = vmatpush1.bf16.msra.mxu0 0
        %270 = vmatprep.subr.bf16.mxu0 0
        %271 = vmatpush1.bf16.msra.mxu0 0
        %272 = vmatprep.subr.bf16.mxu0 0
        %273 = vmatpush1.bf16.msra.mxu0 0
        %274 = vmatprep.subr.bf16.mxu0 0
        %275 = vmatpush1.bf16.msra.mxu0 0
        %276 = vmatprep.subr.bf16.mxu0 0
        %277 = vmatpush1.bf16.msra.mxu0 0
        %278 = vmatprep.subr.bf16.mxu0 0
        %279 = vmatpush1.bf16.msra.mxu0 0
        %280 = vmatprep.subr.bf16.mxu0 0
        %281 = vmatpush1.bf16.msra.mxu0 0
        %282 = vmatprep.subr.bf16.mxu0 0
        %283 = vmatpush1.bf16.msra.mxu0 0
        %284 = vmatprep.subr.bf16.mxu0 0
        %285 = vmatpush1.bf16.msra.mxu0 0
        %286 = vmatprep.subr.bf16.mxu0 0
        %287 = vmatpush1.bf16.msra.mxu0 0
        %288 = vmatprep.subr.bf16.mxu0 0
        %289 = vmatpush1.bf16.msra.mxu0 0
        %290 = vmatprep.subr.bf16.mxu0 0
        %291 = vmatpush1.bf16.msra.mxu0 0
        %292 = vmatprep.subr.bf16.mxu0 0
        %293 = vmatpush1.bf16.msra.mxu0 0
        %294 = vmatprep.subr.bf16.mxu0 0
        %295 = vmatpush1.bf16.msra.mxu0 0
        %296 = vmatprep.mubr.bf16.mxu0 0
        %297 = vmatmul.mubr.bf16.gmra.mrb[0].mxu0 %v262
        %v298 = vpop.f32.mrb[0].mxu0
        %v299 = vadd.f32 0.0, %v298
        %v300 = vpop.f32.mrb[0].mxu0
        %v301 = vpop.f32.mrb[0].mxu0
        %v302 = vpop.f32.mrb[0].mxu0
        %303 = vdwg.mxu0
        %v304 = vadd.f32 %v259, %v299
        %v305 = vxor.u32 %v304, 2147483648
        %v306 = vmul.f32 %v305, 1.442695
        %v307 = vpow.pop %v306
        %v308 = vadd.f32 %v307, 1.0
        %v309 = vrcp.pop %v308
        %v310 = vmul.f32 1.0, %v309
        %v311 = vtanh.pop %v304
        %313 = vrot.lane.b32.xlu0 %v172, 32
        %v314 = vpop.permute.xlu0 %313
        %v316 = vmul.f32 %v310, %v314
        %318 = vrot.lane.b32.xlu0 %v311, 64
        %v319 = vpop.permute.xlu0 %318
        %v321 = vmul.f32 %v310, %v319
        %323 = vrot.lane.b32.xlu0 %v321, 32
        %v324 = vpop.permute.xlu0 %323
        %v326 = vadd.f32 %v316, %v324
        %v327 = vtanh.pop %v326
        %329 = vrot.lane.b32.xlu0 %v327, 64
        %v330 = vpop.permute.xlu0 %329
        %v332 = vmul.f32 %v310, %v330
        %v333 = vpack.c.bf16 %v332, %v332
        %v335 = vunpack.c.l.b16 %v333
        %v336 = vpack.c.b16 %v335, %v335
        %337 = vrot.lane.b32.xlu0 %v336, 32
        %v338 = vpop.permute.xlu0 %337
        %340 = vst.msk [vmem:[%s136 + $0x4] sm:$0xf] %vm256, %v338
        %s341 = scalar_lea.vmem %s118, 8 [#allocation6]
        %v342 = vld [vmem:[%s341] sm:$0xf]
        %v343 = vunpack.c.l.bf16 %v342
        %344 = vrot.lane.b32.xlu0 %v249, 32
        %v345 = vpop.permute.xlu0 %344
        %v347 = vsel %vm176, %v345, 0
        %349 = vmatprep.subr.bf16.mxu0 0
        %350 = vmatpush1.bf16.msra.mxu0 %v165
        %351 = vmatprep.subr.bf16.mxu0 0
        %352 = vmatpush1.bf16.msra.mxu0 %v166
        %353 = vmatprep.subr.bf16.mxu0 0
        %354 = vmatpush1.bf16.msra.mxu0 0
        %355 = vmatprep.subr.bf16.mxu0 0
        %356 = vmatpush1.bf16.msra.mxu0 0
        %357 = vmatprep.subr.bf16.mxu0 0
        %358 = vmatpush1.bf16.msra.mxu0 0
        %359 = vmatprep.subr.bf16.mxu0 0
        %360 = vmatpush1.bf16.msra.mxu0 0
        %361 = vmatprep.subr.bf16.mxu0 0
        %362 = vmatpush1.bf16.msra.mxu0 0
        %363 = vmatprep.subr.bf16.mxu0 0
        %364 = vmatpush1.bf16.msra.mxu0 0
        %365 = vmatprep.subr.bf16.mxu0 0
        %366 = vmatpush1.bf16.msra.mxu0 0
        %367 = vmatprep.subr.bf16.mxu0 0
        %368 = vmatpush1.bf16.msra.mxu0 0
        %369 = vmatprep.subr.bf16.mxu0 0
        %370 = vmatpush1.bf16.msra.mxu0 0
        %371 = vmatprep.subr.bf16.mxu0 0
        %372 = vmatpush1.bf16.msra.mxu0 0
        %373 = vmatprep.subr.bf16.mxu0 0
        %374 = vmatpush1.bf16.msra.mxu0 0
        %375 = vmatprep.subr.bf16.mxu0 0
        %376 = vmatpush1.bf16.msra.mxu0 0
        %377 = vmatprep.subr.bf16.mxu0 0
        %378 = vmatpush1.bf16.msra.mxu0 0
        %379 = vmatprep.subr.bf16.mxu0 0
        %380 = vmatpush1.bf16.msra.mxu0 0
        %381 = vmatprep.mubr.bf16.mxu0 0
        %382 = vmatmul.mubr.bf16.gmra.mrb[0].mxu0 %v347
        %v383 = vpop.f32.mrb[0].mxu0
        %v384 = vadd.f32 0.0, %v383
        %v385 = vpop.f32.mrb[0].mxu0
        %v386 = vpop.f32.mrb[0].mxu0
        %v387 = vpop.f32.mrb[0].mxu0
        %388 = vdwg.mxu0
        %v389 = vadd.f32 %v343, %v384
        %v390 = vxor.u32 %v389, 2147483648
        %v391 = vmul.f32 %v390, 1.442695
        %v392 = vpow.pop %v391
        %v393 = vadd.f32 %v392, 1.0
        %v394 = vrcp.pop %v393
        %v395 = vmul.f32 1.0, %v394
        %v396 = vtanh.pop %v389
        %v397 = vmul.f32 %v395, %v242
        %399 = vrot.lane.b32.xlu0 %v396, 64
        %v400 = vpop.permute.xlu0 %399
        %v402 = vmul.f32 %v395, %v400
        %404 = vrot.lane.b32.xlu0 %v402, 32
        %v405 = vpop.permute.xlu0 %404
        %v407 = vadd.f32 %v397, %v405
        %v408 = vtanh.pop %v407
        %410 = vrot.lane.b32.xlu0 %v408, 64
        %v411 = vpop.permute.xlu0 %410
        %v413 = vmul.f32 %v395, %v411
        %v414 = vpack.c.bf16 %v413, %v413
        %v416 = vunpack.c.l.b16 %v414
        %v417 = vpack.c.b16 %v416, %v416
        %418 = vrot.lane.b32.xlu0 %v417, 32
        %v419 = vpop.permute.xlu0 %418
        %s421 = scalar_lea.vmem %s136, 8 [#allocation9]
        %422 = vst.msk [vmem:[%s421] sm:$0xf] %vm256, %v419
        %v423 = vld [vmem:[%s341 + $0x4] sm:$0xf]
        %v424 = vunpack.c.l.bf16 %v423
        %425 = vrot.lane.b32.xlu0 %v333, 32
        %v426 = vpop.permute.xlu0 %425
        %v428 = vsel %vm176, %v426, 0
        %430 = vmatprep.subr.bf16.mxu0 0
        %431 = vmatpush1.bf16.msra.mxu0 %v165
        %432 = vmatprep.subr.bf16.mxu0 0
        %433 = vmatpush1.bf16.msra.mxu0 %v166
        %434 = vmatprep.subr.bf16.mxu0 0
        %435 = vmatpush1.bf16.msra.mxu0 0
        %436 = vmatprep.subr.bf16.mxu0 0
        %437 = vmatpush1.bf16.msra.mxu0 0
        %438 = vmatprep.subr.bf16.mxu0 0
        %439 = vmatpush1.bf16.msra.mxu0 0
        %440 = vmatprep.subr.bf16.mxu0 0
        %441 = vmatpush1.bf16.msra.mxu0 0
        %442 = vmatprep.subr.bf16.mxu0 0
        %443 = vmatpush1.bf16.msra.mxu0 0
        %444 = vmatprep.subr.bf16.mxu0 0
        %445 = vmatpush1.bf16.msra.mxu0 0
        %446 = vmatprep.subr.bf16.mxu0 0
        %447 = vmatpush1.bf16.msra.mxu0 0
        %448 = vmatprep.subr.bf16.mxu0 0
        %449 = vmatpush1.bf16.msra.mxu0 0
        %450 = vmatprep.subr.bf16.mxu0 0
        %451 = vmatpush1.bf16.msra.mxu0 0
        %452 = vmatprep.subr.bf16.mxu0 0
        %453 = vmatpush1.bf16.msra.mxu0 0
        %454 = vmatprep.subr.bf16.mxu0 0
        %455 = vmatpush1.bf16.msra.mxu0 0
        %456 = vmatprep.subr.bf16.mxu0 0
        %457 = vmatpush1.bf16.msra.mxu0 0
        %458 = vmatprep.subr.bf16.mxu0 0
        %459 = vmatpush1.bf16.msra.mxu0 0
        %460 = vmatprep.subr.bf16.mxu0 0
        %461 = vmatpush1.bf16.msra.mxu0 0
        %462 = vmatprep.mubr.bf16.mxu0 0
        %463 = vmatmul.mubr.bf16.gmra.mrb[0].mxu0 %v428
        %v464 = vpop.f32.mrb[0].mxu0
        %v465 = vadd.f32 0.0, %v464
        %v466 = vpop.f32.mrb[0].mxu0
        %v467 = vpop.f32.mrb[0].mxu0
        %v468 = vpop.f32.mrb[0].mxu0
        %469 = vdwg.mxu0
        %v470 = vadd.f32 %v424, %v465
        %v471 = vxor.u32 %v470, 2147483648
        %v472 = vmul.f32 %v471, 1.442695
        %v473 = vpow.pop %v472
        %v474 = vadd.f32 %v473, 1.0
        %v475 = vrcp.pop %v474
        %v476 = vmul.f32 1.0, %v475
        %v477 = vtanh.pop %v470
        %v478 = vmul.f32 %v476, %v326
        %480 = vrot.lane.b32.xlu0 %v477, 64
        %v481 = vpop.permute.xlu0 %480
        %v483 = vmul.f32 %v476, %v481
        %485 = vrot.lane.b32.xlu0 %v483, 32
        %v486 = vpop.permute.xlu0 %485
        %v488 = vadd.f32 %v478, %v486
        %v489 = vtanh.pop %v488
        %491 = vrot.lane.b32.xlu0 %v489, 64
        %v492 = vpop.permute.xlu0 %491
        %v494 = vmul.f32 %v476, %v492
        %v495 = vpack.c.bf16 %v494, %v494
        %v497 = vunpack.c.l.b16 %v495
        %v498 = vpack.c.b16 %v497, %v497
        %499 = vrot.lane.b32.xlu0 %v498, 32
        %v500 = vpop.permute.xlu0 %499
        %502 = vst.msk [vmem:[%s421 + $0x4] sm:$0xf] %vm256, %v500
        %s503 = scalar_lea.vmem %s118, 16 [#allocation6]
        %v504 = vld [vmem:[%s503] sm:$0xf]
        %v505 = vunpack.c.l.bf16 %v504
        %506 = vrot.lane.b32.xlu0 %v414, 32
        %v507 = vpop.permute.xlu0 %506
        %v509 = vsel %vm176, %v507, 0
        %511 = vmatprep.subr.bf16.mxu0 0
        %512 = vmatpush1.bf16.msra.mxu0 %v165
        %513 = vmatprep.subr.bf16.mxu0 0
        %514 = vmatpush1.bf16.msra.mxu0 %v166
        %515 = vmatprep.subr.bf16.mxu0 0
        %516 = vmatpush1.bf16.msra.mxu0 0
        %517 = vmatprep.subr.bf16.mxu0 0
        %518 = vmatpush1.bf16.msra.mxu0 0
        %519 = vmatprep.subr.bf16.mxu0 0
        %520 = vmatpush1.bf16.msra.mxu0 0
        %521 = vmatprep.subr.bf16.mxu0 0
        %522 = vmatpush1.bf16.msra.mxu0 0
        %523 = vmatprep.subr.bf16.mxu0 0
        %524 = vmatpush1.bf16.msra.mxu0 0
        %525 = vmatprep.subr.bf16.mxu0 0
        %526 = vmatpush1.bf16.msra.mxu0 0
        %527 = vmatprep.subr.bf16.mxu0 0
        %528 = vmatpush1.bf16.msra.mxu0 0
        %529 = vmatprep.subr.bf16.mxu0 0
        %530 = vmatpush1.bf16.msra.mxu0 0
        %531 = vmatprep.subr.bf16.mxu0 0
        %532 = vmatpush1.bf16.msra.mxu0 0
        %533 = vmatprep.subr.bf16.mxu0 0
        %534 = vmatpush1.bf16.msra.mxu0 0
        %535 = vmatprep.subr.bf16.mxu0 0
        %536 = vmatpush1.bf16.msra.mxu0 0
        %537 = vmatprep.subr.bf16.mxu0 0
        %538 = vmatpush1.bf16.msra.mxu0 0
        %539 = vmatprep.subr.bf16.mxu0 0
        %540 = vmatpush1.bf16.msra.mxu0 0
        %541 = vmatprep.subr.bf16.mxu0 0
        %542 = vmatpush1.bf16.msra.mxu0 0
        %543 = vmatprep.mubr.bf16.mxu0 0
        %544 = vmatmul.mubr.bf16.gmra.mrb[0].mxu0 %v509
        %v545 = vpop.f32.mrb[0].mxu0
        %v546 = vadd.f32 0.0, %v545
        %v547 = vpop.f32.mrb[0].mxu0
        %v548 = vpop.f32.mrb[0].mxu0
        %v549 = vpop.f32.mrb[0].mxu0
        %550 = vdwg.mxu0
        %v551 = vadd.f32 %v505, %v546
        %v552 = vxor.u32 %v551, 2147483648
        %v553 = vmul.f32 %v552, 1.442695
        %v554 = vpow.pop %v553
        %v555 = vadd.f32 %v554, 1.0
        %v556 = vrcp.pop %v555
        %v557 = vmul.f32 1.0, %v556
        %v558 = vtanh.pop %v551
        %v559 = vmul.f32 %v557, %v407
        %561 = vrot.lane.b32.xlu0 %v558, 64
        %v562 = vpop.permute.xlu0 %561
        %v564 = vmul.f32 %v557, %v562
        %566 = vrot.lane.b32.xlu0 %v564, 32
        %v567 = vpop.permute.xlu0 %566
        %v569 = vadd.f32 %v559, %v567
        %v570 = vtanh.pop %v569
        %572 = vrot.lane.b32.xlu0 %v570, 64
        %v573 = vpop.permute.xlu0 %572
        %v575 = vmul.f32 %v557, %v573
        %v576 = vpack.c.bf16 %v575, %v575
        %v578 = vunpack.c.l.b16 %v576
        %v579 = vpack.c.b16 %v578, %v578
        %580 = vrot.lane.b32.xlu0 %v579, 32
        %v581 = vpop.permute.xlu0 %580
        %s583 = scalar_lea.vmem %s136, 16 [#allocation9]
        %584 = vst.msk [vmem:[%s583] sm:$0xf] %vm256, %v581
        %v585 = vld [vmem:[%s503 + $0x4] sm:$0xf]
        %v586 = vunpack.c.l.bf16 %v585
        %587 = vrot.lane.b32.xlu0 %v495, 32
        %v588 = vpop.permute.xlu0 %587
        %v590 = vsel %vm176, %v588, 0
        %592 = vmatprep.subr.bf16.mxu0 0
        %593 = vmatpush1.bf16.msra.mxu0 %v165
        %594 = vmatprep.subr.bf16.mxu0 0
        %595 = vmatpush1.bf16.msra.mxu0 %v166
        %596 = vmatprep.subr.bf16.mxu0 0
        %597 = vmatpush1.bf16.msra.mxu0 0
        %598 = vmatprep.subr.bf16.mxu0 0
        %599 = vmatpush1.bf16.msra.mxu0 0
        %600 = vmatprep.subr.bf16.mxu0 0
        %601 = vmatpush1.bf16.msra.mxu0 0
        %602 = vmatprep.subr.bf16.mxu0 0
        %603 = vmatpush1.bf16.msra.mxu0 0
        %604 = vmatprep.subr.bf16.mxu0 0
        %605 = vmatpush1.bf16.msra.mxu0 0
        %606 = vmatprep.subr.bf16.mxu0 0
        %607 = vmatpush1.bf16.msra.mxu0 0
        %608 = vmatprep.subr.bf16.mxu0 0
        %609 = vmatpush1.bf16.msra.mxu0 0
        %610 = vmatprep.subr.bf16.mxu0 0
        %611 = vmatpush1.bf16.msra.mxu0 0
        %612 = vmatprep.subr.bf16.mxu0 0
        %613 = vmatpush1.bf16.msra.mxu0 0
        %614 = vmatprep.subr.bf16.mxu0 0
        %615 = vmatpush1.bf16.msra.mxu0 0
        %616 = vmatprep.subr.bf16.mxu0 0
        %617 = vmatpush1.bf16.msra.mxu0 0
        %618 = vmatprep.subr.bf16.mxu0 0
        %619 = vmatpush1.bf16.msra.mxu0 0
        %620 = vmatprep.subr.bf16.mxu0 0
        %621 = vmatpush1.bf16.msra.mxu0 0
        %622 = vmatprep.subr.bf16.mxu0 0
        %623 = vmatpush1.bf16.msra.mxu0 0
        %624 = vmatprep.mubr.bf16.mxu0 0
        %625 = vmatmul.mubr.bf16.gmra.mrb[0].mxu0 %v590
        %v626 = vpop.f32.mrb[0].mxu0
        %v627 = vadd.f32 0.0, %v626
        %v628 = vpop.f32.mrb[0].mxu0
        %v629 = vpop.f32.mrb[0].mxu0
        %v630 = vpop.f32.mrb[0].mxu0
        %631 = vdwg.mxu0
        %v632 = vadd.f32 %v586, %v627
        %v633 = vxor.u32 %v632, 2147483648
        %v634 = vmul.f32 %v633, 1.442695
        %v635 = vpow.pop %v634
        %v636 = vadd.f32 %v635, 1.0
        %v637 = vrcp.pop %v636
        %v638 = vmul.f32 1.0, %v637
        %v639 = vtanh.pop %v632
        %v640 = vmul.f32 %v638, %v488
        %642 = vrot.lane.b32.xlu0 %v639, 64
        %v643 = vpop.permute.xlu0 %642
        %v645 = vmul.f32 %v638, %v643
        %647 = vrot.lane.b32.xlu0 %v645, 32
        %v648 = vpop.permute.xlu0 %647
        %v650 = vadd.f32 %v640, %v648
        %v651 = vtanh.pop %v650
        %653 = vrot.lane.b32.xlu0 %v651, 64
        %v654 = vpop.permute.xlu0 %653
        %v656 = vmul.f32 %v638, %v654
        %v657 = vpack.c.bf16 %v656, %v656
        %v659 = vunpack.c.l.b16 %v657
        %v660 = vpack.c.b16 %v659, %v659
        %661 = vrot.lane.b32.xlu0 %v660, 32
        %v662 = vpop.permute.xlu0 %661
        %664 = vst.msk [vmem:[%s583 + $0x4] sm:$0xf] %vm256, %v662
        %s665 = scalar_lea.vmem %s118, 24 [#allocation6]
        %v666 = vld [vmem:[%s665] sm:$0xf]
        %v667 = vunpack.c.l.bf16 %v666
        %668 = vrot.lane.b32.xlu0 %v576, 32
        %v669 = vpop.permute.xlu0 %668
        %v671 = vsel %vm176, %v669, 0
        %673 = vmatprep.subr.bf16.mxu0 0
        %674 = vmatpush1.bf16.msra.mxu0 %v165
        %675 = vmatprep.subr.bf16.mxu0 0
        %676 = vmatpush1.bf16.msra.mxu0 %v166
        %677 = vmatprep.subr.bf16.mxu0 0
        %678 = vmatpush1.bf16.msra.mxu0 0
        %679 = vmatprep.subr.bf16.mxu0 0
        %680 = vmatpush1.bf16.msra.mxu0 0
        %681 = vmatprep.subr.bf16.mxu0 0
        %682 = vmatpush1.bf16.msra.mxu0 0
        %683 = vmatprep.subr.bf16.mxu0 0
        %684 = vmatpush1.bf16.msra.mxu0 0
        %685 = vmatprep.subr.bf16.mxu0 0
        %686 = vmatpush1.bf16.msra.mxu0 0
        %687 = vmatprep.subr.bf16.mxu0 0
        %688 = vmatpush1.bf16.msra.mxu0 0
        %689 = vmatprep.subr.bf16.mxu0 0
        %690 = vmatpush1.bf16.msra.mxu0 0
        %691 = vmatprep.subr.bf16.mxu0 0
        %692 = vmatpush1.bf16.msra.mxu0 0
        %693 = vmatprep.subr.bf16.mxu0 0
        %694 = vmatpush1.bf16.msra.mxu0 0
        %695 = vmatprep.subr.bf16.mxu0 0
        %696 = vmatpush1.bf16.msra.mxu0 0
        %697 = vmatprep.subr.bf16.mxu0 0
        %698 = vmatpush1.bf16.msra.mxu0 0
        %699 = vmatprep.subr.bf16.mxu0 0
        %700 = vmatpush1.bf16.msra.mxu0 0
        %701 = vmatprep.subr.bf16.mxu0 0
        %702 = vmatpush1.bf16.msra.mxu0 0
        %703 = vmatprep.subr.bf16.mxu0 0
        %704 = vmatpush1.bf16.msra.mxu0 0
        %705 = vmatprep.mubr.bf16.mxu0 0
        %706 = vmatmul.mubr.bf16.gmra.mrb[0].mxu0 %v671
        %v707 = vpop.f32.mrb[0].mxu0
        %v708 = vadd.f32 0.0, %v707
        %v709 = vpop.f32.mrb[0].mxu0
        %v710 = vpop.f32.mrb[0].mxu0
        %v711 = vpop.f32.mrb[0].mxu0
        %712 = vdwg.mxu0
        %v713 = vadd.f32 %v667, %v708
        %v714 = vxor.u32 %v713, 2147483648
        %v715 = vmul.f32 %v714, 1.442695
        %v716 = vpow.pop %v715
        %v717 = vadd.f32 %v716, 1.0
        %v718 = vrcp.pop %v717
        %v719 = vmul.f32 1.0, %v718
        %v720 = vtanh.pop %v713
        %v721 = vmul.f32 %v719, %v569
        %723 = vrot.lane.b32.xlu0 %v720, 64
        %v724 = vpop.permute.xlu0 %723
        %v726 = vmul.f32 %v719, %v724
        %728 = vrot.lane.b32.xlu0 %v726, 32
        %v729 = vpop.permute.xlu0 %728
        %v731 = vadd.f32 %v721, %v729
        %v732 = vtanh.pop %v731
        %734 = vrot.lane.b32.xlu0 %v732, 64
        %v735 = vpop.permute.xlu0 %734
        %v737 = vmul.f32 %v719, %v735
        %v738 = vpack.c.bf16 %v737, %v737
        %v740 = vunpack.c.l.b16 %v738
        %v741 = vpack.c.b16 %v740, %v740
        %742 = vrot.lane.b32.xlu0 %v741, 32
        %v743 = vpop.permute.xlu0 %742
        %s745 = scalar_lea.vmem %s136, 24 [#allocation9]
        %746 = vst.msk [vmem:[%s745] sm:$0xf] %vm256, %v743
        %v747 = vld [vmem:[%s665 + $0x4] sm:$0xf]
        %v748 = vunpack.c.l.bf16 %v747
        %749 = vrot.lane.b32.xlu0 %v657, 32
        %v750 = vpop.permute.xlu0 %749
        %v752 = vsel %vm176, %v750, 0
        %754 = vmatprep.subr.bf16.mxu0 0
        %755 = vmatpush1.bf16.msra.mxu0 %v165
        %756 = vmatprep.subr.bf16.mxu0 0
        %757 = vmatpush1.bf16.msra.mxu0 %v166
        %758 = vmatprep.subr.bf16.mxu0 0
        %759 = vmatpush1.bf16.msra.mxu0 0
        %760 = vmatprep.subr.bf16.mxu0 0
        %761 = vmatpush1.bf16.msra.mxu0 0
        %762 = vmatprep.subr.bf16.mxu0 0
        %763 = vmatpush1.bf16.msra.mxu0 0
        %764 = vmatprep.subr.bf16.mxu0 0
        %765 = vmatpush1.bf16.msra.mxu0 0
        %766 = vmatprep.subr.bf16.mxu0 0
        %767 = vmatpush1.bf16.msra.mxu0 0
        %768 = vmatprep.subr.bf16.mxu0 0
        %769 = vmatpush1.bf16.msra.mxu0 0
        %770 = vmatprep.subr.bf16.mxu0 0
        %771 = vmatpush1.bf16.msra.mxu0 0
        %772 = vmatprep.subr.bf16.mxu0 0
        %773 = vmatpush1.bf16.msra.mxu0 0
        %774 = vmatprep.subr.bf16.mxu0 0
        %775 = vmatpush1.bf16.msra.mxu0 0
        %776 = vmatprep.subr.bf16.mxu0 0
        %777 = vmatpush1.bf16.msra.mxu0 0
        %778 = vmatprep.subr.bf16.mxu0 0
        %779 = vmatpush1.bf16.msra.mxu0 0
        %780 = vmatprep.subr.bf16.mxu0 0
        %781 = vmatpush1.bf16.msra.mxu0 0
        %782 = vmatprep.subr.bf16.mxu0 0
        %783 = vmatpush1.bf16.msra.mxu0 0
        %784 = vmatprep.subr.bf16.mxu0 0
        %785 = vmatpush1.bf16.msra.mxu0 0
        %786 = vmatprep.mubr.bf16.mxu0 0
        %787 = vmatmul.mubr.bf16.gmra.mrb[0].mxu0 %v752
        %v788 = vpop.f32.mrb[0].mxu0
        %v789 = vadd.f32 0.0, %v788
        %v790 = vpop.f32.mrb[0].mxu0
        %v791 = vpop.f32.mrb[0].mxu0
        %v792 = vpop.f32.mrb[0].mxu0
        %793 = vdwg.mxu0
        %v794 = vadd.f32 %v748, %v789
        %v795 = vxor.u32 %v794, 2147483648
        %v796 = vmul.f32 %v795, 1.442695
        %v797 = vpow.pop %v796
        %v798 = vadd.f32 %v797, 1.0
        %v799 = vrcp.pop %v798
        %v800 = vmul.f32 1.0, %v799
        %v801 = vtanh.pop %v794
        %v802 = vmul.f32 %v800, %v650
        %804 = vrot.lane.b32.xlu0 %v801, 64
        %v805 = vpop.permute.xlu0 %804
        %v807 = vmul.f32 %v800, %v805
        %809 = vrot.lane.b32.xlu0 %v807, 32
        %v810 = vpop.permute.xlu0 %809
        %v812 = vadd.f32 %v802, %v810
        %v813 = vtanh.pop %v812
        %815 = vrot.lane.b32.xlu0 %v813, 64
        %v816 = vpop.permute.xlu0 %815
        %v818 = vmul.f32 %v800, %v816
        %v819 = vpack.c.bf16 %v818, %v818
        %v821 = vunpack.c.l.b16 %v819
        %v822 = vpack.c.b16 %v821, %v821
        %823 = vrot.lane.b32.xlu0 %v822, 32
        %v824 = vpop.permute.xlu0 %823
        %826 = vst.msk [vmem:[%s745 + $0x4] sm:$0xf] %vm256, %v824
        %828 = vrot.lane.b32.xlu0 %v737, 32
        %v829 = vpop.permute.xlu0 %828
        %831 = vst.msk [vmem:[#allocation4] sm:$0xff] %vm176, %v829
        %833 = vrot.lane.b32.xlu0 %v731, 96
        %v834 = vpop.permute.xlu0 %833
        %836 = vst.msk [vmem:[#allocation5] sm:$0xff] %vm176, %v834
        %838 = vrot.lane.b32.xlu0 %v818, 32
        %v839 = vpop.permute.xlu0 %838
        %841 = vst.msk [vmem:[%s169] sm:$0xff] %vm176, %v839
        %843 = vrot.lane.b32.xlu0 %v812, 96
        %v844 = vpop.permute.xlu0 %843
        %846 = vst.msk [vmem:[%s171] sm:$0xff] %vm176, %v844
        %s847 = sand.u32 %s53, 1
        %s848 = scalar_lea.sflag [#allocation8], %s847
        %s849 = sand.u32 %s53, 1
        %s850 = smul.addr %s849, 32
        %s851 = scalar_lea.vmem [#allocation9], %s850
        // Predicated region
        $region37: #{encoder_forward.5} parent=23 // pred_check
          %p852 = pneg %p63
        $region38: #{encoder_forward.5} parent=23 // pred_check_branch
          %854 = sbr.rel (%p852) target = $region40
        $region39: #{encoder_forward.5} parent=23 // pred_region
          %s855 = smul.u32 4, %s19
          %s857 = ssub.s32 512, 512
          %858 = vsyncadd %s848, %s857
          %s859 = smul.addr %s855, 2
          %s860 = smul.addr %s859, 64
          %s861 = scalar_lea.hbm %s2, %s860
          %s862 = sshll.u32 %s851, 4
          %s863 = int_to_ptr.vmem [resolvable:$true] %s862
          %868 = dma.vmem_to_hbm [thread:$0]  %s863, 512, %s861, %s848, 64, 64, 4
        $region40: #{encoder_forward.5} parent=23 // pred_fallthru
          _
      $region24: #{encoder_forward.5} parent=5 // pred_fallthru
        _
      %p869 = scmp.le.s32.totalorder 2, %s14
      // Predicated region
      $region41: #{encoder_forward.5} parent=5 // pred_check
        %p870 = pneg %p869
      $region42: #{encoder_forward.5} parent=5 // pred_check_branch
        %872 = sbr.rel (%p870) target = $region44
      $region43: #{encoder_forward.5} parent=5 // pred_region
        %s873 = ssub.s32 %s14, 2
        // Predicated region
        $region45: #{encoder_forward.5} parent=43 // pred_check
          %p874 = pneg %p69
        $region46: #{encoder_forward.5} parent=43 // pred_check_branch
          %876 = sbr.rel (%p874) target = $region48
        $region47: #{encoder_forward.5} parent=43 // pred_region
          %s877 = sand.u32 %s54, 1
          %s878 = scalar_lea.sflag [#allocation8], %s877
          %s879 = sand.u32 %s54, 1
          %s880 = smul.addr %s879, 32
          %s881 = scalar_lea.vmem [#allocation9], %s880
          %882 = dma.done %s878, 512
        $region48: #{encoder_forward.5} parent=43 // pred_fallthru
          _
      $region44: #{encoder_forward.5} parent=5 // pred_fallthru
        _
    $region6: #{encoder_forward.5} parent=1 // loop_footer
      %s18 = sadd.s32 1, %s14
    $region7: #{encoder_forward.5} parent=1 // loop_footer_branch
      %13 = sbr.rel target = $region3
    $region8: #{encoder_forward.5} parent=1 // loop_exit
      _
    %883 = vsyncpa [#allocation7], 1
    %s884 = scalar_lea.sflag [#allocation7], 1
    %885 = vsyncpa %s884, 1
    %886 = vsyncpa [#allocation8], 1
    %s887 = scalar_lea.sflag [#allocation8], 1
    %888 = vsyncpa %s887, 1
  %889 = vsyncmov [#allocation3]
  %s890 = vpop.sfrf %889
  %p891 = scmp.eq.s32.totalorder %s890, 0
  %p892 = pneg %p891
  %894 = shalt.err (%p892)

// kernel: encoder_forward.4
$region0: #{encoder_forward.4}
  #allocation0 [shape = 'u32[]', space=smem, size = 0x4, offset = 0x4, fixed_abs, tag = 'smem constant byte address 0x4 - core index']
  #allocation1 [shape = 'u32[144,128]{1,0:T(1,128)}', space=vmem, size = 0x12000, scoped, tag = 'internal scratch']
  #allocation2 [shape = 'bf16[2,32,128]{2,1,0:T(16,128)(2,1)}', space=vmem, size = 0x4000, scoped, tag = 'scratch operand']
  #allocation3 [shape = 's32[1]{0}', space=sflag, size = 0x4, scoped, tag = 'scratch operand']
  #allocation4 [shape = 'f32[2,16,32]{2,1,0:T(8,128)}', space=vmem, size = 0x4000, scoped, tag = 'scratch operand']
  #allocation5 [shape = 'f32[2,16,32]{2,1,0:T(8,128)}', space=vmem, size = 0x4000, scoped, tag = 'scratch operand']
  #allocation12 [shape = 's32[]', space=sflag, size = 0x4, offset = 0, fixed_abs, tag = 'sflag constant byte address 0x0 - dummy sync flag']
  #allocation14 [shape = 's32[]', space=sflag, size = 0x4, offset = 0, fixed_abs, tag = 'sflag constant byte address 0x0 - dummy sync flag']
  #allocation15 [shape = 's32[]', space=sflag, size = 0x4, offset = 0, fixed_abs, tag = 'sflag constant byte address 0x0 - dummy sync flag']
  #allocation16 [shape = 'u32[]', space=smem, size = 0x4, offset = 0x44, fixed_abs, tag = 'smem constant byte address 0x44 - assertion arg 0']
  #allocation17 [shape = 'u32[]', space=smem, size = 0x4, offset = 0x48, fixed_abs, tag = 'smem constant byte address 0x48 - assertion arg 1']
  #allocation18 [shape = 's32[]', space=sflag, size = 0x4, offset = 0, fixed_abs, tag = 'sflag constant byte address 0x0 - dummy sync flag']
  %s0 = inlined_call_operand.hbm [shape: bf16[2,8,16,128], index: 0, kind: input, shape index: {}]
  %s1 = inlined_call_operand.hbm [shape: bf16[2,32,128], index: 1, kind: input, shape index: {}]
  %s2 = inlined_call_operand.hbm [shape: s32[16,1], index: 2, kind: input, shape index: {}]
  %s3 = inlined_call_operand.hbm [shape: bf16[2,8,16,32], index: 3, kind: output, shape index: {}]
  %s4 = sld [smem:[#allocation0]]
  $region57: #{encoder_forward.4} parent=0
    _
  %s6 = ssub.s32 1, %s4
  %s7 = scalar_select 0, %s6, %s4
  $region1: #{encoder_forward.4} parent=0
    #allocation6 [shape = 'u8[65536]{0}', space=vmem, size = 0x10000, scoped, tag = 'input window, operand 0']
    #allocation7 [shape = 's32[2]{0}', space=sflag, size = 0x8, scoped, tag = 'scoped memory for encoder_forward.4']
    #allocation8 [shape = 's32[2]{0}', space=sflag, size = 0x8, scoped, tag = 'scoped memory for encoder_forward.4']
    #allocation9 [shape = 'u8[8192]{0}', space=vmem, size = 0x2000, scoped, tag = 'input window, operand 2, single buffered']
    #allocation10 [shape = 's32[1]{0}', space=sflag, size = 0x4, scoped, tag = 'scoped memory for encoder_forward.4']
    #allocation11 [shape = 'u8[65536]{0}', space=vmem, size = 0x10000, scoped, tag = 'output window, operand 0']
    %8 = vsyncpa [#allocation7], 0
    %s9 = scalar_lea.sflag [#allocation7], 1
    %10 = vsyncpa %s9, 0
    %11 = vsyncpa [#allocation10], 0
    %12 = vsyncpa [#allocation8], 0
    %s13 = scalar_lea.sflag [#allocation8], 1
    %14 = vsyncpa %s13, 0
    loop: start=0, step=1, limit=4
    $region2: #{encoder_forward.4} parent=1 // loop_pre_header
      _
    $region3: #{encoder_forward.4} parent=1 // loop_header
      %s16 = sphi 0, %s20
      %p17 = scmp.ge.s32.totalorder %s16, 4
      %s26 = sphi 0, %s28
      %s29 = sphi 0, %s26
      %s30 = sphi 0, %s29
      %s46 = sphi 0, %s30
      %s50 = sphi 0, %s50
      %s52 = sphi 0, %s50
      %s53 = sphi 0, %s52
      %s67 = sphi 0, %s53
      %s73 = sphi 0, %s75
      %s76 = sphi 0, %s73
      %s77 = sphi 0, %s76
      %s93 = sphi 0, %s77
    $region4: #{encoder_forward.4} parent=1 // loop_header_branch
      %19 = sbr.rel (%p17) target = $region8
    $region5: #{encoder_forward.4} parent=1 // loop_body
      %s21 = ssub.s32 %s16, 1
      %s22 = ssub.s32 %s16, 2
      %s23 = sadd.s32 %s16, 1
      %s24 = ssub.s32 %s16, %s23
      %p25 = scmp.eq.s32.totalorder %s24, 0
      %s27 = sadd.s32 %s26, 1
      %s28 = scalar_select %p25, %s26, %s27
      %p31 = pneg %p25
      %p32 = scmp.eq.s32.totalorder %s16, 1
      %p33 = por %p31, %p32
      %p34 = scmp.ne.s32.totalorder %s26, %s29
      %p35 = scmp.eq.s32.totalorder %s16, 0
      %p36 = por %p34, %p35
      %p37 = scmp.ne.s32.totalorder %s26, %s29
      %p38 = scmp.eq.s32.totalorder %s21, 1
      %p39 = por %p37, %p38
      %p40 = scmp.ne.s32.totalorder %s29, %s30
      %p41 = scmp.eq.s32.totalorder %s21, 0
      %p42 = por %p40, %p41
      %p43 = scmp.ne.s32.totalorder %s29, %s30
      %p44 = scmp.eq.s32.totalorder %s22, 1
      %p45 = por %p43, %p44
      %p47 = scmp.ne.s32.totalorder %s30, %s46
      %p48 = scmp.eq.s32.totalorder %s22, 0
      %p49 = por %p47, %p48
      %s51 = sadd.s32 %s50, 1
      %p54 = scmp.eq.s32.totalorder %s16, 1
      %p55 = scmp.ne.s32.totalorder %s50, %s52
      %p56 = scmp.eq.s32.totalorder %s16, 0
      %p57 = por %p55, %p56
      %p58 = scmp.ne.s32.totalorder %s50, %s52
      %p59 = scmp.eq.s32.totalorder %s21, 1
      %p60 = por %p58, %p59
      %p61 = scmp.ne.s32.totalorder %s52, %s53
      %p62 = scmp.eq.s32.totalorder %s21, 0
      %p63 = por %p61, %p62
      %p64 = scmp.ne.s32.totalorder %s52, %s53
      %p65 = scmp.eq.s32.totalorder %s22, 1
      %p66 = por %p64, %p65
      %p68 = scmp.ne.s32.totalorder %s53, %s67
      %p69 = scmp.eq.s32.totalorder %s22, 0
      %p70 = por %p68, %p69
      %s71 = ssub.s32 %s16, %s23
      %p72 = scmp.eq.s32.totalorder %s71, 0
      %s74 = sadd.s32 %s73, 1
      %s75 = scalar_select %p72, %s73, %s74
      %p78 = pneg %p72
      %p79 = scmp.eq.s32.totalorder %s16, 1
      %p80 = por %p78, %p79
      %p81 = scmp.ne.s32.totalorder %s73, %s76
      %p82 = scmp.eq.s32.totalorder %s16, 0
      %p83 = por %p81, %p82
      %p84 = scmp.ne.s32.totalorder %s73, %s76
      %p85 = scmp.eq.s32.totalorder %s21, 1
      %p86 = por %p84, %p85
      %p87 = scmp.ne.s32.totalorder %s76, %s77
      %p88 = scmp.eq.s32.totalorder %s21, 0
      %p89 = por %p87, %p88
      %p90 = scmp.ne.s32.totalorder %s76, %s77
      %p91 = scmp.eq.s32.totalorder %s22, 1
      %p92 = por %p90, %p91
      %p94 = scmp.ne.s32.totalorder %s77, %s93
      %p95 = scmp.eq.s32.totalorder %s22, 0
      %p96 = por %p94, %p95
      %p97 = scmp.le.s32.totalorder 1, %s16
      %p98 = scmp.lt.s32.totalorder %s16, 3
      %p99 = pnand %p97, %p98
      %p100 = pneg %p99
      // Predicated region
      $region9: #{encoder_forward.4} parent=5 // pred_check
        _
      $region10: #{encoder_forward.4} parent=5 // pred_check_branch
        %102 = sbr.rel (%p99) target = $region12
      $region11: #{encoder_forward.4} parent=5 // pred_region
        %s103 = ssub.s32 %s16, 1
        // Predicated region
        $region13: #{encoder_forward.4} parent=11 // pred_check
          %p104 = pneg %p63
        $region14: #{encoder_forward.4} parent=11 // pred_check_branch
          %106 = sbr.rel (%p104) target = $region16
        $region15: #{encoder_forward.4} parent=11 // pred_region
          %s108 = ssub.s32 256, 256
          %109 = vsyncadd [#allocation10], %s108
          %s110 = sshll.u32 [#allocation9], 4
          %s111 = int_to_ptr.vmem [resolvable:$true] %s110
          %116 = dma.hbm_to_vmem [thread:$0]  %s2, 256, %s111, [#allocation10], 128, 128, 8
        $region16: #{encoder_forward.4} parent=11 // pred_fallthru
          _
      $region12: #{encoder_forward.4} parent=5 // pred_fallthru
        _
      %p117 = scmp.lt.s32.totalorder %s16, 2
      // Predicated region
      $region17: #{encoder_forward.4} parent=5 // pred_check
        %p118 = pneg %p117
      $region18: #{encoder_forward.4} parent=5 // pred_check_branch
        %120 = sbr.rel (%p118) target = $region20
      $region19: #{encoder_forward.4} parent=5 // pred_region
        // Predicated region
        $region21: #{encoder_forward.4} parent=19 // pred_check
          %p121 = pneg %p36
        $region22: #{encoder_forward.4} parent=19 // pred_check_branch
          %123 = sbr.rel (%p121) target = $region24
        $region23: #{encoder_forward.4} parent=19 // pred_region
          #allocation13 [shape = 'u32[6]{0}', space=smem, size = 0x18, scoped, tag = 'DMA stride descriptor']
          %s124 = sand.u32 %s26, 1
          %s125 = scalar_lea.sflag [#allocation7], %s124
          %s126 = sand.u32 %s26, 1
          %s127 = smul.addr %s126, 64
          %s128 = scalar_lea.vmem [#allocation6], %s127
          %s129 = smul.u32 4, %s16
          %s131 = ssub.s32 1024, 1024
          %132 = vsyncadd %s125, %s131
          %s133 = smul.addr %s129, 2
          %s134 = smul.addr %s133, 64
          %s135 = scalar_lea.hbm %s0, %s134
          %s137 = sshll.u32 1, 14
          %s138 = sxor.u32 4294967295, %s137
          %s140 = sld [smem:[#allocation0]]
          %s141 = sadd.s32 2, %s140
          %s143 = sshll.u32 7, 26
          %s144 = sxor.u32 4294967295, %s143
          %s145 = sand.u32 0, %s144
          %s146 = sshll.u32 %s141, 26
          %s147 = sor.u32 %s145, %s146
          %s148 = sshll.u32 %s128, 4
          %s149 = int_to_ptr.vmem [resolvable:$true] %s148
          %155 = sst [smem:[#allocation13]] 1024
          %s156 = scalar_lea.smem [#allocation13], 1
          %157 = sst [smem:[%s156]] 512
          %s158 = scalar_lea.smem [#allocation13], 2
          %159 = sst [smem:[%s158]] 8
          %s160 = scalar_lea.smem [#allocation13], 3
          %161 = sst [smem:[%s160]] 64
          %s162 = scalar_lea.smem [#allocation13], 4
          %163 = sst [smem:[%s162]] 64
          %s164 = scalar_lea.smem [#allocation13], 5
          %165 = sst [smem:[%s164]] 4
          %167 = dma.general %s135, 1024, %s149, %s125, [#allocation12], [#allocation13], %s147, 0
        $region24: #{encoder_forward.4} parent=19 // pred_fallthru
          _
      $region20: #{encoder_forward.4} parent=5 // pred_fallthru
        _
      %p168 = scmp.le.s32.totalorder 1, %s16
      %p169 = scmp.lt.s32.totalorder %s16, 3
      %p170 = pnand %p168, %p169
      %p171 = pneg %p170
      // Predicated region
      $region25: #{encoder_forward.4} parent=5 // pred_check
        _
      $region26: #{encoder_forward.4} parent=5 // pred_check_branch
        %173 = sbr.rel (%p170) target = $region28
      $region27: #{encoder_forward.4} parent=5 // pred_region
        %s174 = ssub.s32 %s16, 1
        %s175 = sand.u32 %s29, 1
        %s176 = scalar_lea.sflag [#allocation7], %s175
        %s177 = sand.u32 %s29, 1
        %s178 = smul.addr %s177, 64
        %s179 = scalar_lea.vmem [#allocation6], %s178
        // Predicated region
        $region29: #{encoder_forward.4} parent=27 // pred_check
          %p180 = pneg %p42
        $region30: #{encoder_forward.4} parent=27 // pred_check_branch
          %182 = sbr.rel (%p180) target = $region32
        $region31: #{encoder_forward.4} parent=27 // pred_region
          %183 = dma.done %s176, 1024
        $region32: #{encoder_forward.4} parent=27 // pred_fallthru
          _
        // Predicated region
        $region33: #{encoder_forward.4} parent=27 // pred_check
          %p184 = pneg %p63
        $region34: #{encoder_forward.4} parent=27 // pred_check_branch
          %186 = sbr.rel (%p184) target = $region36
        $region35: #{encoder_forward.4} parent=27 // pred_region
          %187 = dma.done [#allocation10], 256
        $region36: #{encoder_forward.4} parent=27 // pred_fallthru
          _
        %s188 = sand.u32 %s29, 1
        %s189 = scalar_lea.sflag [#allocation7], %s188
        %s190 = sand.u32 %s29, 1
        %s191 = smul.addr %s190, 64
        %s192 = scalar_lea.vmem [#allocation6], %s191
        %p193 = pneg %p42
        %p194 = pneg %p39
        %p195 = pneg %p63
        %p196 = pneg %p60
        %p197 = pneg %p89
        %p198 = pneg %p86
        %s199 = sand.u32 %s76, 1
        %s200 = scalar_lea.sflag [#allocation8], %s199
        %s201 = sand.u32 %s76, 1
        %s202 = smul.addr %s201, 64
        %s203 = scalar_lea.vmem [#allocation11], %s202
        %s204 = smul.u32 4, %s21
        %s205 = smul.u32 4, %s21
        %p207 = scmp.eq.s32.totalorder %s21, 0
        // Predicated region
        $region37: #{encoder_forward.4} parent=27 // pred_check
          %p208 = pneg %p207
        $region38: #{encoder_forward.4} parent=27 // pred_check_branch
          %210 = sbr.rel (%p208) target = $region40
        $region39: #{encoder_forward.4} parent=27 // pred_region
          // Predicated region
          $region41: #{encoder_forward.4} parent=39 // pred_check
            _
          $region42: #{encoder_forward.4} parent=39 // pred_check_branch
            %212 = sbr.rel target = $region44
          $region43: #{encoder_forward.4} parent=39 // pred_region
            %213 = sst [smem:[#allocation16]] [#allocation15]
            %214 = sst [smem:[#allocation17]] [#allocation14]
          $region44: #{encoder_forward.4} parent=39 // pred_fallthru
            _
          %216 = shalt.err (0)
          %s218 = sshll.u32 [#allocation2], 4
          %s219 = int_to_ptr.vmem [resolvable:$true] %s218
          %221 = dma.hbm_to_vmem [thread:$0]  %s1, 512, %s219, [#allocation3]
          %s222 = smul.u32 4, 2
          %s223 = smul.u32 %s222, 4
          %s224 = smul.u32 %s223, 1
          %s225 = sshll.u32 %s224, 4
          %226 = dma.done [#allocation3], %s225
          %vm227 = vcmask 261120
          %228 = vst.msk [vmem:[#allocation4] sm:$0xff] %vm227, 0.0
          %229 = vst.msk [vmem:[#allocation4 + $0x8] sm:$0xff] %vm227, 0.0
          %230 = vst.msk [vmem:[#allocation4 + $0x10] sm:$0xff] %vm227, 0.0
          %231 = vst.msk [vmem:[#allocation4 + $0x18] sm:$0xff] %vm227, 0.0
          %232 = vst.msk [vmem:[#allocation5] sm:$0xff] %vm227, 0.0
          %233 = vst.msk [vmem:[#allocation5 + $0x8] sm:$0xff] %vm227, 0.0
          %234 = vst.msk [vmem:[#allocation5 + $0x10] sm:$0xff] %vm227, 0.0
          %235 = vst.msk [vmem:[#allocation5 + $0x18] sm:$0xff] %vm227, 0.0
        $region40: #{encoder_forward.4} parent=27 // pred_fallthru
          _
        %s236 = smul.u32 %s21, 4
        %v237 = vld [vmem:[#allocation2] sm:$0xff]
        %v238 = vld [vmem:[#allocation2 + $0x8] sm:$0xff]
        %s239 = scalar_lea.vmem [#allocation2], 16
        %v240 = vld [vmem:[%s239] sm:$0xff]
        %v241 = vld [vmem:[%s239 + $0x8] sm:$0xff]
        %v242 = vld [vmem:[#allocation9] sm:$0xff]
        %v243 = vld [vmem:[#allocation9 + $0x8] sm:$0xff]
        %v244 = vld [vmem:[#allocation4] sm:$0xff]
        %v245 = vld [vmem:[#allocation4 + $0x8] sm:$0xff]
        %v246 = vld [vmem:[#allocation5] sm:$0xff]
        %v247 = vld [vmem:[#allocation5 + $0x8] sm:$0xff]
        %s248 = scalar_lea.vmem [#allocation4], 16
        %v249 = vld [vmem:[%s248] sm:$0xff]
        %v250 = vld [vmem:[%s248 + $0x8] sm:$0xff]
        %s251 = scalar_lea.vmem [#allocation5], 16
        %v252 = vld [vmem:[%s251] sm:$0xff]
        %v253 = vld [vmem:[%s251 + $0x8] sm:$0xff]
        %v254 = vld [vmem:[%s179] sm:$0xf]
        %v255 = vld [vmem:[%s179 + $0x4] sm:$0xf]
        %v256 = vunpack.c.l.bf16 %v254
        %v257 = vunpack.c.l.bf16 %v255
        %v258 = vpack.c.bf16 %v245, %v244
        %vm259 = vcmask 261120
        %v261 = vsel %vm259, %v258, 0
        %263 = vmatprep.subr.bf16.mxu0 0
        %264 = vmatpush1.bf16.msra.mxu0 %v237
        %265 = vmatprep.subr.bf16.mxu0 0
        %266 = vmatpush1.bf16.msra.mxu0 %v238
        %267 = vmatprep.subr.bf16.mxu0 0
        %268 = vmatpush1.bf16.msra.mxu0 0
        %269 = vmatprep.subr.bf16.mxu0 0
        %270 = vmatpush1.bf16.msra.mxu0 0
        %271 = vmatprep.subr.bf16.mxu0 0
        %272 = vmatpush1.bf16.msra.mxu0 0
        %273 = vmatprep.subr.bf16.mxu0 0
        %274 = vmatpush1.bf16.msra.mxu0 0
        %275 = vmatprep.subr.bf16.mxu0 0
        %276 = vmatpush1.bf16.msra.mxu0 0
        %277 = vmatprep.subr.bf16.mxu0 0
        %278 = vmatpush1.bf16.msra.mxu0 0
        %279 = vmatprep.subr.bf16.mxu0 0
        %280 = vmatpush1.bf16.msra.mxu0 0
        %281 = vmatprep.subr.bf16.mxu0 0
        %282 = vmatpush1.bf16.msra.mxu0 0
        %283 = vmatprep.subr.bf16.mxu0 0
        %284 = vmatpush1.bf16.msra.mxu0 0
        %285 = vmatprep.subr.bf16.mxu0 0
        %286 = vmatpush1.bf16.msra.mxu0 0
        %287 = vmatprep.subr.bf16.mxu0 0
        %288 = vmatpush1.bf16.msra.mxu0 0
        %289 = vmatprep.subr.bf16.mxu0 0
        %290 = vmatpush1.bf16.msra.mxu0 0
        %291 = vmatprep.subr.bf16.mxu0 0
        %292 = vmatpush1.bf16.msra.mxu0 0
        %293 = vmatprep.subr.bf16.mxu0 0
        %294 = vmatpush1.bf16.msra.mxu0 0
        %295 = vmatprep.mubr.bf16.mxu0 0
        %296 = vmatmul.mubr.bf16.gmra.mrb[0].mxu0 %v261
        %v297 = vpop.f32.mrb[0].mxu0
        %v298 = vadd.f32 0.0, %v297
        %v299 = vpop.f32.mrb[0].mxu0
        %v300 = vpop.f32.mrb[0].mxu0
        %v301 = vadd.f32 0.0, %v300
        %v302 = vpop.f32.mrb[0].mxu0
        %303 = vdwg.mxu0
        %v304 = vadd.f32 %v256, %v298
        %v305 = vadd.f32 %v257, %v301
        %v306 = vxor.u32 %v304, 2147483648
        %v307 = vxor.u32 %v305, 2147483648
        %v308 = vmul.f32 %v306, 1.442695
        %v309 = vpow.pop %v308
        %v310 = vmul.f32 %v307, 1.442695
        %v311 = vpow.pop %v310
        %v312 = vadd.f32 %v309, 1.0
        %v313 = vadd.f32 %v311, 1.0
        %v314 = vrcp.pop %v312
        %v315 = vmul.f32 1.0, %v314
        %v316 = vrcp.pop %v313
        %v317 = vmul.f32 1.0, %v316
        %v318 = vtanh.pop %v304
        %v319 = vtanh.pop %v305
        %322 = vrot.lane.b32.xlu0 %v246, 32
        %v323 = vpop.permute.xlu0 %322
        %324 = vrot.lane.b32.xlu0 %v247, 32
        %v325 = vpop.permute.xlu0 %324
        %v328 = vmul.f32 %v315, %v323
        %v329 = vmul.f32 %v317, %v325
        %332 = vrot.lane.b32.xlu0 %v318, 64
        %v333 = vpop.permute.xlu0 %332
        %334 = vrot.lane.b32.xlu0 %v319, 64
        %v335 = vpop.permute.xlu0 %334
        %v338 = vmul.f32 %v315, %v333
        %v339 = vmul.f32 %v317, %v335
        %342 = vrot.lane.b32.xlu0 %v338, 32
        %v343 = vpop.permute.xlu0 %342
        %344 = vrot.lane.b32.xlu0 %v339, 32
        %v345 = vpop.permute.xlu0 %344
        %v348 = vadd.f32 %v328, %v343
        %v349 = vadd.f32 %v329, %v345
        %v350 = vtanh.pop %v348
        %v351 = vtanh.pop %v349
        %354 = vrot.lane.b32.xlu0 %v350, 64
        %v355 = vpop.permute.xlu0 %354
        %356 = vrot.lane.b32.xlu0 %v351, 64
        %v357 = vpop.permute.xlu0 %356
        %v360 = vmul.f32 %v315, %v355
        %v361 = vmul.f32 %v317, %v357
        %v362 = vstv %s236
        %vm363 = vcmp.lt.s32.totalorder %v362, %v242
        %vm364 = vcmp.lt.s32.totalorder %v362, %v243
        %v365 = vsel %vm363, 1, 0
        %v366 = vsel %vm364, 1, 0
        %v367 = vcvt.s32.f32 %v365
        %v368 = vcvt.s32.f32 %v366
        %370 = vset.pattern.permute.xlu0 0
        %371 = vperm.xlu0 %370, %v367
        %v372 = vpop.permute.xlu0 %371
        %375 = vset.pattern.permute.xlu0 0
        %376 = vperm.xlu0 %375, %v368
        %v377 = vpop.permute.xlu0 %376
        %v379 = vmul.f32 %v360, %v372
        %v380 = vmul.f32 %v361, %v377
        %v381 = vpack.c.bf16 %v380, %v379
        %383 = vrot.lane.b32.xlu0 %v381, 32
        %v384 = vpop.permute.xlu0 %383
        %386 = vst.msk [vmem:[%s203] sm:$0xff] %vm259, %v384
        %s387 = scalar_lea.vmem %s179, 32 [#allocation6]
        %v388 = vld [vmem:[%s387] sm:$0xf]
        %v389 = vld [vmem:[%s387 + $0x4] sm:$0xf]
        %v390 = vunpack.c.l.bf16 %v388
        %v391 = vunpack.c.l.bf16 %v389
        %v392 = vpack.c.bf16 %v250, %v249
        %v394 = vsel %vm259, %v392, 0
        %396 = vmatprep.subr.bf16.mxu0 0
        %397 = vmatpush1.bf16.msra.mxu0 %v240
        %398 = vmatprep.subr.bf16.mxu0 0
        %399 = vmatpush1.bf16.msra.mxu0 %v241
        %400 = vmatprep.subr.bf16.mxu0 0
        %401 = vmatpush1.bf16.msra.mxu0 0
        %402 = vmatprep.subr.bf16.mxu0 0
        %403 = vmatpush1.bf16.msra.mxu0 0
        %404 = vmatprep.subr.bf16.mxu0 0
        %405 = vmatpush1.bf16.msra.mxu0 0
        %406 = vmatprep.subr.bf16.mxu0 0
        %407 = vmatpush1.bf16.msra.mxu0 0
        %408 = vmatprep.subr.bf16.mxu0 0
        %409 = vmatpush1.bf16.msra.mxu0 0
        %410 = vmatprep.subr.bf16.mxu0 0
        %411 = vmatpush1.bf16.msra.mxu0 0
        %412 = vmatprep.subr.bf16.mxu0 0
        %413 = vmatpush1.bf16.msra.mxu0 0
        %414 = vmatprep.subr.bf16.mxu0 0
        %415 = vmatpush1.bf16.msra.mxu0 0
        %416 = vmatprep.subr.bf16.mxu0 0
        %417 = vmatpush1.bf16.msra.mxu0 0
        %418 = vmatprep.subr.bf16.mxu0 0
        %419 = vmatpush1.bf16.msra.mxu0 0
        %420 = vmatprep.subr.bf16.mxu0 0
        %421 = vmatpush1.bf16.msra.mxu0 0
        %422 = vmatprep.subr.bf16.mxu0 0
        %423 = vmatpush1.bf16.msra.mxu0 0
        %424 = vmatprep.subr.bf16.mxu0 0
        %425 = vmatpush1.bf16.msra.mxu0 0
        %426 = vmatprep.subr.bf16.mxu0 0
        %427 = vmatpush1.bf16.msra.mxu0 0
        %428 = vmatprep.mubr.bf16.mxu0 0
        %429 = vmatmul.mubr.bf16.gmra.mrb[0].mxu0 %v394
        %v430 = vpop.f32.mrb[0].mxu0
        %v431 = vadd.f32 0.0, %v430
        %v432 = vpop.f32.mrb[0].mxu0
        %v433 = vpop.f32.mrb[0].mxu0
        %v434 = vadd.f32 0.0, %v433
        %v435 = vpop.f32.mrb[0].mxu0
        %436 = vdwg.mxu0
        %v437 = vadd.f32 %v390, %v431
        %v438 = vadd.f32 %v391, %v434
        %v439 = vxor.u32 %v437, 2147483648
        %v440 = vxor.u32 %v438, 2147483648
        %v441 = vmul.f32 %v439, 1.442695
        %v442 = vpow.pop %v441
        %v443 = vmul.f32 %v440, 1.442695
        %v444 = vpow.pop %v443
        %v445 = vadd.f32 %v442, 1.0
        %v446 = vadd.f32 %v444, 1.0
        %v447 = vrcp.pop %v445
        %v448 = vmul.f32 1.0, %v447
        %v449 = vrcp.pop %v446
        %v450 = vmul.f32 1.0, %v449
        %v451 = vtanh.pop %v437
        %v452 = vtanh.pop %v438
        %455 = vrot.lane.b32.xlu0 %v252, 32
        %v456 = vpop.permute.xlu0 %455
        %457 = vrot.lane.b32.xlu0 %v253, 32
        %v458 = vpop.permute.xlu0 %457
        %v461 = vmul.f32 %v448, %v456
        %v462 = vmul.f32 %v450, %v458
        %465 = vrot.lane.b32.xlu0 %v451, 64
        %v466 = vpop.permute.xlu0 %465
        %467 = vrot.lane.b32.xlu0 %v452, 64
        %v468 = vpop.permute.xlu0 %467
        %v471 = vmul.f32 %v448, %v466
        %v472 = vmul.f32 %v450, %v468
        %475 = vrot.lane.b32.xlu0 %v471, 32
        %v476 = vpop.permute.xlu0 %475
        %477 = vrot.lane.b32.xlu0 %v472, 32
        %v478 = vpop.permute.xlu0 %477
        %v481 = vadd.f32 %v461, %v476
        %v482 = vadd.f32 %v462, %v478
        %v483 = vtanh.pop %v481
        %v484 = vtanh.pop %v482
        %487 = vrot.lane.b32.xlu0 %v483, 64
        %v488 = vpop.permute.xlu0 %487
        %489 = vrot.lane.b32.xlu0 %v484, 64
        %v490 = vpop.permute.xlu0 %489
        %v493 = vmul.f32 %v448, %v488
        %v494 = vmul.f32 %v450, %v490
        %v495 = vmul.f32 %v493, %v372
        %v496 = vmul.f32 %v494, %v377
        %v497 = vpack.c.bf16 %v496, %v495
        %499 = vrot.lane.b32.xlu0 %v497, 32
        %v500 = vpop.permute.xlu0 %499
        %s502 = scalar_lea.vmem %s203, 32 [#allocation11]
        %503 = vst.msk [vmem:[%s502] sm:$0xff] %vm259, %v500
        %s504 = scalar_lea.vmem %s179, 8 [#allocation6]
        %v505 = vld [vmem:[%s504] sm:$0xf]
        %v506 = vld [vmem:[%s504 + $0x4] sm:$0xf]
        %v507 = vunpack.c.l.bf16 %v505
        %v508 = vunpack.c.l.bf16 %v506
        %v509 = vpack.c.bf16 %v361, %v360
        %511 = vrot.lane.b32.xlu0 %v509, 32
        %v512 = vpop.permute.xlu0 %511
        %v514 = vsel %vm259, %v512, 0
        %516 = vmatprep.subr.bf16.mxu0 0
        %517 = vmatpush1.bf16.msra.mxu0 %v237
        %518 = vmatprep.subr.bf16.mxu0 0
        %519 = vmatpush1.bf16.msra.mxu0 %v238
        %520 = vmatprep.subr.bf16.mxu0 0
        %521 = vmatpush1.bf16.msra.mxu0 0
        %522 = vmatprep.subr.bf16.mxu0 0
        %523 = vmatpush1.bf16.msra.mxu0 0
        %524 = vmatprep.subr.bf16.mxu0 0
        %525 = vmatpush1.bf16.msra.mxu0 0
        %526 = vmatprep.subr.bf16.mxu0 0
        %527 = vmatpush1.bf16.msra.mxu0 0
        %528 = vmatprep.subr.bf16.mxu0 0
        %529 = vmatpush1.bf16.msra.mxu0 0
        %530 = vmatprep.subr.bf16.mxu0 0
        %531 = vmatpush1.bf16.msra.mxu0 0
        %532 = vmatprep.subr.bf16.mxu0 0
        %533 = vmatpush1.bf16.msra.mxu0 0
        %534 = vmatprep.subr.bf16.mxu0 0
        %535 = vmatpush1.bf16.msra.mxu0 0
        %536 = vmatprep.subr.bf16.mxu0 0
        %537 = vmatpush1.bf16.msra.mxu0 0
        %538 = vmatprep.subr.bf16.mxu0 0
        %539 = vmatpush1.bf16.msra.mxu0 0
        %540 = vmatprep.subr.bf16.mxu0 0
        %541 = vmatpush1.bf16.msra.mxu0 0
        %542 = vmatprep.subr.bf16.mxu0 0
        %543 = vmatpush1.bf16.msra.mxu0 0
        %544 = vmatprep.subr.bf16.mxu0 0
        %545 = vmatpush1.bf16.msra.mxu0 0
        %546 = vmatprep.subr.bf16.mxu0 0
        %547 = vmatpush1.bf16.msra.mxu0 0
        %548 = vmatprep.mubr.bf16.mxu0 0
        %549 = vmatmul.mubr.bf16.gmra.mrb[0].mxu0 %v514
        %v550 = vpop.f32.mrb[0].mxu0
        %v551 = vadd.f32 0.0, %v550
        %v552 = vpop.f32.mrb[0].mxu0
        %v553 = vpop.f32.mrb[0].mxu0
        %v554 = vadd.f32 0.0, %v553
        %v555 = vpop.f32.mrb[0].mxu0
        %556 = vdwg.mxu0
        %v557 = vadd.f32 %v507, %v551
        %v558 = vadd.f32 %v508, %v554
        %v559 = vxor.u32 %v557, 2147483648
        %v560 = vxor.u32 %v558, 2147483648
        %v561 = vmul.f32 %v559, 1.442695
        %v562 = vpow.pop %v561
        %v563 = vmul.f32 %v560, 1.442695
        %v564 = vpow.pop %v563
        %v565 = vadd.f32 %v562, 1.0
        %v566 = vadd.f32 %v564, 1.0
        %v567 = vrcp.pop %v565
        %v568 = vmul.f32 1.0, %v567
        %v569 = vrcp.pop %v566
        %v570 = vmul.f32 1.0, %v569
        %v571 = vtanh.pop %v557
        %v572 = vtanh.pop %v558
        %v573 = vmul.f32 %v568, %v348
        %v574 = vmul.f32 %v570, %v349
        %577 = vrot.lane.b32.xlu0 %v571, 64
        %v578 = vpop.permute.xlu0 %577
        %579 = vrot.lane.b32.xlu0 %v572, 64
        %v580 = vpop.permute.xlu0 %579
        %v583 = vmul.f32 %v568, %v578
        %v584 = vmul.f32 %v570, %v580
        %587 = vrot.lane.b32.xlu0 %v583, 32
        %v588 = vpop.permute.xlu0 %587
        %589 = vrot.lane.b32.xlu0 %v584, 32
        %v590 = vpop.permute.xlu0 %589
        %v593 = vadd.f32 %v573, %v588
        %v594 = vadd.f32 %v574, %v590
        %v595 = vtanh.pop %v593
        %v596 = vtanh.pop %v594
        %599 = vrot.lane.b32.xlu0 %v595, 64
        %v600 = vpop.permute.xlu0 %599
        %601 = vrot.lane.b32.xlu0 %v596, 64
        %v602 = vpop.permute.xlu0 %601
        %v605 = vmul.f32 %v568, %v600
        %v606 = vmul.f32 %v570, %v602
        %s607 = sadd.s32 %s236, 1
        %v608 = vstv %s607
        %vm609 = vcmp.lt.s32.totalorder %v608, %v242
        %vm610 = vcmp.lt.s32.totalorder %v608, %v243
        %v611 = vsel %vm609, 1, 0
        %v612 = vsel %vm610, 1, 0
        %v613 = vcvt.s32.f32 %v611
        %v614 = vcvt.s32.f32 %v612
        %616 = vset.pattern.permute.xlu0 0
        %617 = vperm.xlu0 %616, %v613
        %v618 = vpop.permute.xlu0 %617
        %621 = vset.pattern.permute.xlu0 0
        %622 = vperm.xlu0 %621, %v614
        %v623 = vpop.permute.xlu0 %622
        %v625 = vmul.f32 %v605, %v618
        %v626 = vmul.f32 %v606, %v623
        %v627 = vpack.c.bf16 %v626, %v625
        %629 = vrot.lane.b32.xlu0 %v627, 32
        %v630 = vpop.permute.xlu0 %629
        %s632 = scalar_lea.vmem %s203, 8 [#allocation11]
        %633 = vst.msk [vmem:[%s632] sm:$0xff] %vm259, %v630
        %s634 = scalar_lea.vmem %s179, 40 [#allocation6]
        %v635 = vld [vmem:[%s634] sm:$0xf]
        %v636 = vld [vmem:[%s634 + $0x4] sm:$0xf]
        %v637 = vunpack.c.l.bf16 %v635
        %v638 = vunpack.c.l.bf16 %v636
        %v639 = vpack.c.bf16 %v494, %v493
        %641 = vrot.lane.b32.xlu0 %v639, 32
        %v642 = vpop.permute.xlu0 %641
        %v644 = vsel %vm259, %v642, 0
        %646 = vmatprep.subr.bf16.mxu0 0
        %647 = vmatpush1.bf16.msra.mxu0 %v240
        %648 = vmatprep.subr.bf16.mxu0 0
        %649 = vmatpush1.bf16.msra.mxu0 %v241
        %650 = vmatprep.subr.bf16.mxu0 0
        %651 = vmatpush1.bf16.msra.mxu0 0
        %652 = vmatprep.subr.bf16.mxu0 0
        %653 = vmatpush1.bf16.msra.mxu0 0
        %654 = vmatprep.subr.bf16.mxu0 0
        %655 = vmatpush1.bf16.msra.mxu0 0
        %656 = vmatprep.subr.bf16.mxu0 0
        %657 = vmatpush1.bf16.msra.mxu0 0
        %658 = vmatprep.subr.bf16.mxu0 0
        %659 = vmatpush1.bf16.msra.mxu0 0
        %660 = vmatprep.subr.bf16.mxu0 0
        %661 = vmatpush1.bf16.msra.mxu0 0
        %662 = vmatprep.subr.bf16.mxu0 0
        %663 = vmatpush1.bf16.msra.mxu0 0
        %664 = vmatprep.subr.bf16.mxu0 0
        %665 = vmatpush1.bf16.msra.mxu0 0
        %666 = vmatprep.subr.bf16.mxu0 0
        %667 = vmatpush1.bf16.msra.mxu0 0
        %668 = vmatprep.subr.bf16.mxu0 0
        %669 = vmatpush1.bf16.msra.mxu0 0
        %670 = vmatprep.subr.bf16.mxu0 0
        %671 = vmatpush1.bf16.msra.mxu0 0
        %672 = vmatprep.subr.bf16.mxu0 0
        %673 = vmatpush1.bf16.msra.mxu0 0
        %674 = vmatprep.subr.bf16.mxu0 0
        %675 = vmatpush1.bf16.msra.mxu0 0
        %676 = vmatprep.subr.bf16.mxu0 0
        %677 = vmatpush1.bf16.msra.mxu0 0
        %678 = vmatprep.mubr.bf16.mxu0 0
        %679 = vmatmul.mubr.bf16.gmra.mrb[0].mxu0 %v644
        %v680 = vpop.f32.mrb[0].mxu0
        %v681 = vadd.f32 0.0, %v680
        %v682 = vpop.f32.mrb[0].mxu0
        %v683 = vpop.f32.mrb[0].mxu0
        %v684 = vadd.f32 0.0, %v683
        %v685 = vpop.f32.mrb[0].mxu0
        %686 = vdwg.mxu0
        %v687 = vadd.f32 %v637, %v681
        %v688 = vadd.f32 %v638, %v684
        %v689 = vxor.u32 %v687, 2147483648
        %v690 = vxor.u32 %v688, 2147483648
        %v691 = vmul.f32 %v689, 1.442695
        %v692 = vpow.pop %v691
        %v693 = vmul.f32 %v690, 1.442695
        %v694 = vpow.pop %v693
        %v695 = vadd.f32 %v692, 1.0
        %v696 = vadd.f32 %v694, 1.0
        %v697 = vrcp.pop %v695
        %v698 = vmul.f32 1.0, %v697
        %v699 = vrcp.pop %v696
        %v700 = vmul.f32 1.0, %v699
        %v701 = vtanh.pop %v687
        %v702 = vtanh.pop %v688
        %v703 = vmul.f32 %v698, %v481
        %v704 = vmul.f32 %v700, %v482
        %707 = vrot.lane.b32.xlu0 %v701, 64
        %v708 = vpop.permute.xlu0 %707
        %709 = vrot.lane.b32.xlu0 %v702, 64
        %v710 = vpop.permute.xlu0 %709
        %v713 = vmul.f32 %v698, %v708
        %v714 = vmul.f32 %v700, %v710
        %717 = vrot.lane.b32.xlu0 %v713, 32
        %v718 = vpop.permute.xlu0 %717
        %719 = vrot.lane.b32.xlu0 %v714, 32
        %v720 = vpop.permute.xlu0 %719
        %v723 = vadd.f32 %v703, %v718
        %v724 = vadd.f32 %v704, %v720
        %v725 = vtanh.pop %v723
        %v726 = vtanh.pop %v724
        %729 = vrot.lane.b32.xlu0 %v725, 64
        %v730 = vpop.permute.xlu0 %729
        %731 = vrot.lane.b32.xlu0 %v726, 64
        %v732 = vpop.permute.xlu0 %731
        %v735 = vmul.f32 %v698, %v730
        %v736 = vmul.f32 %v700, %v732
        %v737 = vmul.f32 %v735, %v618
        %v738 = vmul.f32 %v736, %v623
        %v739 = vpack.c.bf16 %v738, %v737
        %741 = vrot.lane.b32.xlu0 %v739, 32
        %v742 = vpop.permute.xlu0 %741
        %s744 = scalar_lea.vmem %s203, 40 [#allocation11]
        %745 = vst.msk [vmem:[%s744] sm:$0xff] %vm259, %v742
        %s746 = scalar_lea.vmem %s179, 16 [#allocation6]
        %v747 = vld [vmem:[%s746] sm:$0xf]
        %v748 = vld [vmem:[%s746 + $0x4] sm:$0xf]
        %v749 = vunpack.c.l.bf16 %v747
        %v750 = vunpack.c.l.bf16 %v748
        %v751 = vpack.c.bf16 %v606, %v605
        %753 = vrot.lane.b32.xlu0 %v751, 32
        %v754 = vpop.permute.xlu0 %753
        %v756 = vsel %vm259, %v754, 0
        %758 = vmatprep.subr.bf16.mxu0 0
        %759 = vmatpush1.bf16.msra.mxu0 %v237
        %760 = vmatprep.subr.bf16.mxu0 0
        %761 = vmatpush1.bf16.msra.mxu0 %v238
        %762 = vmatprep.subr.bf16.mxu0 0
        %763 = vmatpush1.bf16.msra.mxu0 0
        %764 = vmatprep.subr.bf16.mxu0 0
        %765 = vmatpush1.bf16.msra.mxu0 0
        %766 = vmatprep.subr.bf16.mxu0 0
        %767 = vmatpush1.bf16.msra.mxu0 0
        %768 = vmatprep.subr.bf16.mxu0 0
        %769 = vmatpush1.bf16.msra.mxu0 0
        %770 = vmatprep.subr.bf16.mxu0 0
        %771 = vmatpush1.bf16.msra.mxu0 0
        %772 = vmatprep.subr.bf16.mxu0 0
        %773 = vmatpush1.bf16.msra.mxu0 0
        %774 = vmatprep.subr.bf16.mxu0 0
        %775 = vmatpush1.bf16.msra.mxu0 0
        %776 = vmatprep.subr.bf16.mxu0 0
        %777 = vmatpush1.bf16.msra.mxu0 0
        %778 = vmatprep.subr.bf16.mxu0 0
        %779 = vmatpush1.bf16.msra.mxu0 0
        %780 = vmatprep.subr.bf16.mxu0 0
        %781 = vmatpush1.bf16.msra.mxu0 0
        %782 = vmatprep.subr.bf16.mxu0 0
        %783 = vmatpush1.bf16.msra.mxu0 0
        %784 = vmatprep.subr.bf16.mxu0 0
        %785 = vmatpush1.bf16.msra.mxu0 0
        %786 = vmatprep.subr.bf16.mxu0 0
        %787 = vmatpush1.bf16.msra.mxu0 0
        %788 = vmatprep.subr.bf16.mxu0 0
        %789 = vmatpush1.bf16.msra.mxu0 0
        %790 = vmatprep.mubr.bf16.mxu0 0
        %791 = vmatmul.mubr.bf16.gmra.mrb[0].mxu0 %v756
        %v792 = vpop.f32.mrb[0].mxu0
        %v793 = vadd.f32 0.0, %v792
        %v794 = vpop.f32.mrb[0].mxu0
        %v795 = vpop.f32.mrb[0].mxu0
        %v796 = vadd.f32 0.0, %v795
        %v797 = vpop.f32.mrb[0].mxu0
        %798 = vdwg.mxu0
        %v799 = vadd.f32 %v749, %v793
        %v800 = vadd.f32 %v750, %v796
        %v801 = vxor.u32 %v799, 2147483648
        %v802 = vxor.u32 %v800, 2147483648
        %v803 = vmul.f32 %v801, 1.442695
        %v804 = vpow.pop %v803
        %v805 = vmul.f32 %v802, 1.442695
        %v806 = vpow.pop %v805
        %v807 = vadd.f32 %v804, 1.0
        %v808 = vadd.f32 %v806, 1.0
        %v809 = vrcp.pop %v807
        %v810 = vmul.f32 1.0, %v809
        %v811 = vrcp.pop %v808
        %v812 = vmul.f32 1.0, %v811
        %v813 = vtanh.pop %v799
        %v814 = vtanh.pop %v800
        %v815 = vmul.f32 %v810, %v593
        %v816 = vmul.f32 %v812, %v594
        %819 = vrot.lane.b32.xlu0 %v813, 64
        %v820 = vpop.permute.xlu0 %819
        %821 = vrot.lane.b32.xlu0 %v814, 64
        %v822 = vpop.permute.xlu0 %821
        %v825 = vmul.f32 %v810, %v820
        %v826 = vmul.f32 %v812, %v822
        %829 = vrot.lane.b32.xlu0 %v825, 32
        %v830 = vpop.permute.xlu0 %829
        %831 = vrot.lane.b32.xlu0 %v826, 32
        %v832 = vpop.permute.xlu0 %831
        %v835 = vadd.f32 %v815, %v830
        %v836 = vadd.f32 %v816, %v832
        %v837 = vtanh.pop %v835
        %v838 = vtanh.pop %v836
        %841 = vrot.lane.b32.xlu0 %v837, 64
        %v842 = vpop.permute.xlu0 %841
        %843 = vrot.lane.b32.xlu0 %v838, 64
        %v844 = vpop.permute.xlu0 %843
        %v847 = vmul.f32 %v810, %v842
        %v848 = vmul.f32 %v812, %v844
        %s849 = sadd.s32 %s236, 2
        %v850 = vstv %s849
        %vm851 = vcmp.lt.s32.totalorder %v850, %v242
        %vm852 = vcmp.lt.s32.totalorder %v850, %v243
        %v853 = vsel %vm851, 1, 0
        %v854 = vsel %vm852, 1, 0
        %v855 = vcvt.s32.f32 %v853
        %v856 = vcvt.s32.f32 %v854
        %858 = vset.pattern.permute.xlu0 0
        %859 = vperm.xlu0 %858, %v855
        %v860 = vpop.permute.xlu0 %859
        %863 = vset.pattern.permute.xlu0 0
        %864 = vperm.xlu0 %863, %v856
        %v865 = vpop.permute.xlu0 %864
        %v867 = vmul.f32 %v847, %v860
        %v868 = vmul.f32 %v848, %v865
        %v869 = vpack.c.bf16 %v868, %v867
        %871 = vrot.lane.b32.xlu0 %v869, 32
        %v872 = vpop.permute.xlu0 %871
        %s874 = scalar_lea.vmem %s203, 16 [#allocation11]
        %875 = vst.msk [vmem:[%s874] sm:$0xff] %vm259, %v872
        %s876 = scalar_lea.vmem %s179, 48 [#allocation6]
        %v877 = vld [vmem:[%s876] sm:$0xf]
        %v878 = vld [vmem:[%s876 + $0x4] sm:$0xf]
        %v879 = vunpack.c.l.bf16 %v877
        %v880 = vunpack.c.l.bf16 %v878
        %v881 = vpack.c.bf16 %v736, %v735
        %883 = vrot.lane.b32.xlu0 %v881, 32
        %v884 = vpop.permute.xlu0 %883
        %v886 = vsel %vm259, %v884, 0
        %888 = vmatprep.subr.bf16.mxu0 0
        %889 = vmatpush1.bf16.msra.mxu0 %v240
        %890 = vmatprep.subr.bf16.mxu0 0
        %891 = vmatpush1.bf16.msra.mxu0 %v241
        %892 = vmatprep.subr.bf16.mxu0 0
        %893 = vmatpush1.bf16.msra.mxu0 0
        %894 = vmatprep.subr.bf16.mxu0 0
        %895 = vmatpush1.bf16.msra.mxu0 0
        %896 = vmatprep.subr.bf16.mxu0 0
        %897 = vmatpush1.bf16.msra.mxu0 0
        %898 = vmatprep.subr.bf16.mxu0 0
        %899 = vmatpush1.bf16.msra.mxu0 0
        %900 = vmatprep.subr.bf16.mxu0 0
        %901 = vmatpush1.bf16.msra.mxu0 0
        %902 = vmatprep.subr.bf16.mxu0 0
        %903 = vmatpush1.bf16.msra.mxu0 0
        %904 = vmatprep.subr.bf16.mxu0 0
        %905 = vmatpush1.bf16.msra.mxu0 0
        %906 = vmatprep.subr.bf16.mxu0 0
        %907 = vmatpush1.bf16.msra.mxu0 0
        %908 = vmatprep.subr.bf16.mxu0 0
        %909 = vmatpush1.bf16.msra.mxu0 0
        %910 = vmatprep.subr.bf16.mxu0 0
        %911 = vmatpush1.bf16.msra.mxu0 0
        %912 = vmatprep.subr.bf16.mxu0 0
        %913 = vmatpush1.bf16.msra.mxu0 0
        %914 = vmatprep.subr.bf16.mxu0 0
        %915 = vmatpush1.bf16.msra.mxu0 0
        %916 = vmatprep.subr.bf16.mxu0 0
        %917 = vmatpush1.bf16.msra.mxu0 0
        %918 = vmatprep.subr.bf16.mxu0 0
        %919 = vmatpush1.bf16.msra.mxu0 0
        %920 = vmatprep.mubr.bf16.mxu0 0
        %921 = vmatmul.mubr.bf16.gmra.mrb[0].mxu0 %v886
        %v922 = vpop.f32.mrb[0].mxu0
        %v923 = vadd.f32 0.0, %v922
        %v924 = vpop.f32.mrb[0].mxu0
        %v925 = vpop.f32.mrb[0].mxu0
        %v926 = vadd.f32 0.0, %v925
        %v927 = vpop.f32.mrb[0].mxu0
        %928 = vdwg.mxu0
        %v929 = vadd.f32 %v879, %v923
        %v930 = vadd.f32 %v880, %v926
        %v931 = vxor.u32 %v929, 2147483648
        %v932 = vxor.u32 %v930, 2147483648
        %v933 = vmul.f32 %v931, 1.442695
        %v934 = vpow.pop %v933
        %v935 = vmul.f32 %v932, 1.442695
        %v936 = vpow.pop %v935
        %v937 = vadd.f32 %v934, 1.0
        %v938 = vadd.f32 %v936, 1.0
        %v939 = vrcp.pop %v937
        %v940 = vmul.f32 1.0, %v939
        %v941 = vrcp.pop %v938
        %v942 = vmul.f32 1.0, %v941
        %v943 = vtanh.pop %v929
        %v944 = vtanh.pop %v930
        %v945 = vmul.f32 %v940, %v723
        %v946 = vmul.f32 %v942, %v724
        %949 = vrot.lane.b32.xlu0 %v943, 64
        %v950 = vpop.permute.xlu0 %949
        %951 = vrot.lane.b32.xlu0 %v944, 64
        %v952 = vpop.permute.xlu0 %951
        %v955 = vmul.f32 %v940, %v950
        %v956 = vmul.f32 %v942, %v952
        %959 = vrot.lane.b32.xlu0 %v955, 32
        %v960 = vpop.permute.xlu0 %959
        %961 = vrot.lane.b32.xlu0 %v956, 32
        %v962 = vpop.permute.xlu0 %961
        %v965 = vadd.f32 %v945, %v960
        %v966 = vadd.f32 %v946, %v962
        %v967 = vtanh.pop %v965
        %v968 = vtanh.pop %v966
        %971 = vrot.lane.b32.xlu0 %v967, 64
        %v972 = vpop.permute.xlu0 %971
        %973 = vrot.lane.b32.xlu0 %v968, 64
        %v974 = vpop.permute.xlu0 %973
        %v977 = vmul.f32 %v940, %v972
        %v978 = vmul.f32 %v942, %v974
        %v979 = vmul.f32 %v977, %v860
        %v980 = vmul.f32 %v978, %v865
        %v981 = vpack.c.bf16 %v980, %v979
        %983 = vrot.lane.b32.xlu0 %v981, 32
        %v984 = vpop.permute.xlu0 %983
        %s986 = scalar_lea.vmem %s203, 48 [#allocation11]
        %987 = vst.msk [vmem:[%s986] sm:$0xff] %vm259, %v984
        %s988 = scalar_lea.vmem %s179, 24 [#allocation6]
        %v989 = vld [vmem:[%s988] sm:$0xf]
        %v990 = vld [vmem:[%s988 + $0x4] sm:$0xf]
        %v991 = vunpack.c.l.bf16 %v989
        %v992 = vunpack.c.l.bf16 %v990
        %v993 = vpack.c.bf16 %v848, %v847
        %995 = vrot.lane.b32.xlu0 %v993, 32
        %v996 = vpop.permute.xlu0 %995
        %v998 = vsel %vm259, %v996, 0
        %1000 = vmatprep.subr.bf16.mxu0 0
        %1001 = vmatpush1.bf16.msra.mxu0 %v237
        %1002 = vmatprep.subr.bf16.mxu0 0
        %1003 = vmatpush1.bf16.msra.mxu0 %v238
        %1004 = vmatprep.subr.bf16.mxu0 0
        %1005 = vmatpush1.bf16.msra.mxu0 0
        %1006 = vmatprep.subr.bf16.mxu0 0
        %1007 = vmatpush1.bf16.msra.mxu0 0
        %1008 = vmatprep.subr.bf16.mxu0 0
        %1009 = vmatpush1.bf16.msra.mxu0 0
        %1010 = vmatprep.subr.bf16.mxu0 0
        %1011 = vmatpush1.bf16.msra.mxu0 0
        %1012 = vmatprep.subr.bf16.mxu0 0
        %1013 = vmatpush1.bf16.msra.mxu0 0
        %1014 = vmatprep.subr.bf16.mxu0 0
        %1015 = vmatpush1.bf16.msra.mxu0 0
        %1016 = vmatprep.subr.bf16.mxu0 0
        %1017 = vmatpush1.bf16.msra.mxu0 0
        %1018 = vmatprep.subr.bf16.mxu0 0
        %1019 = vmatpush1.bf16.msra.mxu0 0
        %1020 = vmatprep.subr.bf16.mxu0 0
        %1021 = vmatpush1.bf16.msra.mxu0 0
        %1022 = vmatprep.subr.bf16.mxu0 0
        %1023 = vmatpush1.bf16.msra.mxu0 0
        %1024 = vmatprep.subr.bf16.mxu0 0
        %1025 = vmatpush1.bf16.msra.mxu0 0
        %1026 = vmatprep.subr.bf16.mxu0 0
        %1027 = vmatpush1.bf16.msra.mxu0 0
        %1028 = vmatprep.subr.bf16.mxu0 0
        %1029 = vmatpush1.bf16.msra.mxu0 0
        %1030 = vmatprep.subr.bf16.mxu0 0
        %1031 = vmatpush1.bf16.msra.mxu0 0
        %1032 = vmatprep.mubr.bf16.mxu0 0
        %1033 = vmatmul.mubr.bf16.gmra.mrb[0].mxu0 %v998
        %v1034 = vpop.f32.mrb[0].mxu0
        %v1035 = vadd.f32 0.0, %v1034
        %v1036 = vpop.f32.mrb[0].mxu0
        %v1037 = vpop.f32.mrb[0].mxu0
        %v1038 = vadd.f32 0.0, %v1037
        %v1039 = vpop.f32.mrb[0].mxu0
        %1040 = vdwg.mxu0
        %v1041 = vadd.f32 %v991, %v1035
        %v1042 = vadd.f32 %v992, %v1038
        %v1043 = vxor.u32 %v1041, 2147483648
        %v1044 = vxor.u32 %v1042, 2147483648
        %v1045 = vmul.f32 %v1043, 1.442695
        %v1046 = vpow.pop %v1045
        %v1047 = vmul.f32 %v1044, 1.442695
        %v1048 = vpow.pop %v1047
        %v1049 = vadd.f32 %v1046, 1.0
        %v1050 = vadd.f32 %v1048, 1.0
        %v1051 = vrcp.pop %v1049
        %v1052 = vmul.f32 1.0, %v1051
        %v1053 = vrcp.pop %v1050
        %v1054 = vmul.f32 1.0, %v1053
        %v1055 = vtanh.pop %v1041
        %v1056 = vtanh.pop %v1042
        %v1057 = vmul.f32 %v1052, %v835
        %v1058 = vmul.f32 %v1054, %v836
        %1061 = vrot.lane.b32.xlu0 %v1055, 64
        %v1062 = vpop.permute.xlu0 %1061
        %1063 = vrot.lane.b32.xlu0 %v1056, 64
        %v1064 = vpop.permute.xlu0 %1063
        %v1067 = vmul.f32 %v1052, %v1062
        %v1068 = vmul.f32 %v1054, %v1064
        %1071 = vrot.lane.b32.xlu0 %v1067, 32
        %v1072 = vpop.permute.xlu0 %1071
        %1073 = vrot.lane.b32.xlu0 %v1068, 32
        %v1074 = vpop.permute.xlu0 %1073
        %v1077 = vadd.f32 %v1057, %v1072
        %v1078 = vadd.f32 %v1058, %v1074
        %v1079 = vtanh.pop %v1077
        %v1080 = vtanh.pop %v1078
        %1083 = vrot.lane.b32.xlu0 %v1079, 64
        %v1084 = vpop.permute.xlu0 %1083
        %1085 = vrot.lane.b32.xlu0 %v1080, 64
        %v1086 = vpop.permute.xlu0 %1085
        %v1089 = vmul.f32 %v1052, %v1084
        %v1090 = vmul.f32 %v1054, %v1086
        %s1091 = sadd.s32 %s236, 3
        %v1092 = vstv %s1091
        %vm1093 = vcmp.lt.s32.totalorder %v1092, %v242
        %vm1094 = vcmp.lt.s32.totalorder %v1092, %v243
        %v1095 = vsel %vm1093, 1, 0
        %v1096 = vsel %vm1094, 1, 0
        %v1097 = vcvt.s32.f32 %v1095
        %v1098 = vcvt.s32.f32 %v1096
        %1100 = vset.pattern.permute.xlu0 0
        %1101 = vperm.xlu0 %1100, %v1097
        %v1102 = vpop.permute.xlu0 %1101
        %1105 = vset.pattern.permute.xlu0 0
        %1106 = vperm.xlu0 %1105, %v1098
        %v1107 = vpop.permute.xlu0 %1106
        %v1109 = vmul.f32 %v1089, %v1102
        %v1110 = vmul.f32 %v1090, %v1107
        %v1111 = vpack.c.bf16 %v1110, %v1109
        %1113 = vrot.lane.b32.xlu0 %v1111, 32
        %v1114 = vpop.permute.xlu0 %1113
        %s1116 = scalar_lea.vmem %s203, 24 [#allocation11]
        %1117 = vst.msk [vmem:[%s1116] sm:$0xff] %vm259, %v1114
        %s1118 = scalar_lea.vmem %s179, 56 [#allocation6]
        %v1119 = vld [vmem:[%s1118] sm:$0xf]
        %v1120 = vld [vmem:[%s1118 + $0x4] sm:$0xf]
        %v1121 = vunpack.c.l.bf16 %v1119
        %v1122 = vunpack.c.l.bf16 %v1120
        %v1123 = vpack.c.bf16 %v978, %v977
        %1125 = vrot.lane.b32.xlu0 %v1123, 32
        %v1126 = vpop.permute.xlu0 %1125
        %v1128 = vsel %vm259, %v1126, 0
        %1130 = vmatprep.subr.bf16.mxu0 0
        %1131 = vmatpush1.bf16.msra.mxu0 %v240
        %1132 = vmatprep.subr.bf16.mxu0 0
        %1133 = vmatpush1.bf16.msra.mxu0 %v241
        %1134 = vmatprep.subr.bf16.mxu0 0
        %1135 = vmatpush1.bf16.msra.mxu0 0
        %1136 = vmatprep.subr.bf16.mxu0 0
        %1137 = vmatpush1.bf16.msra.mxu0 0
        %1138 = vmatprep.subr.bf16.mxu0 0
        %1139 = vmatpush1.bf16.msra.mxu0 0
        %1140 = vmatprep.subr.bf16.mxu0 0
        %1141 = vmatpush1.bf16.msra.mxu0 0
        %1142 = vmatprep.subr.bf16.mxu0 0
        %1143 = vmatpush1.bf16.msra.mxu0 0
        %1144 = vmatprep.subr.bf16.mxu0 0
        %1145 = vmatpush1.bf16.msra.mxu0 0
        %1146 = vmatprep.subr.bf16.mxu0 0
        %1147 = vmatpush1.bf16.msra.mxu0 0
        %1148 = vmatprep.subr.bf16.mxu0 0
        %1149 = vmatpush1.bf16.msra.mxu0 0
        %1150 = vmatprep.subr.bf16.mxu0 0
        %1151 = vmatpush1.bf16.msra.mxu0 0
        %1152 = vmatprep.subr.bf16.mxu0 0
        %1153 = vmatpush1.bf16.msra.mxu0 0
        %1154 = vmatprep.subr.bf16.mxu0 0
        %1155 = vmatpush1.bf16.msra.mxu0 0
        %1156 = vmatprep.subr.bf16.mxu0 0
        %1157 = vmatpush1.bf16.msra.mxu0 0
        %1158 = vmatprep.subr.bf16.mxu0 0
        %1159 = vmatpush1.bf16.msra.mxu0 0
        %1160 = vmatprep.subr.bf16.mxu0 0
        %1161 = vmatpush1.bf16.msra.mxu0 0
        %1162 = vmatprep.mubr.bf16.mxu0 0
        %1163 = vmatmul.mubr.bf16.gmra.mrb[0].mxu0 %v1128
        %v1164 = vpop.f32.mrb[0].mxu0
        %v1165 = vadd.f32 0.0, %v1164
        %v1166 = vpop.f32.mrb[0].mxu0
        %v1167 = vpop.f32.mrb[0].mxu0
        %v1168 = vadd.f32 0.0, %v1167
        %v1169 = vpop.f32.mrb[0].mxu0
        %1170 = vdwg.mxu0
        %v1171 = vadd.f32 %v1121, %v1165
        %v1172 = vadd.f32 %v1122, %v1168
        %v1173 = vxor.u32 %v1171, 2147483648
        %v1174 = vxor.u32 %v1172, 2147483648
        %v1175 = vmul.f32 %v1173, 1.442695
        %v1176 = vpow.pop %v1175
        %v1177 = vmul.f32 %v1174, 1.442695
        %v1178 = vpow.pop %v1177
        %v1179 = vadd.f32 %v1176, 1.0
        %v1180 = vadd.f32 %v1178, 1.0
        %v1181 = vrcp.pop %v1179
        %v1182 = vmul.f32 1.0, %v1181
        %v1183 = vrcp.pop %v1180
        %v1184 = vmul.f32 1.0, %v1183
        %v1185 = vtanh.pop %v1171
        %v1186 = vtanh.pop %v1172
        %v1187 = vmul.f32 %v1182, %v965
        %v1188 = vmul.f32 %v1184, %v966
        %1191 = vrot.lane.b32.xlu0 %v1185, 64
        %v1192 = vpop.permute.xlu0 %1191
        %1193 = vrot.lane.b32.xlu0 %v1186, 64
        %v1194 = vpop.permute.xlu0 %1193
        %v1197 = vmul.f32 %v1182, %v1192
        %v1198 = vmul.f32 %v1184, %v1194
        %1201 = vrot.lane.b32.xlu0 %v1197, 32
        %v1202 = vpop.permute.xlu0 %1201
        %1203 = vrot.lane.b32.xlu0 %v1198, 32
        %v1204 = vpop.permute.xlu0 %1203
        %v1207 = vadd.f32 %v1187, %v1202
        %v1208 = vadd.f32 %v1188, %v1204
        %v1209 = vtanh.pop %v1207
        %v1210 = vtanh.pop %v1208
        %1213 = vrot.lane.b32.xlu0 %v1209, 64
        %v1214 = vpop.permute.xlu0 %1213
        %1215 = vrot.lane.b32.xlu0 %v1210, 64
        %v1216 = vpop.permute.xlu0 %1215
        %v1219 = vmul.f32 %v1182, %v1214
        %v1220 = vmul.f32 %v1184, %v1216
        %v1221 = vmul.f32 %v1219, %v1102
        %v1222 = vmul.f32 %v1220, %v1107
        %v1223 = vpack.c.bf16 %v1222, %v1221
        %1225 = vrot.lane.b32.xlu0 %v1223, 32
        %v1226 = vpop.permute.xlu0 %1225
        %s1228 = scalar_lea.vmem %s203, 56 [#allocation11]
        %1229 = vst.msk [vmem:[%s1228] sm:$0xff] %vm259, %v1226
        %1232 = vrot.lane.b32.xlu0 %v1089, 32
        %v1233 = vpop.permute.xlu0 %1232
        %1234 = vrot.lane.b32.xlu0 %v1090, 32
        %v1235 = vpop.permute.xlu0 %1234
        %1238 = vst.msk [vmem:[#allocation4] sm:$0xff] %vm259, %v1233
        %1239 = vst.msk [vmem:[#allocation4 + $0x8] sm:$0xff] %vm259, %v1235
        %1242 = vrot.lane.b32.xlu0 %v1077, 96
        %v1243 = vpop.permute.xlu0 %1242
        %1244 = vrot.lane.b32.xlu0 %v1078, 96
        %v1245 = vpop.permute.xlu0 %1244
        %1248 = vst.msk [vmem:[#allocation5] sm:$0xff] %vm259, %v1243
        %1249 = vst.msk [vmem:[#allocation5 + $0x8] sm:$0xff] %vm259, %v1245
        %1252 = vrot.lane.b32.xlu0 %v1219, 32
        %v1253 = vpop.permute.xlu0 %1252
        %1254 = vrot.lane.b32.xlu0 %v1220, 32
        %v1255 = vpop.permute.xlu0 %1254
        %1258 = vst.msk [vmem:[%s248] sm:$0xff] %vm259, %v1253
        %1259 = vst.msk [vmem:[%s248 + $0x8] sm:$0xff] %vm259, %v1255
        %1262 = vrot.lane.b32.xlu0 %v1207, 96
        %v1263 = vpop.permute.xlu0 %1262
        %1264 = vrot.lane.b32.xlu0 %v1208, 96
        %v1265 = vpop.permute.xlu0 %1264
        %1268 = vst.msk [vmem:[%s251] sm:$0xff] %vm259, %v1263
        %1269 = vst.msk [vmem:[%s251 + $0x8] sm:$0xff] %vm259, %v1265
        %s1270 = sand.u32 %s76, 1
        %s1271 = scalar_lea.sflag [#allocation8], %s1270
        %s1272 = sand.u32 %s76, 1
        %s1273 = smul.addr %s1272, 64
        %s1274 = scalar_lea.vmem [#allocation11], %s1273
        // Predicated region
        $region45: #{encoder_forward.4} parent=27 // pred_check
          %p1275 = pneg %p86
        $region46: #{encoder_forward.4} parent=27 // pred_check_branch
          %1277 = sbr.rel (%p1275) target = $region48
        $region47: #{encoder_forward.4} parent=27 // pred_region
          #allocation19 [shape = 'u32[6]{0}', space=smem, size = 0x18, scoped, tag = 'DMA stride descriptor']
          %s1278 = smul.u32 4, %s21
          %s1280 = ssub.s32 1024, 1024
          %1281 = vsyncadd %s1271, %s1280
          %s1282 = smul.addr %s1278, 128
          %s1283 = scalar_lea.hbm %s3, %s1282
          %s1285 = sshll.u32 1, 14
          %s1286 = sxor.u32 4294967295, %s1285
          %s1289 = sshll.u32 7, 18
          %s1290 = sxor.u32 4294967295, %s1289
          %s1291 = sand.u32 0, %s1290
          %s1293 = sor.u32 %s1291, 0
          %s1295 = sshll.u32 3, 24
          %s1296 = sxor.u32 4294967295, %s1295
          %s1297 = sand.u32 %s1293, %s1296
          %s1299 = sor.u32 %s1297, 0
          %s1300 = sshll.u32 %s1274, 4
          %s1301 = int_to_ptr.vmem [resolvable:$true] %s1300
          %1307 = sst [smem:[#allocation19]] 512
          %s1308 = scalar_lea.smem [#allocation19], 1
          %1309 = sst [smem:[%s1308]] 1024
          %s1310 = scalar_lea.smem [#allocation19], 2
          %1311 = sst [smem:[%s1310]] 4
          %s1312 = scalar_lea.smem [#allocation19], 3
          %1313 = sst [smem:[%s1312]] 128
          %s1314 = scalar_lea.smem [#allocation19], 4
          %1315 = sst [smem:[%s1314]] 128
          %s1316 = scalar_lea.smem [#allocation19], 5
          %1317 = sst [smem:[%s1316]] 8
          %1319 = dma.general %s1301, 1024, %s1283, %s1271, [#allocation18], [#allocation19], %s1299, 0
        $region48: #{encoder_forward.4} parent=27 // pred_fallthru
          _
      $region28: #{encoder_forward.4} parent=5 // pred_fallthru
        _
      %p1320 = scmp.le.s32.totalorder 2, %s16
      // Predicated region
      $region49: #{encoder_forward.4} parent=5 // pred_check
        %p1321 = pneg %p1320
      $region50: #{encoder_forward.4} parent=5 // pred_check_branch
        %1323 = sbr.rel (%p1321) target = $region52
      $region51: #{encoder_forward.4} parent=5 // pred_region
        %s1324 = ssub.s32 %s16, 2
        // Predicated region
        $region53: #{encoder_forward.4} parent=51 // pred_check
          %p1325 = pneg %p92
        $region54: #{encoder_forward.4} parent=51 // pred_check_branch
          %1327 = sbr.rel (%p1325) target = $region56
        $region55: #{encoder_forward.4} parent=51 // pred_region
          %s1328 = sand.u32 %s77, 1
          %s1329 = scalar_lea.sflag [#allocation8], %s1328
          %s1330 = sand.u32 %s77, 1
          %s1331 = smul.addr %s1330, 64
          %s1332 = scalar_lea.vmem [#allocation11], %s1331
          %1333 = dma.done %s1329, 1024
        $region56: #{encoder_forward.4} parent=51 // pred_fallthru
          _
      $region52: #{encoder_forward.4} parent=5 // pred_fallthru
        _
    $region6: #{encoder_forward.4} parent=1 // loop_footer
      %s20 = sadd.s32 1, %s16
    $region7: #{encoder_forward.4} parent=1 // loop_footer_branch
      %15 = sbr.rel target = $region3
    $region8: #{encoder_forward.4} parent=1 // loop_exit
      _
    %1334 = vsyncpa [#allocation7], 1
    %s1335 = scalar_lea.sflag [#allocation7], 1
    %1336 = vsyncpa %s1335, 1
    %1337 = vsyncpa [#allocation10], 1
    %1338 = vsyncpa [#allocation8], 1
    %s1339 = scalar_lea.sflag [#allocation8], 1
    %1340 = vsyncpa %s1339, 1
  %1341 = vsyncmov [#allocation3]
  %s1342 = vpop.sfrf %1341
  %p1343 = scmp.eq.s32.totalorder %s1342, 0
  %p1344 = pneg %p1343
  %1346 = shalt.err (%p1344)

// kernel: encoder_forward.6
$region0: #{encoder_forward.6}
  #allocation0 [shape = 'u32[]', space=smem, size = 0x4, offset = 0x4, fixed_abs, tag = 'smem constant byte address 0x4 - core index']
  #allocation1 [shape = 'u32[144,128]{1,0:T(1,128)}', space=vmem, size = 0x12000, scoped, tag = 'internal scratch']
  #allocation2 [shape = 'bf16[1,32,128]{2,1,0:T(16,128)(2,1)}', space=vmem, size = 0x2000, scoped, tag = 'scratch operand']
  #allocation3 [shape = 's32[1]{0}', space=sflag, size = 0x4, scoped, tag = 'scratch operand']
  #allocation4 [shape = 'f32[2,8,32]{2,1,0:T(8,128)}', space=vmem, size = 0x2000, scoped, tag = 'scratch operand']
  #allocation5 [shape = 'f32[2,8,32]{2,1,0:T(8,128)}', space=vmem, size = 0x2000, scoped, tag = 'scratch operand']
  #allocation12 [shape = 's32[]', space=sflag, size = 0x4, offset = 0, fixed_abs, tag = 'sflag constant byte address 0x0 - dummy sync flag']
  #allocation13 [shape = 's32[]', space=sflag, size = 0x4, offset = 0, fixed_abs, tag = 'sflag constant byte address 0x0 - dummy sync flag']
  #allocation14 [shape = 'u32[]', space=smem, size = 0x4, offset = 0x44, fixed_abs, tag = 'smem constant byte address 0x44 - assertion arg 0']
  #allocation15 [shape = 'u32[]', space=smem, size = 0x4, offset = 0x48, fixed_abs, tag = 'smem constant byte address 0x48 - assertion arg 1']
  %s0 = inlined_call_operand.hbm [shape: bf16[1,8,16,128], index: 0, kind: input, shape index: {}]
  %s1 = inlined_call_operand.hbm [shape: bf16[1,32,128], index: 1, kind: input, shape index: {}]
  %s2 = inlined_call_operand.hbm [shape: bf16[1,8,16,32], index: 2, kind: input, shape index: {}]
  %s3 = inlined_call_operand.hbm [shape: bf16[1,8,16,32], index: 3, kind: output, shape index: {}]
  %s4 = sld [smem:[#allocation0]]
  $region57: #{encoder_forward.6} parent=0
    _
  %s6 = ssub.s32 1, %s4
  %s7 = scalar_select 0, %s6, %s4
  $region1: #{encoder_forward.6} parent=0
    #allocation6 [shape = 'u8[32768]{0}', space=vmem, size = 0x8000, scoped, tag = 'input window, operand 0']
    #allocation7 [shape = 's32[2]{0}', space=sflag, size = 0x8, scoped, tag = 'scoped memory for encoder_forward.6']
    #allocation8 [shape = 's32[2]{0}', space=sflag, size = 0x8, scoped, tag = 'scoped memory for encoder_forward.6']
    #allocation9 [shape = 'u8[32768]{0}', space=vmem, size = 0x8000, scoped, tag = 'input window, operand 2']
    #allocation10 [shape = 's32[2]{0}', space=sflag, size = 0x8, scoped, tag = 'scoped memory for encoder_forward.6']
    #allocation11 [shape = 'u8[32768]{0}', space=vmem, size = 0x8000, scoped, tag = 'output window, operand 0']
    %8 = vsyncpa [#allocation7], 0
    %s9 = scalar_lea.sflag [#allocation7], 1
    %10 = vsyncpa %s9, 0
    %11 = vsyncpa [#allocation10], 0
    %s12 = scalar_lea.sflag [#allocation10], 1
    %13 = vsyncpa %s12, 0
    %14 = vsyncpa [#allocation8], 0
    %s15 = scalar_lea.sflag [#allocation8], 1
    %16 = vsyncpa %s15, 0
    loop: start=0, step=1, limit=4
    $region2: #{encoder_forward.6} parent=1 // loop_pre_header
      _
    $region3: #{encoder_forward.6} parent=1 // loop_header
      %s18 = sphi 0, %s22
      %p19 = scmp.ge.s32.totalorder %s18, 4
      %s28 = sphi 0, %s30
      %s31 = sphi 0, %s28
      %s32 = sphi 0, %s31
      %s48 = sphi 0, %s32
      %s54 = sphi 0, %s56
      %s57 = sphi 0, %s54
      %s58 = sphi 0, %s57
      %s74 = sphi 0, %s58
      %s80 = sphi 0, %s82
      %s83 = sphi 0, %s80
      %s84 = sphi 0, %s83
      %s100 = sphi 0, %s84
    $region4: #{encoder_forward.6} parent=1 // loop_header_branch
      %21 = sbr.rel (%p19) target = $region8
    $region5: #{encoder_forward.6} parent=1 // loop_body
      %s23 = ssub.s32 %s18, 1
      %s24 = ssub.s32 %s18, 2
      %s25 = sadd.s32 %s18, 1
      %s26 = ssub.s32 %s18, %s25
      %p27 = scmp.eq.s32.totalorder %s26, 0
      %s29 = sadd.s32 %s28, 1
      %s30 = scalar_select %p27, %s28, %s29
      %p33 = pneg %p27
      %p34 = scmp.eq.s32.totalorder %s18, 1
      %p35 = por %p33, %p34
      %p36 = scmp.ne.s32.totalorder %s28, %s31
      %p37 = scmp.eq.s32.totalorder %s18, 0
      %p38 = por %p36, %p37
      %p39 = scmp.ne.s32.totalorder %s28, %s31
      %p40 = scmp.eq.s32.totalorder %s23, 1
      %p41 = por %p39, %p40
      %p42 = scmp.ne.s32.totalorder %s31, %s32
      %p43 = scmp.eq.s32.totalorder %s23, 0
      %p44 = por %p42, %p43
      %p45 = scmp.ne.s32.totalorder %s31, %s32
      %p46 = scmp.eq.s32.totalorder %s24, 1
      %p47 = por %p45, %p46
      %p49 = scmp.ne.s32.totalorder %s32, %s48
      %p50 = scmp.eq.s32.totalorder %s24, 0
      %p51 = por %p49, %p50
      %s52 = ssub.s32 %s18, %s25
      %p53 = scmp.eq.s32.totalorder %s52, 0
      %s55 = sadd.s32 %s54, 1
      %s56 = scalar_select %p53, %s54, %s55
      %p59 = pneg %p53
      %p60 = scmp.eq.s32.totalorder %s18, 1
      %p61 = por %p59, %p60
      %p62 = scmp.ne.s32.totalorder %s54, %s57
      %p63 = scmp.eq.s32.totalorder %s18, 0
      %p64 = por %p62, %p63
      %p65 = scmp.ne.s32.totalorder %s54, %s57
      %p66 = scmp.eq.s32.totalorder %s23, 1
      %p67 = por %p65, %p66
      %p68 = scmp.ne.s32.totalorder %s57, %s58
      %p69 = scmp.eq.s32.totalorder %s23, 0
      %p70 = por %p68, %p69
      %p71 = scmp.ne.s32.totalorder %s57, %s58
      %p72 = scmp.eq.s32.totalorder %s24, 1
      %p73 = por %p71, %p72
      %p75 = scmp.ne.s32.totalorder %s58, %s74
      %p76 = scmp.eq.s32.totalorder %s24, 0
      %p77 = por %p75, %p76
      %s78 = ssub.s32 %s18, %s25
      %p79 = scmp.eq.s32.totalorder %s78, 0
      %s81 = sadd.s32 %s80, 1
      %s82 = scalar_select %p79, %s80, %s81
      %p85 = pneg %p79
      %p86 = scmp.eq.s32.totalorder %s18, 1
      %p87 = por %p85, %p86
      %p88 = scmp.ne.s32.totalorder %s80, %s83
      %p89 = scmp.eq.s32.totalorder %s18, 0
      %p90 = por %p88, %p89
      %p91 = scmp.ne.s32.totalorder %s80, %s83
      %p92 = scmp.eq.s32.totalorder %s23, 1
      %p93 = por %p91, %p92
      %p94 = scmp.ne.s32.totalorder %s83, %s84
      %p95 = scmp.eq.s32.totalorder %s23, 0
      %p96 = por %p94, %p95
      %p97 = scmp.ne.s32.totalorder %s83, %s84
      %p98 = scmp.eq.s32.totalorder %s24, 1
      %p99 = por %p97, %p98
      %p101 = scmp.ne.s32.totalorder %s84, %s100
      %p102 = scmp.eq.s32.totalorder %s24, 0
      %p103 = por %p101, %p102
      %p104 = scmp.le.s32.totalorder 1, %s18
      %p105 = scmp.lt.s32.totalorder %s18, 3
      %p106 = pnand %p104, %p105
      %p107 = pneg %p106
      // Predicated region
      $region9: #{encoder_forward.6} parent=5 // pred_check
        _
      $region10: #{encoder_forward.6} parent=5 // pred_check_branch
        %109 = sbr.rel (%p106) target = $region12
      $region11: #{encoder_forward.6} parent=5 // pred_region
        %s110 = ssub.s32 %s18, 1
      $region12: #{encoder_forward.6} parent=5 // pred_fallthru
        _
      %p111 = scmp.lt.s32.totalorder %s18, 2
      // Predicated region
      $region13: #{encoder_forward.6} parent=5 // pred_check
        %p112 = pneg %p111
      $region14: #{encoder_forward.6} parent=5 // pred_check_branch
        %114 = sbr.rel (%p112) target = $region16
      $region15: #{encoder_forward.6} parent=5 // pred_region
        // Predicated region
        $region17: #{encoder_forward.6} parent=15 // pred_check
          %p115 = pneg %p38
        $region18: #{encoder_forward.6} parent=15 // pred_check_branch
          %117 = sbr.rel (%p115) target = $region20
        $region19: #{encoder_forward.6} parent=15 // pred_region
          %s118 = sand.u32 %s28, 1
          %s119 = scalar_lea.sflag [#allocation7], %s118
          %s120 = sand.u32 %s28, 1
          %s121 = smul.addr %s120, 32
          %s122 = scalar_lea.vmem [#allocation6], %s121
          %s123 = smul.u32 4, %s18
          %s125 = ssub.s32 512, 512
          %126 = vsyncadd %s119, %s125
          %s127 = smul.addr %s123, 2
          %s128 = smul.addr %s127, 64
          %s129 = scalar_lea.hbm %s0, %s128
          %s130 = sshll.u32 %s122, 4
          %s131 = int_to_ptr.vmem [resolvable:$true] %s130
          %136 = dma.hbm_to_vmem [thread:$0]  %s129, 512, %s131, %s119, 64, 64, 4
        $region20: #{encoder_forward.6} parent=15 // pred_fallthru
          _
        // Predicated region
        $region21: #{encoder_forward.6} parent=15 // pred_check
          %p137 = pneg %p64
        $region22: #{encoder_forward.6} parent=15 // pred_check_branch
          %139 = sbr.rel (%p137) target = $region24
        $region23: #{encoder_forward.6} parent=15 // pred_region
          %s140 = sand.u32 %s54, 1
          %s141 = scalar_lea.sflag [#allocation10], %s140
          %s142 = sand.u32 %s54, 1
          %s143 = smul.addr %s142, 32
          %s144 = scalar_lea.vmem [#allocation9], %s143
          %s145 = smul.u32 4, %s18
          %s147 = ssub.s32 512, 512
          %148 = vsyncadd %s141, %s147
          %s149 = smul.addr %s145, 2
          %s150 = smul.addr %s149, 64
          %s151 = scalar_lea.hbm %s2, %s150
          %s152 = sshll.u32 %s144, 4
          %s153 = int_to_ptr.vmem [resolvable:$true] %s152
          %158 = dma.hbm_to_vmem [thread:$0]  %s151, 512, %s153, %s141, 64, 64, 4
        $region24: #{encoder_forward.6} parent=15 // pred_fallthru
          _
      $region16: #{encoder_forward.6} parent=5 // pred_fallthru
        _
      %p159 = scmp.le.s32.totalorder 1, %s18
      %p160 = scmp.lt.s32.totalorder %s18, 3
      %p161 = pnand %p159, %p160
      %p162 = pneg %p161
      // Predicated region
      $region25: #{encoder_forward.6} parent=5 // pred_check
        _
      $region26: #{encoder_forward.6} parent=5 // pred_check_branch
        %164 = sbr.rel (%p161) target = $region28
      $region27: #{encoder_forward.6} parent=5 // pred_region
        %s165 = ssub.s32 %s18, 1
        %s166 = sand.u32 %s31, 1
        %s167 = scalar_lea.sflag [#allocation7], %s166
        %s168 = sand.u32 %s31, 1
        %s169 = smul.addr %s168, 32
        %s170 = scalar_lea.vmem [#allocation6], %s169
        // Predicated region
        $region29: #{encoder_forward.6} parent=27 // pred_check
          %p171 = pneg %p44
        $region30: #{encoder_forward.6} parent=27 // pred_check_branch
          %173 = sbr.rel (%p171) target = $region32
        $region31: #{encoder_forward.6} parent=27 // pred_region
          %174 = dma.done %s167, 512
        $region32: #{encoder_forward.6} parent=27 // pred_fallthru
          _
        %s175 = sand.u32 %s57, 1
        %s176 = scalar_lea.sflag [#allocation10], %s175
        %s177 = sand.u32 %s57, 1
        %s178 = smul.addr %s177, 32
        %s179 = scalar_lea.vmem [#allocation9], %s178
        // Predicated region
        $region33: #{encoder_forward.6} parent=27 // pred_check
          %p180 = pneg %p70
        $region34: #{encoder_forward.6} parent=27 // pred_check_branch
          %182 = sbr.rel (%p180) target = $region36
        $region35: #{encoder_forward.6} parent=27 // pred_region
          %183 = dma.done %s176, 512
        $region36: #{encoder_forward.6} parent=27 // pred_fallthru
          _
        %s184 = sand.u32 %s31, 1
        %s185 = scalar_lea.sflag [#allocation7], %s184
        %s186 = sand.u32 %s31, 1
        %s187 = smul.addr %s186, 32
        %s188 = scalar_lea.vmem [#allocation6], %s187
        %p189 = pneg %p44
        %p190 = pneg %p41
        %s191 = sand.u32 %s57, 1
        %s192 = scalar_lea.sflag [#allocation10], %s191
        %s193 = sand.u32 %s57, 1
        %s194 = smul.addr %s193, 32
        %s195 = scalar_lea.vmem [#allocation9], %s194
        %p196 = pneg %p70
        %p197 = pneg %p67
        %p198 = pneg %p96
        %p199 = pneg %p93
        %s200 = sand.u32 %s83, 1
        %s201 = scalar_lea.sflag [#allocation8], %s200
        %s202 = sand.u32 %s83, 1
        %s203 = smul.addr %s202, 32
        %s204 = scalar_lea.vmem [#allocation11], %s203
        %s205 = smul.u32 4, %s23
        %s206 = smul.u32 4, %s23
        %s207 = smul.u32 4, %s23
        %p209 = scmp.eq.s32.totalorder %s23, 0
        // Predicated region
        $region37: #{encoder_forward.6} parent=27 // pred_check
          %p210 = pneg %p209
        $region38: #{encoder_forward.6} parent=27 // pred_check_branch
          %212 = sbr.rel (%p210) target = $region40
        $region39: #{encoder_forward.6} parent=27 // pred_region
          // Predicated region
          $region41: #{encoder_forward.6} parent=39 // pred_check
            _
          $region42: #{encoder_forward.6} parent=39 // pred_check_branch
            %214 = sbr.rel target = $region44
          $region43: #{encoder_forward.6} parent=39 // pred_region
            %215 = sst [smem:[#allocation14]] [#allocation13]
            %216 = sst [smem:[#allocation15]] [#allocation12]
          $region44: #{encoder_forward.6} parent=39 // pred_fallthru
            _
          %218 = shalt.err (0)
          %s220 = sshll.u32 [#allocation2], 4
          %s221 = int_to_ptr.vmem [resolvable:$true] %s220
          %223 = dma.hbm_to_vmem [thread:$0]  %s1, 256, %s221, [#allocation3]
          %s224 = smul.u32 4, 1
          %s225 = smul.u32 %s224, 4
          %s226 = smul.u32 %s225, 1
          %s227 = sshll.u32 %s226, 4
          %228 = dma.done [#allocation3], %s227
          %vm229 = vcmask 261120
          %230 = vst.msk [vmem:[#allocation4] sm:$0xff] %vm229, 0.0
          %231 = vst.msk [vmem:[#allocation4 + $0x8] sm:$0xff] %vm229, 0.0
          %232 = vst.msk [vmem:[#allocation5] sm:$0xff] %vm229, 0.0
          %233 = vst.msk [vmem:[#allocation5 + $0x8] sm:$0xff] %vm229, 0.0
        $region40: #{encoder_forward.6} parent=27 // pred_fallthru
          _
        %v234 = vld [vmem:[#allocation2] sm:$0xff]
        %v235 = vld [vmem:[#allocation2 + $0x8] sm:$0xff]
        %v236 = vld [vmem:[#allocation4] sm:$0xff]
        %v237 = vld [vmem:[#allocation5] sm:$0xff]
        %s238 = scalar_lea.vmem [#allocation4], 8
        %v239 = vld [vmem:[%s238] sm:$0xff]
        %s240 = scalar_lea.vmem [#allocation5], 8
        %v241 = vld [vmem:[%s240] sm:$0xff]
        %v242 = vld [vmem:[%s170] sm:$0xf]
        %v243 = vunpack.c.l.bf16 %v242
        %v244 = vpack.c.bf16 %v236, %v236
        %vm245 = vcmask 261120
        %v247 = vsel %vm245, %v244, 0
        %249 = vmatprep.subr.bf16.mxu0 0
        %250 = vmatpush1.bf16.msra.mxu0 %v234
        %251 = vmatprep.subr.bf16.mxu0 0
        %252 = vmatpush1.bf16.msra.mxu0 %v235
        %253 = vmatprep.subr.bf16.mxu0 0
        %254 = vmatpush1.bf16.msra.mxu0 0
        %255 = vmatprep.subr.bf16.mxu0 0
        %256 = vmatpush1.bf16.msra.mxu0 0
        %257 = vmatprep.subr.bf16.mxu0 0
        %258 = vmatpush1.bf16.msra.mxu0 0
        %259 = vmatprep.subr.bf16.mxu0 0
        %260 = vmatpush1.bf16.msra.mxu0 0
        %261 = vmatprep.subr.bf16.mxu0 0
        %262 = vmatpush1.bf16.msra.mxu0 0
        %263 = vmatprep.subr.bf16.mxu0 0
        %264 = vmatpush1.bf16.msra.mxu0 0
        %265 = vmatprep.subr.bf16.mxu0 0
        %266 = vmatpush1.bf16.msra.mxu0 0
        %267 = vmatprep.subr.bf16.mxu0 0
        %268 = vmatpush1.bf16.msra.mxu0 0
        %269 = vmatprep.subr.bf16.mxu0 0
        %270 = vmatpush1.bf16.msra.mxu0 0
        %271 = vmatprep.subr.bf16.mxu0 0
        %272 = vmatpush1.bf16.msra.mxu0 0
        %273 = vmatprep.subr.bf16.mxu0 0
        %274 = vmatpush1.bf16.msra.mxu0 0
        %275 = vmatprep.subr.bf16.mxu0 0
        %276 = vmatpush1.bf16.msra.mxu0 0
        %277 = vmatprep.subr.bf16.mxu0 0
        %278 = vmatpush1.bf16.msra.mxu0 0
        %279 = vmatprep.subr.bf16.mxu0 0
        %280 = vmatpush1.bf16.msra.mxu0 0
        %281 = vmatprep.mubr.bf16.mxu0 0
        %282 = vmatmul.mubr.bf16.gmra.mrb[0].mxu0 %v247
        %v283 = vpop.f32.mrb[0].mxu0
        %v284 = vadd.f32 0.0, %v283
        %v285 = vpop.f32.mrb[0].mxu0
        %v286 = vpop.f32.mrb[0].mxu0
        %v287 = vpop.f32.mrb[0].mxu0
        %288 = vdwg.mxu0
        %v289 = vadd.f32 %v243, %v284
        %v290 = vxor.u32 %v289, 2147483648
        %v291 = vmul.f32 %v290, 1.442695
        %v292 = vpow.pop %v291
        %v293 = vadd.f32 %v292, 1.0
        %v294 = vrcp.pop %v293
        %v295 = vmul.f32 1.0, %v294
        %v296 = vtanh.pop %v289
        %298 = vrot.lane.b32.xlu0 %v237, 32
        %v299 = vpop.permute.xlu0 %298
        %v301 = vmul.f32 %v295, %v299
        %303 = vrot.lane.b32.xlu0 %v296, 64
        %v304 = vpop.permute.xlu0 %303
        %v306 = vmul.f32 %v295, %v304
        %308 = vrot.lane.b32.xlu0 %v306, 32
        %v309 = vpop.permute.xlu0 %308
        %v311 = vadd.f32 %v301, %v309
        %v312 = vtanh.pop %v311
        %314 = vrot.lane.b32.xlu0 %v312, 64
        %v315 = vpop.permute.xlu0 %314
        %v317 = vmul.f32 %v295, %v315
        %v318 = vld [vmem:[%s179] sm:$0xf]
        %v319 = vunpack.c.l.bf16 %v318
        %321 = vrot.lane.b32.xlu0 %v319, 96
        %v322 = vpop.permute.xlu0 %321
        %v324 = vadd.f32 %v317, %v322
        %v325 = vpack.c.bf16 %v324, %v324
        %v327 = vunpack.c.l.b16 %v325
        %v328 = vpack.c.b16 %v327, %v327
        %329 = vrot.lane.b32.xlu0 %v328, 32
        %v330 = vpop.permute.xlu0 %329
        %vm332 = vcmask 257024
        %333 = vst.msk [vmem:[%s204] sm:$0xf] %vm332, %v330
        %v334 = vld [vmem:[%s170 + $0x4] sm:$0xf]
        %v335 = vunpack.c.l.bf16 %v334
        %v336 = vpack.c.bf16 %v239, %v239
        %v338 = vsel %vm245, %v336, 0
        %340 = vmatprep.subr.bf16.mxu0 0
        %341 = vmatpush1.bf16.msra.mxu0 %v234
        %342 = vmatprep.subr.bf16.mxu0 0
        %343 = vmatpush1.bf16.msra.mxu0 %v235
        %344 = vmatprep.subr.bf16.mxu0 0
        %345 = vmatpush1.bf16.msra.mxu0 0
        %346 = vmatprep.subr.bf16.mxu0 0
        %347 = vmatpush1.bf16.msra.mxu0 0
        %348 = vmatprep.subr.bf16.mxu0 0
        %349 = vmatpush1.bf16.msra.mxu0 0
        %350 = vmatprep.subr.bf16.mxu0 0
        %351 = vmatpush1.bf16.msra.mxu0 0
        %352 = vmatprep.subr.bf16.mxu0 0
        %353 = vmatpush1.bf16.msra.mxu0 0
        %354 = vmatprep.subr.bf16.mxu0 0
        %355 = vmatpush1.bf16.msra.mxu0 0
        %356 = vmatprep.subr.bf16.mxu0 0
        %357 = vmatpush1.bf16.msra.mxu0 0
        %358 = vmatprep.subr.bf16.mxu0 0
        %359 = vmatpush1.bf16.msra.mxu0 0
        %360 = vmatprep.subr.bf16.mxu0 0
        %361 = vmatpush1.bf16.msra.mxu0 0
        %362 = vmatprep.subr.bf16.mxu0 0
        %363 = vmatpush1.bf16.msra.mxu0 0
        %364 = vmatprep.subr.bf16.mxu0 0
        %365 = vmatpush1.bf16.msra.mxu0 0
        %366 = vmatprep.subr.bf16.mxu0 0
        %367 = vmatpush1.bf16.msra.mxu0 0
        %368 = vmatprep.subr.bf16.mxu0 0
        %369 = vmatpush1.bf16.msra.mxu0 0
        %370 = vmatprep.subr.bf16.mxu0 0
        %371 = vmatpush1.bf16.msra.mxu0 0
        %372 = vmatprep.mubr.bf16.mxu0 0
        %373 = vmatmul.mubr.bf16.gmra.mrb[0].mxu0 %v338
        %v374 = vpop.f32.mrb[0].mxu0
        %v375 = vadd.f32 0.0, %v374
        %v376 = vpop.f32.mrb[0].mxu0
        %v377 = vpop.f32.mrb[0].mxu0
        %v378 = vpop.f32.mrb[0].mxu0
        %379 = vdwg.mxu0
        %v380 = vadd.f32 %v335, %v375
        %v381 = vxor.u32 %v380, 2147483648
        %v382 = vmul.f32 %v381, 1.442695
        %v383 = vpow.pop %v382
        %v384 = vadd.f32 %v383, 1.0
        %v385 = vrcp.pop %v384
        %v386 = vmul.f32 1.0, %v385
        %v387 = vtanh.pop %v380
        %389 = vrot.lane.b32.xlu0 %v241, 32
        %v390 = vpop.permute.xlu0 %389
        %v392 = vmul.f32 %v386, %v390
        %394 = vrot.lane.b32.xlu0 %v387, 64
        %v395 = vpop.permute.xlu0 %394
        %v397 = vmul.f32 %v386, %v395
        %399 = vrot.lane.b32.xlu0 %v397, 32
        %v400 = vpop.permute.xlu0 %399
        %v402 = vadd.f32 %v392, %v400
        %v403 = vtanh.pop %v402
        %405 = vrot.lane.b32.xlu0 %v403, 64
        %v406 = vpop.permute.xlu0 %405
        %v408 = vmul.f32 %v386, %v406
        %v409 = vld [vmem:[%s179 + $0x4] sm:$0xf]
        %v410 = vunpack.c.l.bf16 %v409
        %412 = vrot.lane.b32.xlu0 %v410, 96
        %v413 = vpop.permute.xlu0 %412
        %v415 = vadd.f32 %v408, %v413
        %v416 = vpack.c.bf16 %v415, %v415
        %v418 = vunpack.c.l.b16 %v416
        %v419 = vpack.c.b16 %v418, %v418
        %420 = vrot.lane.b32.xlu0 %v419, 32
        %v421 = vpop.permute.xlu0 %420
        %423 = vst.msk [vmem:[%s204 + $0x4] sm:$0xf] %vm332, %v421
        %s424 = scalar_lea.vmem %s170, 8 [#allocation6]
        %v425 = vld [vmem:[%s424] sm:$0xf]
        %v426 = vunpack.c.l.bf16 %v425
        %v427 = vpack.c.bf16 %v317, %v317
        %429 = vrot.lane.b32.xlu0 %v427, 32
        %v430 = vpop.permute.xlu0 %429
        %v432 = vsel %vm245, %v430, 0
        %434 = vmatprep.subr.bf16.mxu0 0
        %435 = vmatpush1.bf16.msra.mxu0 %v234
        %436 = vmatprep.subr.bf16.mxu0 0
        %437 = vmatpush1.bf16.msra.mxu0 %v235
        %438 = vmatprep.subr.bf16.mxu0 0
        %439 = vmatpush1.bf16.msra.mxu0 0
        %440 = vmatprep.subr.bf16.mxu0 0
        %441 = vmatpush1.bf16.msra.mxu0 0
        %442 = vmatprep.subr.bf16.mxu0 0
        %443 = vmatpush1.bf16.msra.mxu0 0
        %444 = vmatprep.subr.bf16.mxu0 0
        %445 = vmatpush1.bf16.msra.mxu0 0
        %446 = vmatprep.subr.bf16.mxu0 0
        %447 = vmatpush1.bf16.msra.mxu0 0
        %448 = vmatprep.subr.bf16.mxu0 0
        %449 = vmatpush1.bf16.msra.mxu0 0
        %450 = vmatprep.subr.bf16.mxu0 0
        %451 = vmatpush1.bf16.msra.mxu0 0
        %452 = vmatprep.subr.bf16.mxu0 0
        %453 = vmatpush1.bf16.msra.mxu0 0
        %454 = vmatprep.subr.bf16.mxu0 0
        %455 = vmatpush1.bf16.msra.mxu0 0
        %456 = vmatprep.subr.bf16.mxu0 0
        %457 = vmatpush1.bf16.msra.mxu0 0
        %458 = vmatprep.subr.bf16.mxu0 0
        %459 = vmatpush1.bf16.msra.mxu0 0
        %460 = vmatprep.subr.bf16.mxu0 0
        %461 = vmatpush1.bf16.msra.mxu0 0
        %462 = vmatprep.subr.bf16.mxu0 0
        %463 = vmatpush1.bf16.msra.mxu0 0
        %464 = vmatprep.subr.bf16.mxu0 0
        %465 = vmatpush1.bf16.msra.mxu0 0
        %466 = vmatprep.mubr.bf16.mxu0 0
        %467 = vmatmul.mubr.bf16.gmra.mrb[0].mxu0 %v432
        %v468 = vpop.f32.mrb[0].mxu0
        %v469 = vadd.f32 0.0, %v468
        %v470 = vpop.f32.mrb[0].mxu0
        %v471 = vpop.f32.mrb[0].mxu0
        %v472 = vpop.f32.mrb[0].mxu0
        %473 = vdwg.mxu0
        %v474 = vadd.f32 %v426, %v469
        %v475 = vxor.u32 %v474, 2147483648
        %v476 = vmul.f32 %v475, 1.442695
        %v477 = vpow.pop %v476
        %v478 = vadd.f32 %v477, 1.0
        %v479 = vrcp.pop %v478
        %v480 = vmul.f32 1.0, %v479
        %v481 = vtanh.pop %v474
        %v482 = vmul.f32 %v480, %v311
        %484 = vrot.lane.b32.xlu0 %v481, 64
        %v485 = vpop.permute.xlu0 %484
        %v487 = vmul.f32 %v480, %v485
        %489 = vrot.lane.b32.xlu0 %v487, 32
        %v490 = vpop.permute.xlu0 %489
        %v492 = vadd.f32 %v482, %v490
        %v493 = vtanh.pop %v492
        %495 = vrot.lane.b32.xlu0 %v493, 64
        %v496 = vpop.permute.xlu0 %495
        %v498 = vmul.f32 %v480, %v496
        %s499 = scalar_lea.vmem %s179, 8 [#allocation9]
        %v500 = vld [vmem:[%s499] sm:$0xf]
        %v501 = vunpack.c.l.bf16 %v500
        %503 = vrot.lane.b32.xlu0 %v501, 96
        %v504 = vpop.permute.xlu0 %503
        %v506 = vadd.f32 %v498, %v504
        %v507 = vpack.c.bf16 %v506, %v506
        %v509 = vunpack.c.l.b16 %v507
        %v510 = vpack.c.b16 %v509, %v509
        %511 = vrot.lane.b32.xlu0 %v510, 32
        %v512 = vpop.permute.xlu0 %511
        %s514 = scalar_lea.vmem %s204, 8 [#allocation11]
        %515 = vst.msk [vmem:[%s514] sm:$0xf] %vm332, %v512
        %v516 = vld [vmem:[%s424 + $0x4] sm:$0xf]
        %v517 = vunpack.c.l.bf16 %v516
        %v518 = vpack.c.bf16 %v408, %v408
        %520 = vrot.lane.b32.xlu0 %v518, 32
        %v521 = vpop.permute.xlu0 %520
        %v523 = vsel %vm245, %v521, 0
        %525 = vmatprep.subr.bf16.mxu0 0
        %526 = vmatpush1.bf16.msra.mxu0 %v234
        %527 = vmatprep.subr.bf16.mxu0 0
        %528 = vmatpush1.bf16.msra.mxu0 %v235
        %529 = vmatprep.subr.bf16.mxu0 0
        %530 = vmatpush1.bf16.msra.mxu0 0
        %531 = vmatprep.subr.bf16.mxu0 0
        %532 = vmatpush1.bf16.msra.mxu0 0
        %533 = vmatprep.subr.bf16.mxu0 0
        %534 = vmatpush1.bf16.msra.mxu0 0
        %535 = vmatprep.subr.bf16.mxu0 0
        %536 = vmatpush1.bf16.msra.mxu0 0
        %537 = vmatprep.subr.bf16.mxu0 0
        %538 = vmatpush1.bf16.msra.mxu0 0
        %539 = vmatprep.subr.bf16.mxu0 0
        %540 = vmatpush1.bf16.msra.mxu0 0
        %541 = vmatprep.subr.bf16.mxu0 0
        %542 = vmatpush1.bf16.msra.mxu0 0
        %543 = vmatprep.subr.bf16.mxu0 0
        %544 = vmatpush1.bf16.msra.mxu0 0
        %545 = vmatprep.subr.bf16.mxu0 0
        %546 = vmatpush1.bf16.msra.mxu0 0
        %547 = vmatprep.subr.bf16.mxu0 0
        %548 = vmatpush1.bf16.msra.mxu0 0
        %549 = vmatprep.subr.bf16.mxu0 0
        %550 = vmatpush1.bf16.msra.mxu0 0
        %551 = vmatprep.subr.bf16.mxu0 0
        %552 = vmatpush1.bf16.msra.mxu0 0
        %553 = vmatprep.subr.bf16.mxu0 0
        %554 = vmatpush1.bf16.msra.mxu0 0
        %555 = vmatprep.subr.bf16.mxu0 0
        %556 = vmatpush1.bf16.msra.mxu0 0
        %557 = vmatprep.mubr.bf16.mxu0 0
        %558 = vmatmul.mubr.bf16.gmra.mrb[0].mxu0 %v523
        %v559 = vpop.f32.mrb[0].mxu0
        %v560 = vadd.f32 0.0, %v559
        %v561 = vpop.f32.mrb[0].mxu0
        %v562 = vpop.f32.mrb[0].mxu0
        %v563 = vpop.f32.mrb[0].mxu0
        %564 = vdwg.mxu0
        %v565 = vadd.f32 %v517, %v560
        %v566 = vxor.u32 %v565, 2147483648
        %v567 = vmul.f32 %v566, 1.442695
        %v568 = vpow.pop %v567
        %v569 = vadd.f32 %v568, 1.0
        %v570 = vrcp.pop %v569
        %v571 = vmul.f32 1.0, %v570
        %v572 = vtanh.pop %v565
        %v573 = vmul.f32 %v571, %v402
        %575 = vrot.lane.b32.xlu0 %v572, 64
        %v576 = vpop.permute.xlu0 %575
        %v578 = vmul.f32 %v571, %v576
        %580 = vrot.lane.b32.xlu0 %v578, 32
        %v581 = vpop.permute.xlu0 %580
        %v583 = vadd.f32 %v573, %v581
        %v584 = vtanh.pop %v583
        %586 = vrot.lane.b32.xlu0 %v584, 64
        %v587 = vpop.permute.xlu0 %586
        %v589 = vmul.f32 %v571, %v587
        %v590 = vld [vmem:[%s499 + $0x4] sm:$0xf]
        %v591 = vunpack.c.l.bf16 %v590
        %593 = vrot.lane.b32.xlu0 %v591, 96
        %v594 = vpop.permute.xlu0 %593
        %v596 = vadd.f32 %v589, %v594
        %v597 = vpack.c.bf16 %v596, %v596
        %v599 = vunpack.c.l.b16 %v597
        %v600 = vpack.c.b16 %v599, %v599
        %601 = vrot.lane.b32.xlu0 %v600, 32
        %v602 = vpop.permute.xlu0 %601
        %604 = vst.msk [vmem:[%s514 + $0x4] sm:$0xf] %vm332, %v602
        %s605 = scalar_lea.vmem %s170, 16 [#allocation6]
        %v606 = vld [vmem:[%s605] sm:$0xf]
        %v607 = vunpack.c.l.bf16 %v606
        %v608 = vpack.c.bf16 %v498, %v498
        %610 = vrot.lane.b32.xlu0 %v608, 32
        %v611 = vpop.permute.xlu0 %610
        %v613 = vsel %vm245, %v611, 0
        %615 = vmatprep.subr.bf16.mxu0 0
        %616 = vmatpush1.bf16.msra.mxu0 %v234
        %617 = vmatprep.subr.bf16.mxu0 0
        %618 = vmatpush1.bf16.msra.mxu0 %v235
        %619 = vmatprep.subr.bf16.mxu0 0
        %620 = vmatpush1.bf16.msra.mxu0 0
        %621 = vmatprep.subr.bf16.mxu0 0
        %622 = vmatpush1.bf16.msra.mxu0 0
        %623 = vmatprep.subr.bf16.mxu0 0
        %624 = vmatpush1.bf16.msra.mxu0 0
        %625 = vmatprep.subr.bf16.mxu0 0
        %626 = vmatpush1.bf16.msra.mxu0 0
        %627 = vmatprep.subr.bf16.mxu0 0
        %628 = vmatpush1.bf16.msra.mxu0 0
        %629 = vmatprep.subr.bf16.mxu0 0
        %630 = vmatpush1.bf16.msra.mxu0 0
        %631 = vmatprep.subr.bf16.mxu0 0
        %632 = vmatpush1.bf16.msra.mxu0 0
        %633 = vmatprep.subr.bf16.mxu0 0
        %634 = vmatpush1.bf16.msra.mxu0 0
        %635 = vmatprep.subr.bf16.mxu0 0
        %636 = vmatpush1.bf16.msra.mxu0 0
        %637 = vmatprep.subr.bf16.mxu0 0
        %638 = vmatpush1.bf16.msra.mxu0 0
        %639 = vmatprep.subr.bf16.mxu0 0
        %640 = vmatpush1.bf16.msra.mxu0 0
        %641 = vmatprep.subr.bf16.mxu0 0
        %642 = vmatpush1.bf16.msra.mxu0 0
        %643 = vmatprep.subr.bf16.mxu0 0
        %644 = vmatpush1.bf16.msra.mxu0 0
        %645 = vmatprep.subr.bf16.mxu0 0
        %646 = vmatpush1.bf16.msra.mxu0 0
        %647 = vmatprep.mubr.bf16.mxu0 0
        %648 = vmatmul.mubr.bf16.gmra.mrb[0].mxu0 %v613
        %v649 = vpop.f32.mrb[0].mxu0
        %v650 = vadd.f32 0.0, %v649
        %v651 = vpop.f32.mrb[0].mxu0
        %v652 = vpop.f32.mrb[0].mxu0
        %v653 = vpop.f32.mrb[0].mxu0
        %654 = vdwg.mxu0
        %v655 = vadd.f32 %v607, %v650
        %v656 = vxor.u32 %v655, 2147483648
        %v657 = vmul.f32 %v656, 1.442695
        %v658 = vpow.pop %v657
        %v659 = vadd.f32 %v658, 1.0
        %v660 = vrcp.pop %v659
        %v661 = vmul.f32 1.0, %v660
        %v662 = vtanh.pop %v655
        %v663 = vmul.f32 %v661, %v492
        %665 = vrot.lane.b32.xlu0 %v662, 64
        %v666 = vpop.permute.xlu0 %665
        %v668 = vmul.f32 %v661, %v666
        %670 = vrot.lane.b32.xlu0 %v668, 32
        %v671 = vpop.permute.xlu0 %670
        %v673 = vadd.f32 %v663, %v671
        %v674 = vtanh.pop %v673
        %676 = vrot.lane.b32.xlu0 %v674, 64
        %v677 = vpop.permute.xlu0 %676
        %v679 = vmul.f32 %v661, %v677
        %s680 = scalar_lea.vmem %s179, 16 [#allocation9]
        %v681 = vld [vmem:[%s680] sm:$0xf]
        %v682 = vunpack.c.l.bf16 %v681
        %684 = vrot.lane.b32.xlu0 %v682, 96
        %v685 = vpop.permute.xlu0 %684
        %v687 = vadd.f32 %v679, %v685
        %v688 = vpack.c.bf16 %v687, %v687
        %v690 = vunpack.c.l.b16 %v688
        %v691 = vpack.c.b16 %v690, %v690
        %692 = vrot.lane.b32.xlu0 %v691, 32
        %v693 = vpop.permute.xlu0 %692
        %s695 = scalar_lea.vmem %s204, 16 [#allocation11]
        %696 = vst.msk [vmem:[%s695] sm:$0xf] %vm332, %v693
        %v697 = vld [vmem:[%s605 + $0x4] sm:$0xf]
        %v698 = vunpack.c.l.bf16 %v697
        %v699 = vpack.c.bf16 %v589, %v589
        %701 = vrot.lane.b32.xlu0 %v699, 32
        %v702 = vpop.permute.xlu0 %701
        %v704 = vsel %vm245, %v702, 0
        %706 = vmatprep.subr.bf16.mxu0 0
        %707 = vmatpush1.bf16.msra.mxu0 %v234
        %708 = vmatprep.subr.bf16.mxu0 0
        %709 = vmatpush1.bf16.msra.mxu0 %v235
        %710 = vmatprep.subr.bf16.mxu0 0
        %711 = vmatpush1.bf16.msra.mxu0 0
        %712 = vmatprep.subr.bf16.mxu0 0
        %713 = vmatpush1.bf16.msra.mxu0 0
        %714 = vmatprep.subr.bf16.mxu0 0
        %715 = vmatpush1.bf16.msra.mxu0 0
        %716 = vmatprep.subr.bf16.mxu0 0
        %717 = vmatpush1.bf16.msra.mxu0 0
        %718 = vmatprep.subr.bf16.mxu0 0
        %719 = vmatpush1.bf16.msra.mxu0 0
        %720 = vmatprep.subr.bf16.mxu0 0
        %721 = vmatpush1.bf16.msra.mxu0 0
        %722 = vmatprep.subr.bf16.mxu0 0
        %723 = vmatpush1.bf16.msra.mxu0 0
        %724 = vmatprep.subr.bf16.mxu0 0
        %725 = vmatpush1.bf16.msra.mxu0 0
        %726 = vmatprep.subr.bf16.mxu0 0
        %727 = vmatpush1.bf16.msra.mxu0 0
        %728 = vmatprep.subr.bf16.mxu0 0
        %729 = vmatpush1.bf16.msra.mxu0 0
        %730 = vmatprep.subr.bf16.mxu0 0
        %731 = vmatpush1.bf16.msra.mxu0 0
        %732 = vmatprep.subr.bf16.mxu0 0
        %733 = vmatpush1.bf16.msra.mxu0 0
        %734 = vmatprep.subr.bf16.mxu0 0
        %735 = vmatpush1.bf16.msra.mxu0 0
        %736 = vmatprep.subr.bf16.mxu0 0
        %737 = vmatpush1.bf16.msra.mxu0 0
        %738 = vmatprep.mubr.bf16.mxu0 0
        %739 = vmatmul.mubr.bf16.gmra.mrb[0].mxu0 %v704
        %v740 = vpop.f32.mrb[0].mxu0
        %v741 = vadd.f32 0.0, %v740
        %v742 = vpop.f32.mrb[0].mxu0
        %v743 = vpop.f32.mrb[0].mxu0
        %v744 = vpop.f32.mrb[0].mxu0
        %745 = vdwg.mxu0
        %v746 = vadd.f32 %v698, %v741
        %v747 = vxor.u32 %v746, 2147483648
        %v748 = vmul.f32 %v747, 1.442695
        %v749 = vpow.pop %v748
        %v750 = vadd.f32 %v749, 1.0
        %v751 = vrcp.pop %v750
        %v752 = vmul.f32 1.0, %v751
        %v753 = vtanh.pop %v746
        %v754 = vmul.f32 %v752, %v583
        %756 = vrot.lane.b32.xlu0 %v753, 64
        %v757 = vpop.permute.xlu0 %756
        %v759 = vmul.f32 %v752, %v757
        %761 = vrot.lane.b32.xlu0 %v759, 32
        %v762 = vpop.permute.xlu0 %761
        %v764 = vadd.f32 %v754, %v762
        %v765 = vtanh.pop %v764
        %767 = vrot.lane.b32.xlu0 %v765, 64
        %v768 = vpop.permute.xlu0 %767
        %v770 = vmul.f32 %v752, %v768
        %v771 = vld [vmem:[%s680 + $0x4] sm:$0xf]
        %v772 = vunpack.c.l.bf16 %v771
        %774 = vrot.lane.b32.xlu0 %v772, 96
        %v775 = vpop.permute.xlu0 %774
        %v777 = vadd.f32 %v770, %v775
        %v778 = vpack.c.bf16 %v777, %v777
        %v780 = vunpack.c.l.b16 %v778
        %v781 = vpack.c.b16 %v780, %v780
        %782 = vrot.lane.b32.xlu0 %v781, 32
        %v783 = vpop.permute.xlu0 %782
        %785 = vst.msk [vmem:[%s695 + $0x4] sm:$0xf] %vm332, %v783
        %s786 = scalar_lea.vmem %s170, 24 [#allocation6]
        %v787 = vld [vmem:[%s786] sm:$0xf]
        %v788 = vunpack.c.l.bf16 %v787
        %v789 = vpack.c.bf16 %v679, %v679
        %791 = vrot.lane.b32.xlu0 %v789, 32
        %v792 = vpop.permute.xlu0 %791
        %v794 = vsel %vm245, %v792, 0
        %796 = vmatprep.subr.bf16.mxu0 0
        %797 = vmatpush1.bf16.msra.mxu0 %v234
        %798 = vmatprep.subr.bf16.mxu0 0
        %799 = vmatpush1.bf16.msra.mxu0 %v235
        %800 = vmatprep.subr.bf16.mxu0 0
        %801 = vmatpush1.bf16.msra.mxu0 0
        %802 = vmatprep.subr.bf16.mxu0 0
        %803 = vmatpush1.bf16.msra.mxu0 0
        %804 = vmatprep.subr.bf16.mxu0 0
        %805 = vmatpush1.bf16.msra.mxu0 0
        %806 = vmatprep.subr.bf16.mxu0 0
        %807 = vmatpush1.bf16.msra.mxu0 0
        %808 = vmatprep.subr.bf16.mxu0 0
        %809 = vmatpush1.bf16.msra.mxu0 0
        %810 = vmatprep.subr.bf16.mxu0 0
        %811 = vmatpush1.bf16.msra.mxu0 0
        %812 = vmatprep.subr.bf16.mxu0 0
        %813 = vmatpush1.bf16.msra.mxu0 0
        %814 = vmatprep.subr.bf16.mxu0 0
        %815 = vmatpush1.bf16.msra.mxu0 0
        %816 = vmatprep.subr.bf16.mxu0 0
        %817 = vmatpush1.bf16.msra.mxu0 0
        %818 = vmatprep.subr.bf16.mxu0 0
        %819 = vmatpush1.bf16.msra.mxu0 0
        %820 = vmatprep.subr.bf16.mxu0 0
        %821 = vmatpush1.bf16.msra.mxu0 0
        %822 = vmatprep.subr.bf16.mxu0 0
        %823 = vmatpush1.bf16.msra.mxu0 0
        %824 = vmatprep.subr.bf16.mxu0 0
        %825 = vmatpush1.bf16.msra.mxu0 0
        %826 = vmatprep.subr.bf16.mxu0 0
        %827 = vmatpush1.bf16.msra.mxu0 0
        %828 = vmatprep.mubr.bf16.mxu0 0
        %829 = vmatmul.mubr.bf16.gmra.mrb[0].mxu0 %v794
        %v830 = vpop.f32.mrb[0].mxu0
        %v831 = vadd.f32 0.0, %v830
        %v832 = vpop.f32.mrb[0].mxu0
        %v833 = vpop.f32.mrb[0].mxu0
        %v834 = vpop.f32.mrb[0].mxu0
        %835 = vdwg.mxu0
        %v836 = vadd.f32 %v788, %v831
        %v837 = vxor.u32 %v836, 2147483648
        %v838 = vmul.f32 %v837, 1.442695
        %v839 = vpow.pop %v838
        %v840 = vadd.f32 %v839, 1.0
        %v841 = vrcp.pop %v840
        %v842 = vmul.f32 1.0, %v841
        %v843 = vtanh.pop %v836
        %v844 = vmul.f32 %v842, %v673
        %846 = vrot.lane.b32.xlu0 %v843, 64
        %v847 = vpop.permute.xlu0 %846
        %v849 = vmul.f32 %v842, %v847
        %851 = vrot.lane.b32.xlu0 %v849, 32
        %v852 = vpop.permute.xlu0 %851
        %v854 = vadd.f32 %v844, %v852
        %v855 = vtanh.pop %v854
        %857 = vrot.lane.b32.xlu0 %v855, 64
        %v858 = vpop.permute.xlu0 %857
        %v860 = vmul.f32 %v842, %v858
        %s861 = scalar_lea.vmem %s179, 24 [#allocation9]
        %v862 = vld [vmem:[%s861] sm:$0xf]
        %v863 = vunpack.c.l.bf16 %v862
        %865 = vrot.lane.b32.xlu0 %v863, 96
        %v866 = vpop.permute.xlu0 %865
        %v868 = vadd.f32 %v860, %v866
        %v869 = vpack.c.bf16 %v868, %v868
        %v871 = vunpack.c.l.b16 %v869
        %v872 = vpack.c.b16 %v871, %v871
        %873 = vrot.lane.b32.xlu0 %v872, 32
        %v874 = vpop.permute.xlu0 %873
        %s876 = scalar_lea.vmem %s204, 24 [#allocation11]
        %877 = vst.msk [vmem:[%s876] sm:$0xf] %vm332, %v874
        %v878 = vld [vmem:[%s786 + $0x4] sm:$0xf]
        %v879 = vunpack.c.l.bf16 %v878
        %v880 = vpack.c.bf16 %v770, %v770
        %882 = vrot.lane.b32.xlu0 %v880, 32
        %v883 = vpop.permute.xlu0 %882
        %v885 = vsel %vm245, %v883, 0
        %887 = vmatprep.subr.bf16.mxu0 0
        %888 = vmatpush1.bf16.msra.mxu0 %v234
        %889 = vmatprep.subr.bf16.mxu0 0
        %890 = vmatpush1.bf16.msra.mxu0 %v235
        %891 = vmatprep.subr.bf16.mxu0 0
        %892 = vmatpush1.bf16.msra.mxu0 0
        %893 = vmatprep.subr.bf16.mxu0 0
        %894 = vmatpush1.bf16.msra.mxu0 0
        %895 = vmatprep.subr.bf16.mxu0 0
        %896 = vmatpush1.bf16.msra.mxu0 0
        %897 = vmatprep.subr.bf16.mxu0 0
        %898 = vmatpush1.bf16.msra.mxu0 0
        %899 = vmatprep.subr.bf16.mxu0 0
        %900 = vmatpush1.bf16.msra.mxu0 0
        %901 = vmatprep.subr.bf16.mxu0 0
        %902 = vmatpush1.bf16.msra.mxu0 0
        %903 = vmatprep.subr.bf16.mxu0 0
        %904 = vmatpush1.bf16.msra.mxu0 0
        %905 = vmatprep.subr.bf16.mxu0 0
        %906 = vmatpush1.bf16.msra.mxu0 0
        %907 = vmatprep.subr.bf16.mxu0 0
        %908 = vmatpush1.bf16.msra.mxu0 0
        %909 = vmatprep.subr.bf16.mxu0 0
        %910 = vmatpush1.bf16.msra.mxu0 0
        %911 = vmatprep.subr.bf16.mxu0 0
        %912 = vmatpush1.bf16.msra.mxu0 0
        %913 = vmatprep.subr.bf16.mxu0 0
        %914 = vmatpush1.bf16.msra.mxu0 0
        %915 = vmatprep.subr.bf16.mxu0 0
        %916 = vmatpush1.bf16.msra.mxu0 0
        %917 = vmatprep.subr.bf16.mxu0 0
        %918 = vmatpush1.bf16.msra.mxu0 0
        %919 = vmatprep.mubr.bf16.mxu0 0
        %920 = vmatmul.mubr.bf16.gmra.mrb[0].mxu0 %v885
        %v921 = vpop.f32.mrb[0].mxu0
        %v922 = vadd.f32 0.0, %v921
        %v923 = vpop.f32.mrb[0].mxu0
        %v924 = vpop.f32.mrb[0].mxu0
        %v925 = vpop.f32.mrb[0].mxu0
        %926 = vdwg.mxu0
        %v927 = vadd.f32 %v879, %v922
        %v928 = vxor.u32 %v927, 2147483648
        %v929 = vmul.f32 %v928, 1.442695
        %v930 = vpow.pop %v929
        %v931 = vadd.f32 %v930, 1.0
        %v932 = vrcp.pop %v931
        %v933 = vmul.f32 1.0, %v932
        %v934 = vtanh.pop %v927
        %v935 = vmul.f32 %v933, %v764
        %937 = vrot.lane.b32.xlu0 %v934, 64
        %v938 = vpop.permute.xlu0 %937
        %v940 = vmul.f32 %v933, %v938
        %942 = vrot.lane.b32.xlu0 %v940, 32
        %v943 = vpop.permute.xlu0 %942
        %v945 = vadd.f32 %v935, %v943
        %v946 = vtanh.pop %v945
        %948 = vrot.lane.b32.xlu0 %v946, 64
        %v949 = vpop.permute.xlu0 %948
        %v951 = vmul.f32 %v933, %v949
        %v952 = vld [vmem:[%s861 + $0x4] sm:$0xf]
        %v953 = vunpack.c.l.bf16 %v952
        %955 = vrot.lane.b32.xlu0 %v953, 96
        %v956 = vpop.permute.xlu0 %955
        %v958 = vadd.f32 %v951, %v956
        %v959 = vpack.c.bf16 %v958, %v958
        %v961 = vunpack.c.l.b16 %v959
        %v962 = vpack.c.b16 %v961, %v961
        %963 = vrot.lane.b32.xlu0 %v962, 32
        %v964 = vpop.permute.xlu0 %963
        %966 = vst.msk [vmem:[%s876 + $0x4] sm:$0xf] %vm332, %v964
        %968 = vrot.lane.b32.xlu0 %v860, 32
        %v969 = vpop.permute.xlu0 %968
        %971 = vst.msk [vmem:[#allocation4] sm:$0xff] %vm245, %v969
        %973 = vrot.lane.b32.xlu0 %v854, 96
        %v974 = vpop.permute.xlu0 %973
        %976 = vst.msk [vmem:[#allocation5] sm:$0xff] %vm245, %v974
        %978 = vrot.lane.b32.xlu0 %v951, 32
        %v979 = vpop.permute.xlu0 %978
        %981 = vst.msk [vmem:[%s238] sm:$0xff] %vm245, %v979
        %983 = vrot.lane.b32.xlu0 %v945, 96
        %v984 = vpop.permute.xlu0 %983
        %986 = vst.msk [vmem:[%s240] sm:$0xff] %vm245, %v984
        %s987 = sand.u32 %s83, 1
        %s988 = scalar_lea.sflag [#allocation8], %s987
        %s989 = sand.u32 %s83, 1
        %s990 = smul.addr %s989, 32
        %s991 = scalar_lea.vmem [#allocation11], %s990
        // Predicated region
        $region45: #{encoder_forward.6} parent=27 // pred_check
          %p992 = pneg %p93
        $region46: #{encoder_forward.6} parent=27 // pred_check_branch
          %994 = sbr.rel (%p992) target = $region48
        $region47: #{encoder_forward.6} parent=27 // pred_region
          %s995 = smul.u32 4, %s23
          %s997 = ssub.s32 512, 512
          %998 = vsyncadd %s988, %s997
          %s999 = smul.addr %s995, 2
          %s1000 = smul.addr %s999, 64
          %s1001 = scalar_lea.hbm %s3, %s1000
          %s1002 = sshll.u32 %s991, 4
          %s1003 = int_to_ptr.vmem [resolvable:$true] %s1002
          %1008 = dma.vmem_to_hbm [thread:$0]  %s1003, 512, %s1001, %s988, 64, 64, 4
        $region48: #{encoder_forward.6} parent=27 // pred_fallthru
          _
      $region28: #{encoder_forward.6} parent=5 // pred_fallthru
        _
      %p1009 = scmp.le.s32.totalorder 2, %s18
      // Predicated region
      $region49: #{encoder_forward.6} parent=5 // pred_check
        %p1010 = pneg %p1009
      $region50: #{encoder_forward.6} parent=5 // pred_check_branch
        %1012 = sbr.rel (%p1010) target = $region52
      $region51: #{encoder_forward.6} parent=5 // pred_region
        %s1013 = ssub.s32 %s18, 2
        // Predicated region
        $region53: #{encoder_forward.6} parent=51 // pred_check
          %p1014 = pneg %p99
        $region54: #{encoder_forward.6} parent=51 // pred_check_branch
          %1016 = sbr.rel (%p1014) target = $region56
        $region55: #{encoder_forward.6} parent=51 // pred_region
          %s1017 = sand.u32 %s84, 1
          %s1018 = scalar_lea.sflag [#allocation8], %s1017
          %s1019 = sand.u32 %s84, 1
          %s1020 = smul.addr %s1019, 32
          %s1021 = scalar_lea.vmem [#allocation11], %s1020
          %1022 = dma.done %s1018, 512
        $region56: #{encoder_forward.6} parent=51 // pred_fallthru
          _
      $region52: #{encoder_forward.6} parent=5 // pred_fallthru
        _
    $region6: #{encoder_forward.6} parent=1 // loop_footer
      %s22 = sadd.s32 1, %s18
    $region7: #{encoder_forward.6} parent=1 // loop_footer_branch
      %17 = sbr.rel target = $region3
    $region8: #{encoder_forward.6} parent=1 // loop_exit
      _
    %1023 = vsyncpa [#allocation7], 1
    %s1024 = scalar_lea.sflag [#allocation7], 1
    %1025 = vsyncpa %s1024, 1
    %1026 = vsyncpa [#allocation10], 1
    %s1027 = scalar_lea.sflag [#allocation10], 1
    %1028 = vsyncpa %s1027, 1
    %1029 = vsyncpa [#allocation8], 1
    %s1030 = scalar_lea.sflag [#allocation8], 1
    %1031 = vsyncpa %s1030, 1
  %1032 = vsyncmov [#allocation3]
  %s1033 = vpop.sfrf %1032
  %p1034 = scmp.eq.s32.totalorder %s1033, 0
  %p1035 = pneg %p1034
  %1037 = shalt.err (%p1035)

</llo_original>
